<compile_context>
chip_gen: v5e
topology: v5e:2x2
jax: 0.10.0
libtpu: 0.0.40
codegen_flags: <defaults>
</compile_context>

<pallas_src>
import functools

import jax
import jax.numpy as jnp
from jax.experimental import pallas as pl
from jax.experimental.pallas import tpu as pltpu

INPUT_SIZE = 512
LATENT_DIM = 32
BN_EPS = 1e-5
MAX_TILE_B = 512          # big tiles amortize per-step overhead; few-MB footprint << 48 MiB VMEM
LANE_PAD = 128            # pad sub-128 feature dims to a full vreg lane width


def _pad_dim(d):
    return max(d, LANE_PAD)


# ----------------------------- kernel -----------------------------

def ecg_autoencoder_kernel(
    x_ref,
    # encoder params
    ew0, eb0, eg0, ebt0,
    ew1, eb1, eg1, ebt1,
    ew2, eb2, eg2, ebt2,
    ew3, eb3,
    # decoder params
    dw0, db0, dg0, dbt0,
    dw1, db1, dg1, dbt1,
    dw2, db2, dg2, dbt2,
    dw3, db3,
    # outputs
    recon_ref, latent_ref,
):
    def linear(h, w_ref, b_ref):
        # bf16 operands on the MXU, f32 accumulation, f32 bias add.
        return jnp.dot(h.astype(jnp.bfloat16), w_ref[...],
                       preferred_element_type=jnp.float32) + b_ref[...]

    def relu_bn(h, g_ref, bt_ref):
        # ReLU, then training-mode BatchNorm1d folded into one FMA per element.
        # Stats stay f32; the BN apply is fused with the bf16 cast feeding the
        # next MXU matmul (removes a separate full-tile cast pass).
        h = jnp.maximum(h, 0.0)
        mean = jnp.mean(h, axis=0, keepdims=True)
        var = jnp.maximum(jnp.mean(h * h, axis=0, keepdims=True) - mean * mean, 0.0)
        scale = g_ref[...] * jax.lax.rsqrt(var + BN_EPS)   # rsqrt -> EUP (free slot)
        shift = bt_ref[...] - mean * scale
        return (h * scale + shift).astype(jnp.bfloat16)

    h = x_ref[...]

    # ---- encoder: (Linear -> ReLU -> BN) x3, then Linear to (padded) latent ----
    h = relu_bn(linear(h, ew0, eb0), eg0, ebt0)        # 512 -> 256
    h = relu_bn(linear(h, ew1, eb1), eg1, ebt1)        # 256 -> 128
    h = relu_bn(linear(h, ew2, eb2), eg2, ebt2)        # 128 -> 128 (cols >= 64 exactly 0)
    latent_pad = linear(h, ew3, eb3)                   # 128 -> 128 (cols >= 32 exactly 0)
    # Store only the real latent columns directly to the (B, latent_dim) output
    # (no padded HBM slab, no wrapper-side slice op).
    latent_ref[...] = latent_pad[:, :latent_ref.shape[1]].astype(latent_ref.dtype)

    # ---- decoder: (Linear -> ReLU -> BN) x3, then Linear -> Tanh ----
    h = relu_bn(linear(latent_pad, dw0, db0), dg0, dbt0)   # 128(pad) -> 128 (cols >= 64 are 0)
    h = relu_bn(linear(h, dw1, db1), dg1, dbt1)            # 128(pad) -> 128
    h = relu_bn(linear(h, dw2, db2), dg2, dbt2)            # 128 -> 256
    recon_ref[...] = jnp.tanh(linear(h, dw3, db3)).astype(recon_ref.dtype)   # 256 -> 512


# ------------------------- parameter setup -------------------------

def init_linear_params(key, in_dim, out_dim):
    """Deterministic PyTorch-style (uniform +/- 1/sqrt(in)) Linear init; W stored (in, out)."""
    k_w, k_b = jax.random.split(key)
    bound = 1.0 / jnp.sqrt(float(in_dim))
    w = jax.random.uniform(k_w, (in_dim, out_dim), jnp.float32, -bound, bound)
    b = jax.random.uniform(k_b, (1, out_dim), jnp.float32, -bound, bound)
    return w, b


def build_params(key, input_size=INPUT_SIZE, latent_dim=LATENT_DIM):
    """Raw f32 parameters, equivalent to the PyTorch module's state_dict."""
    enc_dims = [(input_size, 256), (256, 128), (128, 64), (64, latent_dim)]
    dec_dims = [(latent_dim, 64), (64, 128), (128, 256), (256, input_size)]
    layers = []
    keys = jax.random.split(key, len(enc_dims) + len(dec_dims))
    ki = 0
    for stack in (enc_dims, dec_dims):
        for li, (din, dout) in enumerate(stack):
            w, b = init_linear_params(keys[ki], din, dout)
            ki += 1
            layer = {"w": w, "b": b}
            if li < len(stack) - 1:   # BN follows every layer except the last of each stack
                layer["gamma"] = jnp.ones((1, dout), jnp.float32)
                layer["beta"] = jnp.zeros((1, dout), jnp.float32)
            layers.append(layer)
    return layers


def prepare_kernel_params(layers):
    """Zero-pad every sub-128 feature dim to 128 lanes and cast weights to bf16.

    Padding with zeros is exact: padded output columns are 0*x + 0 = 0, stay 0
    through ReLU and BN (gamma/beta padded with 0 => scale = shift = 0), and
    padded weight input-rows contribute 0 to the next layer.
    """
    flat = []
    for layer in layers:
        w, b = layer["w"], layer["b"]
        din, dout = w.shape
        pin, pout = _pad_dim(din), _pad_dim(dout)
        w = jnp.pad(w, ((0, pin - din), (0, pout - dout)))
        b = jnp.pad(b, ((0, 0), (0, pout - dout)))
        flat.append(w.astype(jnp.bfloat16))   # MXU-native operand dtype
        flat.append(b)                        # biases stay f32
        if "gamma" in layer:
            flat.append(jnp.pad(layer["gamma"], ((0, 0), (0, pout - dout))))
            flat.append(jnp.pad(layer["beta"], ((0, 0), (0, pout - dout))))
    return tuple(flat)


# ----------------------------- wrapper -----------------------------

def _pick_tile_b(batch, prefer_grid=1):
    """Largest multiple-of-8 divisor of `batch` <= MAX_TILE_B giving >= prefer_grid steps.

    Falls back to a single full-batch tile (block_shape == full array dim is always legal).
    """
    limit = min(MAX_TILE_B, batch // max(prefer_grid, 1))
    limit = (limit // 8) * 8
    for t in range(limit, 0, -8):
        if batch % t == 0:
            return t
    return batch


@functools.partial(jax.jit, static_argnames=("latent_dim", "out_dtype", "megacore_split"))
def ecg_autoencoder_forward(x, params, *, latent_dim=LATENT_DIM,
                            out_dtype=jnp.float32, megacore_split=False):
    """Forward pass. Returns (reconstructed, latent), matching the PyTorch module.

    megacore_split=True forces at least 2 grid steps so v7x's two TensorCores both
    get work (BN stats then become per-tile -- see module-level TODO).
    out_dtype=jnp.bfloat16 halves output HBM traffic if downstream tolerates it.
    """
    B, input_size = x.shape
    tile_b = _pick_tile_b(B, prefer_grid=2 if megacore_split else 1)
    grid = (B // tile_b,)

    x_spec = pl.BlockSpec((tile_b, input_size), lambda i: (i, 0))
    # Full-array specs with constant index_map -> params stay VMEM-resident across
    # all grid steps (no per-step re-DMA).
    # TODO(synk): single-buffer these invariant blocks (pipeline_mode=pl.Buffered(1))
    # to shave ~0.9 MB of VMEM on v7x if tile_b is ever pushed much higher.
    param_specs = [pl.BlockSpec(p.shape, lambda i: (0, 0)) for p in params]

    # Advisory cost estimate so XLA schedules surrounding ops around the custom call.
    weight_flops = sum(int(p.shape[0]) * int(p.shape[1]) for p in params if p.shape[0] > 1)
    param_bytes = sum(int(p.size) * p.dtype.itemsize for p in params)
    out_itemsize = jnp.dtype(out_dtype).itemsize
    cost = pl.CostEstimate(
        flops=int(2 * B * weight_flops),
        transcendentals=int(B * input_size),                       # tanh on the recon slab
        bytes_accessed=int(B * input_size * 4                       # x in
                           + B * (input_size + latent_dim) * out_itemsize  # recon + latent out
                           + param_bytes),
    )

    recon, latent = pl.pallas_call(
        ecg_autoencoder_kernel,
        grid=grid,
        out_shape=(
            jax.ShapeDtypeStruct((B, input_size), out_dtype),
            jax.ShapeDtypeStruct((B, latent_dim), out_dtype),
        ),
        in_specs=[x_spec] + param_specs,
        out_specs=(
            pl.BlockSpec((tile_b, input_size), lambda i: (i, 0)),
            pl.BlockSpec((tile_b, latent_dim), lambda i: (i, 0)),
        ),
        compiler_params=pltpu.CompilerParams(
            dimension_semantics=("parallel",),        # shards the batch grid over v7x's 2 TCs
            vmem_limit_bytes=48 * 1024 * 1024,        # ample on v5e/v6e, within v7x's 64 MiB
        ),
        cost_estimate=cost,
    )(x, *params)

    return recon, latent


# --------------------- pure-JAX reference (f32) ---------------------

def reference_forward(x, layers):
    """f32 reference with whole-batch training-mode BatchNorm (PyTorch semantics)."""
    def bn(h, gamma, beta):
        mean = jnp.mean(h, axis=0, keepdims=True)
        var = jnp.mean((h - mean) ** 2, axis=0, keepdims=True)   # biased variance
        return (h - mean) * jax.lax.rsqrt(var + BN_EPS) * gamma + beta

    h = x
    latent = None
    for i, layer in enumerate(layers):
        h = h @ layer["w"] + layer["b"]
        if "gamma" in layer:
            h = bn(jnp.maximum(h, 0.0), layer["gamma"], layer["beta"])
        if i == 3:
            latent = h
        if i == 7:
            h = jnp.tanh(h)
    return h, latent


# ------------------------------ demo -------------------------------

if __name__ == "__main__":
    key = jax.random.PRNGKey(0)
    k_x, k_p = jax.random.split(key)

    B = 128   # small demo batch; single tile => exact whole-batch BN statistics
    x = jax.random.normal(k_x, (B, INPUT_SIZE), jnp.float32)

    raw_layers = build_params(k_p)
    params = prepare_kernel_params(raw_layers)

    # Default path: exact whole-batch BN, f32 outputs (module parity).
    recon, latent = ecg_autoencoder_forward(x, params)
    jax.block_until_ready((recon, latent))
    assert recon.shape == (B, INPUT_SIZE) and latent.shape == (B, LATENT_DIM)
    assert bool(jnp.all(jnp.isfinite(recon))) and bool(jnp.all(jnp.isfinite(latent)))

    # Correctness vs pure-f32 reference (deviation comes only from bf16 MXU operands).
    recon_r, latent_r = reference_forward(x, raw_layers)
    assert float(jnp.max(jnp.abs(recon - recon_r))) < 1e-1
    assert float(jnp.max(jnp.abs(latent - latent_r))) < 1e-1

    # Megacore path: grid=(2,) so both v7x TensorCores get a step (per-tile BN stats).
    recon2, latent2 = ecg_autoencoder_forward(x, params, megacore_split=True)
    jax.block_until_ready((recon2, latent2))
    assert recon2.shape == (B, INPUT_SIZE) and latent2.shape == (B, LATENT_DIM)
    assert bool(jnp.all(jnp.isfinite(recon2))) and bool(jnp.all(jnp.isfinite(latent2)))

    print("KERNEL_OK")
</pallas_src>

<mosaic_0001>
module attributes {stable_mosaic.version = 11 : i64} {
  func.func @ecg_autoencoder_kernel(%arg0: i32, %arg1: memref<128x512xf32, #tpu.memory_space<vmem>>, %arg2: memref<512x256xbf16, #tpu.memory_space<vmem>>, %arg3: memref<1x256xf32, #tpu.memory_space<vmem>>, %arg4: memref<1x256xf32, #tpu.memory_space<vmem>>, %arg5: memref<1x256xf32, #tpu.memory_space<vmem>>, %arg6: memref<256x128xbf16, #tpu.memory_space<vmem>>, %arg7: memref<1x128xf32, #tpu.memory_space<vmem>>, %arg8: memref<1x128xf32, #tpu.memory_space<vmem>>, %arg9: memref<1x128xf32, #tpu.memory_space<vmem>>, %arg10: memref<128x128xbf16, #tpu.memory_space<vmem>>, %arg11: memref<1x128xf32, #tpu.memory_space<vmem>>, %arg12: memref<1x128xf32, #tpu.memory_space<vmem>>, %arg13: memref<1x128xf32, #tpu.memory_space<vmem>>, %arg14: memref<128x128xbf16, #tpu.memory_space<vmem>>, %arg15: memref<1x128xf32, #tpu.memory_space<vmem>>, %arg16: memref<128x128xbf16, #tpu.memory_space<vmem>>, %arg17: memref<1x128xf32, #tpu.memory_space<vmem>>, %arg18: memref<1x128xf32, #tpu.memory_space<vmem>>, %arg19: memref<1x128xf32, #tpu.memory_space<vmem>>, %arg20: memref<128x128xbf16, #tpu.memory_space<vmem>>, %arg21: memref<1x128xf32, #tpu.memory_space<vmem>>, %arg22: memref<1x128xf32, #tpu.memory_space<vmem>>, %arg23: memref<1x128xf32, #tpu.memory_space<vmem>>, %arg24: memref<128x256xbf16, #tpu.memory_space<vmem>>, %arg25: memref<1x256xf32, #tpu.memory_space<vmem>>, %arg26: memref<1x256xf32, #tpu.memory_space<vmem>>, %arg27: memref<1x256xf32, #tpu.memory_space<vmem>>, %arg28: memref<256x512xbf16, #tpu.memory_space<vmem>>, %arg29: memref<1x512xf32, #tpu.memory_space<vmem>>, %arg30: memref<128x512xf32, #tpu.memory_space<vmem>>, %arg31: memref<128x32xf32, #tpu.memory_space<vmem>>) attributes {dimension_semantics = [#tpu.dimension_semantics<parallel>], iteration_bounds = array<i64: 1>, scalar_prefetch = 0 : i64, scratch_operands = 0 : i64, tpu.core_type = #tpu.core_type<tc>, window_params = [{transform_indices = @transform_0, window_bounds = array<i64: 128, 512>}, {pipeline_mode = #tpu.pipeline_mode<synchronous>, transform_indices = @transform_1, window_bounds = array<i64: 512, 256>}, {pipeline_mode = #tpu.pipeline_mode<synchronous>, transform_indices = @transform_2, window_bounds = array<i64: 1, 256>}, {pipeline_mode = #tpu.pipeline_mode<synchronous>, transform_indices = @transform_3, window_bounds = array<i64: 1, 256>}, {pipeline_mode = #tpu.pipeline_mode<synchronous>, transform_indices = @transform_4, window_bounds = array<i64: 1, 256>}, {pipeline_mode = #tpu.pipeline_mode<synchronous>, transform_indices = @transform_5, window_bounds = array<i64: 256, 128>}, {pipeline_mode = #tpu.pipeline_mode<synchronous>, transform_indices = @transform_6, window_bounds = array<i64: 1, 128>}, {pipeline_mode = #tpu.pipeline_mode<synchronous>, transform_indices = @transform_7, window_bounds = array<i64: 1, 128>}, {pipeline_mode = #tpu.pipeline_mode<synchronous>, transform_indices = @transform_8, window_bounds = array<i64: 1, 128>}, {pipeline_mode = #tpu.pipeline_mode<synchronous>, transform_indices = @transform_9, window_bounds = array<i64: 128, 128>}, {pipeline_mode = #tpu.pipeline_mode<synchronous>, transform_indices = @transform_10, window_bounds = array<i64: 1, 128>}, {pipeline_mode = #tpu.pipeline_mode<synchronous>, transform_indices = @transform_11, window_bounds = array<i64: 1, 128>}, {pipeline_mode = #tpu.pipeline_mode<synchronous>, transform_indices = @transform_12, window_bounds = array<i64: 1, 128>}, {pipeline_mode = #tpu.pipeline_mode<synchronous>, transform_indices = @transform_13, window_bounds = array<i64: 128, 128>}, {pipeline_mode = #tpu.pipeline_mode<synchronous>, transform_indices = @transform_14, window_bounds = array<i64: 1, 128>}, {pipeline_mode = #tpu.pipeline_mode<synchronous>, transform_indices = @transform_15, window_bounds = array<i64: 128, 128>}, {pipeline_mode = #tpu.pipeline_mode<synchronous>, transform_indices = @transform_16, window_bounds = array<i64: 1, 128>}, {pipeline_mode = #tpu.pipeline_mode<synchronous>, transform_indices = @transform_17, window_bounds = array<i64: 1, 128>}, {pipeline_mode = #tpu.pipeline_mode<synchronous>, transform_indices = @transform_18, window_bounds = array<i64: 1, 128>}, {pipeline_mode = #tpu.pipeline_mode<synchronous>, transform_indices = @transform_19, window_bounds = array<i64: 128, 128>}, {pipeline_mode = #tpu.pipeline_mode<synchronous>, transform_indices = @transform_20, window_bounds = array<i64: 1, 128>}, {pipeline_mode = #tpu.pipeline_mode<synchronous>, transform_indices = @transform_21, window_bounds = array<i64: 1, 128>}, {pipeline_mode = #tpu.pipeline_mode<synchronous>, transform_indices = @transform_22, window_bounds = array<i64: 1, 128>}, {pipeline_mode = #tpu.pipeline_mode<synchronous>, transform_indices = @transform_23, window_bounds = array<i64: 128, 256>}, {pipeline_mode = #tpu.pipeline_mode<synchronous>, transform_indices = @transform_24, window_bounds = array<i64: 1, 256>}, {pipeline_mode = #tpu.pipeline_mode<synchronous>, transform_indices = @transform_25, window_bounds = array<i64: 1, 256>}, {pipeline_mode = #tpu.pipeline_mode<synchronous>, transform_indices = @transform_26, window_bounds = array<i64: 1, 256>}, {pipeline_mode = #tpu.pipeline_mode<synchronous>, transform_indices = @transform_27, window_bounds = array<i64: 256, 512>}, {pipeline_mode = #tpu.pipeline_mode<synchronous>, transform_indices = @transform_28, window_bounds = array<i64: 1, 512>}, {transform_indices = @transform_29, window_bounds = array<i64: 128, 512>}, {transform_indices = @transform_30, window_bounds = array<i64: 128, 32>}]} {
    %c0 = arith.constant 0 : index
    %c0_0 = arith.constant 0 : index
    %0 = vector.load %arg1[%c0, %c0_0] : memref<128x512xf32, #tpu.memory_space<vmem>>, vector<128x512xf32>
    %1 = arith.truncf %0 : vector<128x512xf32> to vector<128x512xbf16>
    %c0_1 = arith.constant 0 : index
    %c0_2 = arith.constant 0 : index
    %2 = vector.load %arg2[%c0_1, %c0_2] : memref<512x256xbf16, #tpu.memory_space<vmem>>, vector<512x256xbf16>
    %cst = arith.constant dense<0.000000e+00> : vector<128x256xf32>
    %3 = tpu.matmul %1, %2, %cst {dimension_numbers = #tpu.dot_dimension_numbers<[1], [0], [0], [1], [0, 0, 1, 1], [], []>} : vector<128x512xbf16>, vector<512x256xbf16>, vector<128x256xf32> -> vector<128x256xf32>
    %c0_3 = arith.constant 0 : index
    %c0_4 = arith.constant 0 : index
    %4 = vector.load %arg3[%c0_3, %c0_4] : memref<1x256xf32, #tpu.memory_space<vmem>>, vector<1x256xf32>
    %5 = vector.broadcast %4 : vector<1x256xf32> to vector<128x256xf32>
    %6 = arith.addf %3, %5 : vector<128x256xf32>
    %cst_5 = arith.constant 0.000000e+00 : f32
    %7 = vector.broadcast %cst_5 : f32 to vector<128x256xf32>
    %8 = arith.maximumf %6, %7 : vector<128x256xf32>
    %cst_6 = arith.constant dense<0.000000e+00> : vector<256xf32>
    %9 = vector.multi_reduction <add>, %8, %cst_6 [0] : vector<128x256xf32> to vector<256xf32>
    %10 = vector.shape_cast %9 : vector<256xf32> to vector<1x256xf32>
    %cst_7 = arith.constant 1.280000e+02 : f32
    %11 = vector.broadcast %cst_7 : f32 to vector<1x256xf32>
    %12 = arith.divf %10, %11 : vector<1x256xf32>
    %13 = arith.mulf %8, %8 : vector<128x256xf32>
    %cst_8 = arith.constant dense<0.000000e+00> : vector<256xf32>
    %14 = vector.multi_reduction <add>, %13, %cst_8 [0] : vector<128x256xf32> to vector<256xf32>
    %15 = vector.shape_cast %14 : vector<256xf32> to vector<1x256xf32>
    %cst_9 = arith.constant 1.280000e+02 : f32
    %16 = vector.broadcast %cst_9 : f32 to vector<1x256xf32>
    %17 = arith.divf %15, %16 : vector<1x256xf32>
    %18 = arith.mulf %12, %12 : vector<1x256xf32>
    %19 = arith.subf %17, %18 : vector<1x256xf32>
    %cst_10 = arith.constant 0.000000e+00 : f32
    %20 = vector.broadcast %cst_10 : f32 to vector<1x256xf32>
    %21 = arith.maximumf %19, %20 : vector<1x256xf32>
    %c0_11 = arith.constant 0 : index
    %c0_12 = arith.constant 0 : index
    %22 = vector.load %arg4[%c0_11, %c0_12] : memref<1x256xf32, #tpu.memory_space<vmem>>, vector<1x256xf32>
    %cst_13 = arith.constant 9.99999974E-6 : f32
    %23 = vector.broadcast %cst_13 : f32 to vector<1x256xf32>
    %24 = arith.addf %21, %23 : vector<1x256xf32>
    %25 = math.rsqrt %24 : vector<1x256xf32>
    %26 = arith.mulf %22, %25 : vector<1x256xf32>
    %c0_14 = arith.constant 0 : index
    %c0_15 = arith.constant 0 : index
    %27 = vector.load %arg5[%c0_14, %c0_15] : memref<1x256xf32, #tpu.memory_space<vmem>>, vector<1x256xf32>
    %28 = arith.mulf %12, %26 : vector<1x256xf32>
    %29 = arith.subf %27, %28 : vector<1x256xf32>
    %30 = vector.broadcast %26 : vector<1x256xf32> to vector<128x256xf32>
    %31 = arith.mulf %8, %30 : vector<128x256xf32>
    %32 = vector.broadcast %29 : vector<1x256xf32> to vector<128x256xf32>
    %33 = arith.addf %31, %32 : vector<128x256xf32>
    %34 = arith.truncf %33 : vector<128x256xf32> to vector<128x256xbf16>
    %c0_16 = arith.constant 0 : index
    %c0_17 = arith.constant 0 : index
    %35 = vector.load %arg6[%c0_16, %c0_17] : memref<256x128xbf16, #tpu.memory_space<vmem>>, vector<256x128xbf16>
    %cst_18 = arith.constant dense<0.000000e+00> : vector<128x128xf32>
    %36 = tpu.matmul %34, %35, %cst_18 {dimension_numbers = #tpu.dot_dimension_numbers<[1], [0], [0], [1], [0, 0, 1, 1], [], []>} : vector<128x256xbf16>, vector<256x128xbf16>, vector<128x128xf32> -> vector<128x128xf32>
    %c0_19 = arith.constant 0 : index
    %c0_20 = arith.constant 0 : index
    %37 = vector.load %arg7[%c0_19, %c0_20] : memref<1x128xf32, #tpu.memory_space<vmem>>, vector<1x128xf32>
    %38 = vector.broadcast %37 : vector<1x128xf32> to vector<128x128xf32>
    %39 = arith.addf %36, %38 : vector<128x128xf32>
    %cst_21 = arith.constant 0.000000e+00 : f32
    %40 = vector.broadcast %cst_21 : f32 to vector<128x128xf32>
    %41 = arith.maximumf %39, %40 : vector<128x128xf32>
    %cst_22 = arith.constant dense<0.000000e+00> : vector<128xf32>
    %42 = vector.multi_reduction <add>, %41, %cst_22 [0] : vector<128x128xf32> to vector<128xf32>
    %43 = vector.shape_cast %42 : vector<128xf32> to vector<1x128xf32>
    %cst_23 = arith.constant 1.280000e+02 : f32
    %44 = vector.broadcast %cst_23 : f32 to vector<1x128xf32>
    %45 = arith.divf %43, %44 : vector<1x128xf32>
    %46 = arith.mulf %41, %41 : vector<128x128xf32>
    %cst_24 = arith.constant dense<0.000000e+00> : vector<128xf32>
    %47 = vector.multi_reduction <add>, %46, %cst_24 [0] : vector<128x128xf32> to vector<128xf32>
    %48 = vector.shape_cast %47 : vector<128xf32> to vector<1x128xf32>
    %cst_25 = arith.constant 1.280000e+02 : f32
    %49 = vector.broadcast %cst_25 : f32 to vector<1x128xf32>
    %50 = arith.divf %48, %49 : vector<1x128xf32>
    %51 = arith.mulf %45, %45 : vector<1x128xf32>
    %52 = arith.subf %50, %51 : vector<1x128xf32>
    %cst_26 = arith.constant 0.000000e+00 : f32
    %53 = vector.broadcast %cst_26 : f32 to vector<1x128xf32>
    %54 = arith.maximumf %52, %53 : vector<1x128xf32>
    %c0_27 = arith.constant 0 : index
    %c0_28 = arith.constant 0 : index
    %55 = vector.load %arg8[%c0_27, %c0_28] : memref<1x128xf32, #tpu.memory_space<vmem>>, vector<1x128xf32>
    %cst_29 = arith.constant 9.99999974E-6 : f32
    %56 = vector.broadcast %cst_29 : f32 to vector<1x128xf32>
    %57 = arith.addf %54, %56 : vector<1x128xf32>
    %58 = math.rsqrt %57 : vector<1x128xf32>
    %59 = arith.mulf %55, %58 : vector<1x128xf32>
    %c0_30 = arith.constant 0 : index
    %c0_31 = arith.constant 0 : index
    %60 = vector.load %arg9[%c0_30, %c0_31] : memref<1x128xf32, #tpu.memory_space<vmem>>, vector<1x128xf32>
    %61 = arith.mulf %45, %59 : vector<1x128xf32>
    %62 = arith.subf %60, %61 : vector<1x128xf32>
    %63 = vector.broadcast %59 : vector<1x128xf32> to vector<128x128xf32>
    %64 = arith.mulf %41, %63 : vector<128x128xf32>
    %65 = vector.broadcast %62 : vector<1x128xf32> to vector<128x128xf32>
    %66 = arith.addf %64, %65 : vector<128x128xf32>
    %67 = arith.truncf %66 : vector<128x128xf32> to vector<128x128xbf16>
    %c0_32 = arith.constant 0 : index
    %c0_33 = arith.constant 0 : index
    %68 = vector.load %arg10[%c0_32, %c0_33] : memref<128x128xbf16, #tpu.memory_space<vmem>>, vector<128x128xbf16>
    %cst_34 = arith.constant dense<0.000000e+00> : vector<128x128xf32>
    %69 = tpu.matmul %67, %68, %cst_34 {dimension_numbers = #tpu.dot_dimension_numbers<[1], [0], [0], [1], [0, 0, 1, 1], [], []>} : vector<128x128xbf16>, vector<128x128xbf16>, vector<128x128xf32> -> vector<128x128xf32>
    %c0_35 = arith.constant 0 : index
    %c0_36 = arith.constant 0 : index
    %70 = vector.load %arg11[%c0_35, %c0_36] : memref<1x128xf32, #tpu.memory_space<vmem>>, vector<1x128xf32>
    %71 = vector.broadcast %70 : vector<1x128xf32> to vector<128x128xf32>
    %72 = arith.addf %69, %71 : vector<128x128xf32>
    %cst_37 = arith.constant 0.000000e+00 : f32
    %73 = vector.broadcast %cst_37 : f32 to vector<128x128xf32>
    %74 = arith.maximumf %72, %73 : vector<128x128xf32>
    %cst_38 = arith.constant dense<0.000000e+00> : vector<128xf32>
    %75 = vector.multi_reduction <add>, %74, %cst_38 [0] : vector<128x128xf32> to vector<128xf32>
    %76 = vector.shape_cast %75 : vector<128xf32> to vector<1x128xf32>
    %cst_39 = arith.constant 1.280000e+02 : f32
    %77 = vector.broadcast %cst_39 : f32 to vector<1x128xf32>
    %78 = arith.divf %76, %77 : vector<1x128xf32>
    %79 = arith.mulf %74, %74 : vector<128x128xf32>
    %cst_40 = arith.constant dense<0.000000e+00> : vector<128xf32>
    %80 = vector.multi_reduction <add>, %79, %cst_40 [0] : vector<128x128xf32> to vector<128xf32>
    %81 = vector.shape_cast %80 : vector<128xf32> to vector<1x128xf32>
    %cst_41 = arith.constant 1.280000e+02 : f32
    %82 = vector.broadcast %cst_41 : f32 to vector<1x128xf32>
    %83 = arith.divf %81, %82 : vector<1x128xf32>
    %84 = arith.mulf %78, %78 : vector<1x128xf32>
    %85 = arith.subf %83, %84 : vector<1x128xf32>
    %cst_42 = arith.constant 0.000000e+00 : f32
    %86 = vector.broadcast %cst_42 : f32 to vector<1x128xf32>
    %87 = arith.maximumf %85, %86 : vector<1x128xf32>
    %c0_43 = arith.constant 0 : index
    %c0_44 = arith.constant 0 : index
    %88 = vector.load %arg12[%c0_43, %c0_44] : memref<1x128xf32, #tpu.memory_space<vmem>>, vector<1x128xf32>
    %cst_45 = arith.constant 9.99999974E-6 : f32
    %89 = vector.broadcast %cst_45 : f32 to vector<1x128xf32>
    %90 = arith.addf %87, %89 : vector<1x128xf32>
    %91 = math.rsqrt %90 : vector<1x128xf32>
    %92 = arith.mulf %88, %91 : vector<1x128xf32>
    %c0_46 = arith.constant 0 : index
    %c0_47 = arith.constant 0 : index
    %93 = vector.load %arg13[%c0_46, %c0_47] : memref<1x128xf32, #tpu.memory_space<vmem>>, vector<1x128xf32>
    %94 = arith.mulf %78, %92 : vector<1x128xf32>
    %95 = arith.subf %93, %94 : vector<1x128xf32>
    %96 = vector.broadcast %92 : vector<1x128xf32> to vector<128x128xf32>
    %97 = arith.mulf %74, %96 : vector<128x128xf32>
    %98 = vector.broadcast %95 : vector<1x128xf32> to vector<128x128xf32>
    %99 = arith.addf %97, %98 : vector<128x128xf32>
    %100 = arith.truncf %99 : vector<128x128xf32> to vector<128x128xbf16>
    %c0_48 = arith.constant 0 : index
    %c0_49 = arith.constant 0 : index
    %101 = vector.load %arg14[%c0_48, %c0_49] : memref<128x128xbf16, #tpu.memory_space<vmem>>, vector<128x128xbf16>
    %cst_50 = arith.constant dense<0.000000e+00> : vector<128x128xf32>
    %102 = tpu.matmul %100, %101, %cst_50 {dimension_numbers = #tpu.dot_dimension_numbers<[1], [0], [0], [1], [0, 0, 1, 1], [], []>} : vector<128x128xbf16>, vector<128x128xbf16>, vector<128x128xf32> -> vector<128x128xf32>
    %c0_51 = arith.constant 0 : index
    %c0_52 = arith.constant 0 : index
    %103 = vector.load %arg15[%c0_51, %c0_52] : memref<1x128xf32, #tpu.memory_space<vmem>>, vector<1x128xf32>
    %104 = vector.broadcast %103 : vector<1x128xf32> to vector<128x128xf32>
    %105 = arith.addf %102, %104 : vector<128x128xf32>
    %106 = vector.extract_strided_slice %105 {offsets = [0, 0], sizes = [128, 32], strides = [1, 1]} : vector<128x128xf32> to vector<128x32xf32>
    %c0_53 = arith.constant 0 : index
    %c0_54 = arith.constant 0 : index
    %107 = vector.load %arg31[%c0_53, %c0_54] : memref<128x32xf32, #tpu.memory_space<vmem>>, vector<128x32xf32>
    tpu.vector_store %arg31[%c0_53, %c0_54], %106 {strides = array<i32>} : memref<128x32xf32, #tpu.memory_space<vmem>>, vector<128x32xf32>,
    %108 = arith.truncf %105 : vector<128x128xf32> to vector<128x128xbf16>
    %c0_55 = arith.constant 0 : index
    %c0_56 = arith.constant 0 : index
    %109 = vector.load %arg16[%c0_55, %c0_56] : memref<128x128xbf16, #tpu.memory_space<vmem>>, vector<128x128xbf16>
    %cst_57 = arith.constant dense<0.000000e+00> : vector<128x128xf32>
    %110 = tpu.matmul %108, %109, %cst_57 {dimension_numbers = #tpu.dot_dimension_numbers<[1], [0], [0], [1], [0, 0, 1, 1], [], []>} : vector<128x128xbf16>, vector<128x128xbf16>, vector<128x128xf32> -> vector<128x128xf32>
    %c0_58 = arith.constant 0 : index
    %c0_59 = arith.constant 0 : index
    %111 = vector.load %arg17[%c0_58, %c0_59] : memref<1x128xf32, #tpu.memory_space<vmem>>, vector<1x128xf32>
    %112 = vector.broadcast %111 : vector<1x128xf32> to vector<128x128xf32>
    %113 = arith.addf %110, %112 : vector<128x128xf32>
    %cst_60 = arith.constant 0.000000e+00 : f32
    %114 = vector.broadcast %cst_60 : f32 to vector<128x128xf32>
    %115 = arith.maximumf %113, %114 : vector<128x128xf32>
    %cst_61 = arith.constant dense<0.000000e+00> : vector<128xf32>
    %116 = vector.multi_reduction <add>, %115, %cst_61 [0] : vector<128x128xf32> to vector<128xf32>
    %117 = vector.shape_cast %116 : vector<128xf32> to vector<1x128xf32>
    %cst_62 = arith.constant 1.280000e+02 : f32
    %118 = vector.broadcast %cst_62 : f32 to vector<1x128xf32>
    %119 = arith.divf %117, %118 : vector<1x128xf32>
    %120 = arith.mulf %115, %115 : vector<128x128xf32>
    %cst_63 = arith.constant dense<0.000000e+00> : vector<128xf32>
    %121 = vector.multi_reduction <add>, %120, %cst_63 [0] : vector<128x128xf32> to vector<128xf32>
    %122 = vector.shape_cast %121 : vector<128xf32> to vector<1x128xf32>
    %cst_64 = arith.constant 1.280000e+02 : f32
    %123 = vector.broadcast %cst_64 : f32 to vector<1x128xf32>
    %124 = arith.divf %122, %123 : vector<1x128xf32>
    %125 = arith.mulf %119, %119 : vector<1x128xf32>
    %126 = arith.subf %124, %125 : vector<1x128xf32>
    %cst_65 = arith.constant 0.000000e+00 : f32
    %127 = vector.broadcast %cst_65 : f32 to vector<1x128xf32>
    %128 = arith.maximumf %126, %127 : vector<1x128xf32>
    %c0_66 = arith.constant 0 : index
    %c0_67 = arith.constant 0 : index
    %129 = vector.load %arg18[%c0_66, %c0_67] : memref<1x128xf32, #tpu.memory_space<vmem>>, vector<1x128xf32>
    %cst_68 = arith.constant 9.99999974E-6 : f32
    %130 = vector.broadcast %cst_68 : f32 to vector<1x128xf32>
    %131 = arith.addf %128, %130 : vector<1x128xf32>
    %132 = math.rsqrt %131 : vector<1x128xf32>
    %133 = arith.mulf %129, %132 : vector<1x128xf32>
    %c0_69 = arith.constant 0 : index
    %c0_70 = arith.constant 0 : index
    %134 = vector.load %arg19[%c0_69, %c0_70] : memref<1x128xf32, #tpu.memory_space<vmem>>, vector<1x128xf32>
    %135 = arith.mulf %119, %133 : vector<1x128xf32>
    %136 = arith.subf %134, %135 : vector<1x128xf32>
    %137 = vector.broadcast %133 : vector<1x128xf32> to vector<128x128xf32>
    %138 = arith.mulf %115, %137 : vector<128x128xf32>
    %139 = vector.broadcast %136 : vector<1x128xf32> to vector<128x128xf32>
    %140 = arith.addf %138, %139 : vector<128x128xf32>
    %141 = arith.truncf %140 : vector<128x128xf32> to vector<128x128xbf16>
    %c0_71 = arith.constant 0 : index
    %c0_72 = arith.constant 0 : index
    %142 = vector.load %arg20[%c0_71, %c0_72] : memref<128x128xbf16, #tpu.memory_space<vmem>>, vector<128x128xbf16>
    %cst_73 = arith.constant dense<0.000000e+00> : vector<128x128xf32>
    %143 = tpu.matmul %141, %142, %cst_73 {dimension_numbers = #tpu.dot_dimension_numbers<[1], [0], [0], [1], [0, 0, 1, 1], [], []>} : vector<128x128xbf16>, vector<128x128xbf16>, vector<128x128xf32> -> vector<128x128xf32>
    %c0_74 = arith.constant 0 : index
    %c0_75 = arith.constant 0 : index
    %144 = vector.load %arg21[%c0_74, %c0_75] : memref<1x128xf32, #tpu.memory_space<vmem>>, vector<1x128xf32>
    %145 = vector.broadcast %144 : vector<1x128xf32> to vector<128x128xf32>
    %146 = arith.addf %143, %145 : vector<128x128xf32>
    %cst_76 = arith.constant 0.000000e+00 : f32
    %147 = vector.broadcast %cst_76 : f32 to vector<128x128xf32>
    %148 = arith.maximumf %146, %147 : vector<128x128xf32>
    %cst_77 = arith.constant dense<0.000000e+00> : vector<128xf32>
    %149 = vector.multi_reduction <add>, %148, %cst_77 [0] : vector<128x128xf32> to vector<128xf32>
    %150 = vector.shape_cast %149 : vector<128xf32> to vector<1x128xf32>
    %cst_78 = arith.constant 1.280000e+02 : f32
    %151 = vector.broadcast %cst_78 : f32 to vector<1x128xf32>
    %152 = arith.divf %150, %151 : vector<1x128xf32>
    %153 = arith.mulf %148, %148 : vector<128x128xf32>
    %cst_79 = arith.constant dense<0.000000e+00> : vector<128xf32>
    %154 = vector.multi_reduction <add>, %153, %cst_79 [0] : vector<128x128xf32> to vector<128xf32>
    %155 = vector.shape_cast %154 : vector<128xf32> to vector<1x128xf32>
    %cst_80 = arith.constant 1.280000e+02 : f32
    %156 = vector.broadcast %cst_80 : f32 to vector<1x128xf32>
    %157 = arith.divf %155, %156 : vector<1x128xf32>
    %158 = arith.mulf %152, %152 : vector<1x128xf32>
    %159 = arith.subf %157, %158 : vector<1x128xf32>
    %cst_81 = arith.constant 0.000000e+00 : f32
    %160 = vector.broadcast %cst_81 : f32 to vector<1x128xf32>
    %161 = arith.maximumf %159, %160 : vector<1x128xf32>
    %c0_82 = arith.constant 0 : index
    %c0_83 = arith.constant 0 : index
    %162 = vector.load %arg22[%c0_82, %c0_83] : memref<1x128xf32, #tpu.memory_space<vmem>>, vector<1x128xf32>
    %cst_84 = arith.constant 9.99999974E-6 : f32
    %163 = vector.broadcast %cst_84 : f32 to vector<1x128xf32>
    %164 = arith.addf %161, %163 : vector<1x128xf32>
    %165 = math.rsqrt %164 : vector<1x128xf32>
    %166 = arith.mulf %162, %165 : vector<1x128xf32>
    %c0_85 = arith.constant 0 : index
    %c0_86 = arith.constant 0 : index
    %167 = vector.load %arg23[%c0_85, %c0_86] : memref<1x128xf32, #tpu.memory_space<vmem>>, vector<1x128xf32>
    %168 = arith.mulf %152, %166 : vector<1x128xf32>
    %169 = arith.subf %167, %168 : vector<1x128xf32>
    %170 = vector.broadcast %166 : vector<1x128xf32> to vector<128x128xf32>
    %171 = arith.mulf %148, %170 : vector<128x128xf32>
    %172 = vector.broadcast %169 : vector<1x128xf32> to vector<128x128xf32>
    %173 = arith.addf %171, %172 : vector<128x128xf32>
    %174 = arith.truncf %173 : vector<128x128xf32> to vector<128x128xbf16>
    %c0_87 = arith.constant 0 : index
    %c0_88 = arith.constant 0 : index
    %175 = vector.load %arg24[%c0_87, %c0_88] : memref<128x256xbf16, #tpu.memory_space<vmem>>, vector<128x256xbf16>
    %cst_89 = arith.constant dense<0.000000e+00> : vector<128x256xf32>
    %176 = tpu.matmul %174, %175, %cst_89 {dimension_numbers = #tpu.dot_dimension_numbers<[1], [0], [0], [1], [0, 0, 1, 1], [], []>} : vector<128x128xbf16>, vector<128x256xbf16>, vector<128x256xf32> -> vector<128x256xf32>
    %c0_90 = arith.constant 0 : index
    %c0_91 = arith.constant 0 : index
    %177 = vector.load %arg25[%c0_90, %c0_91] : memref<1x256xf32, #tpu.memory_space<vmem>>, vector<1x256xf32>
    %178 = vector.broadcast %177 : vector<1x256xf32> to vector<128x256xf32>
    %179 = arith.addf %176, %178 : vector<128x256xf32>
    %cst_92 = arith.constant 0.000000e+00 : f32
    %180 = vector.broadcast %cst_92 : f32 to vector<128x256xf32>
    %181 = arith.maximumf %179, %180 : vector<128x256xf32>
    %cst_93 = arith.constant dense<0.000000e+00> : vector<256xf32>
    %182 = vector.multi_reduction <add>, %181, %cst_93 [0] : vector<128x256xf32> to vector<256xf32>
    %183 = vector.shape_cast %182 : vector<256xf32> to vector<1x256xf32>
    %cst_94 = arith.constant 1.280000e+02 : f32
    %184 = vector.broadcast %cst_94 : f32 to vector<1x256xf32>
    %185 = arith.divf %183, %184 : vector<1x256xf32>
    %186 = arith.mulf %181, %181 : vector<128x256xf32>
    %cst_95 = arith.constant dense<0.000000e+00> : vector<256xf32>
    %187 = vector.multi_reduction <add>, %186, %cst_95 [0] : vector<128x256xf32> to vector<256xf32>
    %188 = vector.shape_cast %187 : vector<256xf32> to vector<1x256xf32>
    %cst_96 = arith.constant 1.280000e+02 : f32
    %189 = vector.broadcast %cst_96 : f32 to vector<1x256xf32>
    %190 = arith.divf %188, %189 : vector<1x256xf32>
    %191 = arith.mulf %185, %185 : vector<1x256xf32>
    %192 = arith.subf %190, %191 : vector<1x256xf32>
    %cst_97 = arith.constant 0.000000e+00 : f32
    %193 = vector.broadcast %cst_97 : f32 to vector<1x256xf32>
    %194 = arith.maximumf %192, %193 : vector<1x256xf32>
    %c0_98 = arith.constant 0 : index
    %c0_99 = arith.constant 0 : index
    %195 = vector.load %arg26[%c0_98, %c0_99] : memref<1x256xf32, #tpu.memory_space<vmem>>, vector<1x256xf32>
    %cst_100 = arith.constant 9.99999974E-6 : f32
    %196 = vector.broadcast %cst_100 : f32 to vector<1x256xf32>
    %197 = arith.addf %194, %196 : vector<1x256xf32>
    %198 = math.rsqrt %197 : vector<1x256xf32>
    %199 = arith.mulf %195, %198 : vector<1x256xf32>
    %c0_101 = arith.constant 0 : index
    %c0_102 = arith.constant 0 : index
    %200 = vector.load %arg27[%c0_101, %c0_102] : memref<1x256xf32, #tpu.memory_space<vmem>>, vector<1x256xf32>
    %201 = arith.mulf %185, %199 : vector<1x256xf32>
    %202 = arith.subf %200, %201 : vector<1x256xf32>
    %203 = vector.broadcast %199 : vector<1x256xf32> to vector<128x256xf32>
    %204 = arith.mulf %181, %203 : vector<128x256xf32>
    %205 = vector.broadcast %202 : vector<1x256xf32> to vector<128x256xf32>
    %206 = arith.addf %204, %205 : vector<128x256xf32>
    %207 = arith.truncf %206 : vector<128x256xf32> to vector<128x256xbf16>
    %c0_103 = arith.constant 0 : index
    %c0_104 = arith.constant 0 : index
    %208 = vector.load %arg28[%c0_103, %c0_104] : memref<256x512xbf16, #tpu.memory_space<vmem>>, vector<256x512xbf16>
    %cst_105 = arith.constant dense<0.000000e+00> : vector<128x512xf32>
    %209 = tpu.matmul %207, %208, %cst_105 {dimension_numbers = #tpu.dot_dimension_numbers<[1], [0], [0], [1], [0, 0, 1, 1], [], []>} : vector<128x256xbf16>, vector<256x512xbf16>, vector<128x512xf32> -> vector<128x512xf32>
    %c0_106 = arith.constant 0 : index
    %c0_107 = arith.constant 0 : index
    %210 = vector.load %arg29[%c0_106, %c0_107] : memref<1x512xf32, #tpu.memory_space<vmem>>, vector<1x512xf32>
    %211 = vector.broadcast %210 : vector<1x512xf32> to vector<128x512xf32>
    %212 = arith.addf %209, %211 : vector<128x512xf32>
    %213 = math.tanh %212 : vector<128x512xf32>
    %c0_108 = arith.constant 0 : index
    %c0_109 = arith.constant 0 : index
    %214 = vector.load %arg30[%c0_108, %c0_109] : memref<128x512xf32, #tpu.memory_space<vmem>>, vector<128x512xf32>
    tpu.vector_store %arg30[%c0_108, %c0_109], %213 {strides = array<i32>} : memref<128x512xf32, #tpu.memory_space<vmem>>, vector<128x512xf32>,
    return
  }
  func.func @transform_0(%arg0: i32) -> (i32, i32) {
    %c0_i32 = arith.constant 0 : i32
    %c0_i32_0 = arith.constant 0 : i32
    return %arg0, %c0_i32 : i32, i32
  }
  func.func @transform_1(%arg0: i32) -> (i32, i32) {
    %c0_i32 = arith.constant 0 : i32
    %c0_i32_0 = arith.constant 0 : i32
    %c0_i32_1 = arith.constant 0 : i32
    return %c0_i32, %c0_i32_0 : i32, i32
  }
  func.func @transform_2(%arg0: i32) -> (i32, i32) {
    %c0_i32 = arith.constant 0 : i32
    %c0_i32_0 = arith.constant 0 : i32
    %c0_i32_1 = arith.constant 0 : i32
    return %c0_i32, %c0_i32_0 : i32, i32
  }
  func.func @transform_3(%arg0: i32) -> (i32, i32) {
    %c0_i32 = arith.constant 0 : i32
    %c0_i32_0 = arith.constant 0 : i32
    %c0_i32_1 = arith.constant 0 : i32
    return %c0_i32, %c0_i32_0 : i32, i32
  }
  func.func @transform_4(%arg0: i32) -> (i32, i32) {
    %c0_i32 = arith.constant 0 : i32
    %c0_i32_0 = arith.constant 0 : i32
    %c0_i32_1 = arith.constant 0 : i32
    return %c0_i32, %c0_i32_0 : i32, i32
  }
  func.func @transform_5(%arg0: i32) -> (i32, i32) {
    %c0_i32 = arith.constant 0 : i32
    %c0_i32_0 = arith.constant 0 : i32
    %c0_i32_1 = arith.constant 0 : i32
    return %c0_i32, %c0_i32_0 : i32, i32
  }
  func.func @transform_6(%arg0: i32) -> (i32, i32) {
    %c0_i32 = arith.constant 0 : i32
    %c0_i32_0 = arith.constant 0 : i32
    %c0_i32_1 = arith.constant 0 : i32
    return %c0_i32, %c0_i32_0 : i32, i32
  }
  func.func @transform_7(%arg0: i32) -> (i32, i32) {
    %c0_i32 = arith.constant 0 : i32
    %c0_i32_0 = arith.constant 0 : i32
    %c0_i32_1 = arith.constant 0 : i32
    return %c0_i32, %c0_i32_0 : i32, i32
  }
  func.func @transform_8(%arg0: i32) -> (i32, i32) {
    %c0_i32 = arith.constant 0 : i32
    %c0_i32_0 = arith.constant 0 : i32
    %c0_i32_1 = arith.constant 0 : i32
    return %c0_i32, %c0_i32_0 : i32, i32
  }
  func.func @transform_9(%arg0: i32) -> (i32, i32) {
    %c0_i32 = arith.constant 0 : i32
    %c0_i32_0 = arith.constant 0 : i32
    %c0_i32_1 = arith.constant 0 : i32
    return %c0_i32, %c0_i32_0 : i32, i32
  }
  func.func @transform_10(%arg0: i32) -> (i32, i32) {
    %c0_i32 = arith.constant 0 : i32
    %c0_i32_0 = arith.constant 0 : i32
    %c0_i32_1 = arith.constant 0 : i32
    return %c0_i32, %c0_i32_0 : i32, i32
  }
  func.func @transform_11(%arg0: i32) -> (i32, i32) {
    %c0_i32 = arith.constant 0 : i32
    %c0_i32_0 = arith.constant 0 : i32
    %c0_i32_1 = arith.constant 0 : i32
    return %c0_i32, %c0_i32_0 : i32, i32
  }
  func.func @transform_12(%arg0: i32) -> (i32, i32) {
    %c0_i32 = arith.constant 0 : i32
    %c0_i32_0 = arith.constant 0 : i32
    %c0_i32_1 = arith.constant 0 : i32
    return %c0_i32, %c0_i32_0 : i32, i32
  }
  func.func @transform_13(%arg0: i32) -> (i32, i32) {
    %c0_i32 = arith.constant 0 : i32
    %c0_i32_0 = arith.constant 0 : i32
    %c0_i32_1 = arith.constant 0 : i32
    return %c0_i32, %c0_i32_0 : i32, i32
  }
  func.func @transform_14(%arg0: i32) -> (i32, i32) {
    %c0_i32 = arith.constant 0 : i32
    %c0_i32_0 = arith.constant 0 : i32
    %c0_i32_1 = arith.constant 0 : i32
    return %c0_i32, %c0_i32_0 : i32, i32
  }
  func.func @transform_15(%arg0: i32) -> (i32, i32) {
    %c0_i32 = arith.constant 0 : i32
    %c0_i32_0 = arith.constant 0 : i32
    %c0_i32_1 = arith.constant 0 : i32
    return %c0_i32, %c0_i32_0 : i32, i32
  }
  func.func @transform_16(%arg0: i32) -> (i32, i32) {
    %c0_i32 = arith.constant 0 : i32
    %c0_i32_0 = arith.constant 0 : i32
    %c0_i32_1 = arith.constant 0 : i32
    return %c0_i32, %c0_i32_0 : i32, i32
  }
  func.func @transform_17(%arg0: i32) -> (i32, i32) {
    %c0_i32 = arith.constant 0 : i32
    %c0_i32_0 = arith.constant 0 : i32
    %c0_i32_1 = arith.constant 0 : i32
    return %c0_i32, %c0_i32_0 : i32, i32
  }
  func.func @transform_18(%arg0: i32) -> (i32, i32) {
    %c0_i32 = arith.constant 0 : i32
    %c0_i32_0 = arith.constant 0 : i32
    %c0_i32_1 = arith.constant 0 : i32
    return %c0_i32, %c0_i32_0 : i32, i32
  }
  func.func @transform_19(%arg0: i32) -> (i32, i32) {
    %c0_i32 = arith.constant 0 : i32
    %c0_i32_0 = arith.constant 0 : i32
    %c0_i32_1 = arith.constant 0 : i32
    return %c0_i32, %c0_i32_0 : i32, i32
  }
  func.func @transform_20(%arg0: i32) -> (i32, i32) {
    %c0_i32 = arith.constant 0 : i32
    %c0_i32_0 = arith.constant 0 : i32
    %c0_i32_1 = arith.constant 0 : i32
    return %c0_i32, %c0_i32_0 : i32, i32
  }
  func.func @transform_21(%arg0: i32) -> (i32, i32) {
    %c0_i32 = arith.constant 0 : i32
    %c0_i32_0 = arith.constant 0 : i32
    %c0_i32_1 = arith.constant 0 : i32
    return %c0_i32, %c0_i32_0 : i32, i32
  }
  func.func @transform_22(%arg0: i32) -> (i32, i32) {
    %c0_i32 = arith.constant 0 : i32
    %c0_i32_0 = arith.constant 0 : i32
    %c0_i32_1 = arith.constant 0 : i32
    return %c0_i32, %c0_i32_0 : i32, i32
  }
  func.func @transform_23(%arg0: i32) -> (i32, i32) {
    %c0_i32 = arith.constant 0 : i32
    %c0_i32_0 = arith.constant 0 : i32
    %c0_i32_1 = arith.constant 0 : i32
    return %c0_i32, %c0_i32_0 : i32, i32
  }
  func.func @transform_24(%arg0: i32) -> (i32, i32) {
    %c0_i32 = arith.constant 0 : i32
    %c0_i32_0 = arith.constant 0 : i32
    %c0_i32_1 = arith.constant 0 : i32
    return %c0_i32, %c0_i32_0 : i32, i32
  }
  func.func @transform_25(%arg0: i32) -> (i32, i32) {
    %c0_i32 = arith.constant 0 : i32
    %c0_i32_0 = arith.constant 0 : i32
    %c0_i32_1 = arith.constant 0 : i32
    return %c0_i32, %c0_i32_0 : i32, i32
  }
  func.func @transform_26(%arg0: i32) -> (i32, i32) {
    %c0_i32 = arith.constant 0 : i32
    %c0_i32_0 = arith.constant 0 : i32
    %c0_i32_1 = arith.constant 0 : i32
    return %c0_i32, %c0_i32_0 : i32, i32
  }
  func.func @transform_27(%arg0: i32) -> (i32, i32) {
    %c0_i32 = arith.constant 0 : i32
    %c0_i32_0 = arith.constant 0 : i32
    %c0_i32_1 = arith.constant 0 : i32
    return %c0_i32, %c0_i32_0 : i32, i32
  }
  func.func @transform_28(%arg0: i32) -> (i32, i32) {
    %c0_i32 = arith.constant 0 : i32
    %c0_i32_0 = arith.constant 0 : i32
    %c0_i32_1 = arith.constant 0 : i32
    return %c0_i32, %c0_i32_0 : i32, i32
  }
  func.func @transform_29(%arg0: i32) -> (i32, i32) {
    %c0_i32 = arith.constant 0 : i32
    %c0_i32_0 = arith.constant 0 : i32
    return %arg0, %c0_i32 : i32, i32
  }
  func.func @transform_30(%arg0: i32) -> (i32, i32) {
    %c0_i32 = arith.constant 0 : i32
    %c0_i32_0 = arith.constant 0 : i32
    return %arg0, %c0_i32 : i32, i32
  }
}

</mosaic_0001>

<llo_original>
// kernel: ecg_autoencoder_forward.1
$region0: #{ecg_autoencoder_forward.1}
  #allocation0 [shape = 'u32[]', space=smem, size = 0x4, offset = 0x4, fixed_abs, tag = 'smem constant byte address 0x4 - core index']
  #allocation1 [shape = 'u32[72,128]{1,0:T(1,128)}', space=vmem, size = 0x9000, scoped, tag = 'internal scratch']
  %s0 = inlined_call_operand.smem [shape: u32[31], index: -1, kind: input, shape index: {}]
  %s1 = sld [smem:[%s0]]
  %s2 = scalar_lea.smem %s0, 1
  %s3 = sld [smem:[%s2]]
  %s4 = scalar_lea.smem %s0, 2
  %s5 = sld [smem:[%s4]]
  %s6 = scalar_lea.smem %s0, 3
  %s7 = sld [smem:[%s6]]
  %s8 = scalar_lea.smem %s0, 4
  %s9 = sld [smem:[%s8]]
  %s10 = scalar_lea.smem %s0, 5
  %s11 = sld [smem:[%s10]]
  %s12 = scalar_lea.smem %s0, 6
  %s13 = sld [smem:[%s12]]
  %s14 = scalar_lea.smem %s0, 7
  %s15 = sld [smem:[%s14]]
  %s16 = scalar_lea.smem %s0, 8
  %s17 = sld [smem:[%s16]]
  %s18 = scalar_lea.smem %s0, 9
  %s19 = sld [smem:[%s18]]
  %s20 = scalar_lea.smem %s0, 10
  %s21 = sld [smem:[%s20]]
  %s22 = scalar_lea.smem %s0, 11
  %s23 = sld [smem:[%s22]]
  %s24 = scalar_lea.smem %s0, 12
  %s25 = sld [smem:[%s24]]
  %s26 = scalar_lea.smem %s0, 13
  %s27 = sld [smem:[%s26]]
  %s28 = scalar_lea.smem %s0, 14
  %s29 = sld [smem:[%s28]]
  %s30 = scalar_lea.smem %s0, 15
  %s31 = sld [smem:[%s30]]
  %s32 = scalar_lea.smem %s0, 16
  %s33 = sld [smem:[%s32]]
  %s34 = scalar_lea.smem %s0, 17
  %s35 = sld [smem:[%s34]]
  %s36 = scalar_lea.smem %s0, 18
  %s37 = sld [smem:[%s36]]
  %s38 = scalar_lea.smem %s0, 19
  %s39 = sld [smem:[%s38]]
  %s40 = scalar_lea.smem %s0, 20
  %s41 = sld [smem:[%s40]]
  %s42 = scalar_lea.smem %s0, 21
  %s43 = sld [smem:[%s42]]
  %s44 = scalar_lea.smem %s0, 22
  %s45 = sld [smem:[%s44]]
  %s46 = scalar_lea.smem %s0, 23
  %s47 = sld [smem:[%s46]]
  %s48 = scalar_lea.smem %s0, 24
  %s49 = sld [smem:[%s48]]
  %s50 = scalar_lea.smem %s0, 25
  %s51 = sld [smem:[%s50]]
  %s52 = scalar_lea.smem %s0, 26
  %s53 = sld [smem:[%s52]]
  %s54 = scalar_lea.smem %s0, 27
  %s55 = sld [smem:[%s54]]
  %s56 = scalar_lea.smem %s0, 28
  %s57 = sld [smem:[%s56]]
  %s58 = scalar_lea.smem %s0, 29
  %s59 = sld [smem:[%s58]]
  %s60 = scalar_lea.smem %s0, 30
  %s61 = sld [smem:[%s60]]
  %62 = xla_tuple %s59, %s61
  %s63 = sld [smem:[#allocation0]]
  $region202: #{ecg_autoencoder_forward.1} parent=0
    _
  %s65 = ssub.s32 1, %s63
  %s66 = scalar_select 0, %s65, %s63
  $region1: #{ecg_autoencoder_forward.1} parent=0
    #allocation2 [shape = 'u8[262144]{0}', space=vmem, size = 0x40000, scoped, tag = 'input window, operand 0, single buffered']
    #allocation3 [shape = 's32[1]{0}', space=sflag, size = 0x4, scoped, tag = 'scoped memory for ecg_autoencoder_forward.1']
    #allocation4 [shape = 's32[1]{0}', space=sflag, size = 0x4, scoped, tag = 'scoped memory for ecg_autoencoder_forward.1']
    #allocation5 [shape = 'u8[262144]{0}', space=vmem, size = 0x40000, scoped, tag = 'input window, operand 1, single buffered']
    #allocation6 [shape = 's32[1]{0}', space=sflag, size = 0x4, scoped, tag = 'scoped memory for ecg_autoencoder_forward.1']
    #allocation7 [shape = 'u8[1024]{0}', space=vmem, size = 0x400, scoped, tag = 'input window, operand 2, single buffered']
    #allocation8 [shape = 'u8[1024]{0}', space=vmem, size = 0x400, scoped, tag = 'input window, operand 4, single buffered']
    #allocation9 [shape = 's32[1]{0}', space=sflag, size = 0x4, scoped, tag = 'scoped memory for ecg_autoencoder_forward.1']
    #allocation10 [shape = 'u8[65536]{0}', space=vmem, size = 0x10000, scoped, tag = 'input window, operand 5, single buffered']
    #allocation11 [shape = 'u8[512]{0}', space=vmem, size = 0x400, scoped, tag = 'input window, operand 6, single buffered']
    #allocation12 [shape = 's32[1]{0}', space=sflag, size = 0x4, scoped, tag = 'scoped memory for ecg_autoencoder_forward.1']
    #allocation13 [shape = 'u8[512]{0}', space=vmem, size = 0x400, scoped, tag = 'input window, operand 7, single buffered']
    #allocation14 [shape = 'u8[512]{0}', space=vmem, size = 0x400, scoped, tag = 'input window, operand 8, single buffered']
    #allocation15 [shape = 's32[1]{0}', space=sflag, size = 0x4, scoped, tag = 'scoped memory for ecg_autoencoder_forward.1']
    #allocation16 [shape = 'u8[32768]{0}', space=vmem, size = 0x8000, scoped, tag = 'input window, operand 9, single buffered']
    #allocation17 [shape = 'u8[512]{0}', space=vmem, size = 0x400, scoped, tag = 'input window, operand 10, single buffered']
    #allocation18 [shape = 's32[1]{0}', space=sflag, size = 0x4, scoped, tag = 'scoped memory for ecg_autoencoder_forward.1']
    #allocation19 [shape = 'u8[512]{0}', space=vmem, size = 0x400, scoped, tag = 'input window, operand 11, single buffered']
    #allocation20 [shape = 'u8[512]{0}', space=vmem, size = 0x400, scoped, tag = 'input window, operand 12, single buffered']
    #allocation21 [shape = 's32[1]{0}', space=sflag, size = 0x4, scoped, tag = 'scoped memory for ecg_autoencoder_forward.1']
    #allocation22 [shape = 'u8[32768]{0}', space=vmem, size = 0x8000, scoped, tag = 'input window, operand 13, single buffered']
    #allocation23 [shape = 'u8[32768]{0}', space=vmem, size = 0x8000, scoped, tag = 'input window, operand 15, single buffered']
    #allocation24 [shape = 's32[1]{0}', space=sflag, size = 0x4, scoped, tag = 'scoped memory for ecg_autoencoder_forward.1']
    #allocation25 [shape = 'u8[32768]{0}', space=vmem, size = 0x8000, scoped, tag = 'input window, operand 19, single buffered']
    #allocation26 [shape = 'u8[65536]{0}', space=vmem, size = 0x10000, scoped, tag = 'input window, operand 23, single buffered']
    #allocation27 [shape = 's32[1]{0}', space=sflag, size = 0x4, scoped, tag = 'scoped memory for ecg_autoencoder_forward.1']
    #allocation28 [shape = 'u8[262144]{0}', space=vmem, size = 0x40000, scoped, tag = 'input window, operand 27, single buffered']
    #allocation29 [shape = 'u8[262144]{0}', space=vmem, size = 0x40000, scoped, tag = 'output window, operand 0, single buffered']
    %67 = vsyncpa [#allocation3], 0
    %68 = vsyncpa [#allocation6], 0
    %69 = vsyncpa [#allocation9], 0
    %70 = vsyncpa [#allocation12], 0
    %71 = vsyncpa [#allocation15], 0
    %72 = vsyncpa [#allocation18], 0
    %73 = vsyncpa [#allocation21], 0
    %74 = vsyncpa [#allocation24], 0
    %75 = vsyncpa [#allocation27], 0
    %76 = vsyncpa [#allocation4], 0
    // Predicated region
    $region2: #{ecg_autoencoder_forward.1} parent=1 // pred_check
      _
    $region3: #{ecg_autoencoder_forward.1} parent=1 // pred_check_branch
      %78 = sbr.rel (0) target = $region5
    $region4: #{ecg_autoencoder_forward.1} parent=1 // pred_region
      %80 = vsyncadd [#allocation3], 0
      %s81 = sshll.u32 %s1, 4
      %s82 = int_to_ptr.hbm [resolvable:$true] %s81
      %s83 = sshll.u32 [#allocation2], 4
      %s84 = int_to_ptr.vmem [resolvable:$true] %s83
      %89 = dma.hbm_to_vmem [thread:$0]  %s82, 8192, %s84, [#allocation3], 512, 512, 32
    $region5: #{ecg_autoencoder_forward.1} parent=1 // pred_fallthru
      _
    // Predicated region
    $region6: #{ecg_autoencoder_forward.1} parent=1 // pred_check
      _
    $region7: #{ecg_autoencoder_forward.1} parent=1 // pred_check_branch
      %91 = sbr.rel (0) target = $region9
    $region8: #{ecg_autoencoder_forward.1} parent=1 // pred_region
      %93 = vsyncadd [#allocation6], 0
      %s94 = sshll.u32 %s3, 4
      %s95 = int_to_ptr.hbm [resolvable:$true] %s94
      %s96 = sshll.u32 [#allocation5], 4
      %s97 = int_to_ptr.vmem [resolvable:$true] %s96
      %102 = dma.hbm_to_vmem [thread:$0]  %s95, 8192, %s97, [#allocation6], 128, 128, 8
    $region9: #{ecg_autoencoder_forward.1} parent=1 // pred_fallthru
      _
    // Predicated region
    $region10: #{ecg_autoencoder_forward.1} parent=1 // pred_check
      _
    $region11: #{ecg_autoencoder_forward.1} parent=1 // pred_check_branch
      %104 = sbr.rel (0) target = $region13
    $region12: #{ecg_autoencoder_forward.1} parent=1 // pred_region
      %106 = vsyncadd [#allocation6], 0
      %s108 = sshll.u32 %s5, 4
      %s109 = int_to_ptr.hbm [resolvable:$true] %s108
      %s110 = sshll.u32 [#allocation7], 4
      %s111 = int_to_ptr.vmem [resolvable:$true] %s110
      %113 = dma.hbm_to_vmem [thread:$0]  %s109, 32, %s111, [#allocation6]
    $region13: #{ecg_autoencoder_forward.1} parent=1 // pred_fallthru
      _
    // Predicated region
    $region14: #{ecg_autoencoder_forward.1} parent=1 // pred_check
      _
    $region15: #{ecg_autoencoder_forward.1} parent=1 // pred_check_branch
      %115 = sbr.rel (0) target = $region17
    $region16: #{ecg_autoencoder_forward.1} parent=1 // pred_region
      _
    $region17: #{ecg_autoencoder_forward.1} parent=1 // pred_fallthru
      _
    // Predicated region
    $region18: #{ecg_autoencoder_forward.1} parent=1 // pred_check
      _
    $region19: #{ecg_autoencoder_forward.1} parent=1 // pred_check_branch
      %117 = sbr.rel (0) target = $region21
    $region20: #{ecg_autoencoder_forward.1} parent=1 // pred_region
      %119 = vsyncadd [#allocation9], 0
      %s121 = sshll.u32 %s9, 4
      %s122 = int_to_ptr.hbm [resolvable:$true] %s121
      %s123 = sshll.u32 [#allocation8], 4
      %s124 = int_to_ptr.vmem [resolvable:$true] %s123
      %126 = dma.hbm_to_vmem [thread:$0]  %s122, 32, %s124, [#allocation9]
    $region21: #{ecg_autoencoder_forward.1} parent=1 // pred_fallthru
      _
    // Predicated region
    $region22: #{ecg_autoencoder_forward.1} parent=1 // pred_check
      _
    $region23: #{ecg_autoencoder_forward.1} parent=1 // pred_check_branch
      %128 = sbr.rel (0) target = $region25
    $region24: #{ecg_autoencoder_forward.1} parent=1 // pred_region
      %130 = vsyncadd [#allocation9], 0
      %s131 = sshll.u32 %s11, 4
      %s132 = int_to_ptr.hbm [resolvable:$true] %s131
      %s133 = sshll.u32 [#allocation10], 4
      %s134 = int_to_ptr.vmem [resolvable:$true] %s133
      %139 = dma.hbm_to_vmem [thread:$0]  %s132, 2048, %s134, [#allocation9], 64, 64, 4
    $region25: #{ecg_autoencoder_forward.1} parent=1 // pred_fallthru
      _
    // Predicated region
    $region26: #{ecg_autoencoder_forward.1} parent=1 // pred_check
      _
    $region27: #{ecg_autoencoder_forward.1} parent=1 // pred_check_branch
      %141 = sbr.rel (0) target = $region29
    $region28: #{ecg_autoencoder_forward.1} parent=1 // pred_region
      %143 = vsyncadd [#allocation12], 0
      %s145 = sshll.u32 %s13, 4
      %s146 = int_to_ptr.hbm [resolvable:$true] %s145
      %s147 = sshll.u32 [#allocation11], 4
      %s148 = int_to_ptr.vmem [resolvable:$true] %s147
      %150 = dma.hbm_to_vmem [thread:$0]  %s146, 16, %s148, [#allocation12]
    $region29: #{ecg_autoencoder_forward.1} parent=1 // pred_fallthru
      _
    // Predicated region
    $region30: #{ecg_autoencoder_forward.1} parent=1 // pred_check
      _
    $region31: #{ecg_autoencoder_forward.1} parent=1 // pred_check_branch
      %152 = sbr.rel (0) target = $region33
    $region32: #{ecg_autoencoder_forward.1} parent=1 // pred_region
      %154 = vsyncadd [#allocation12], 0
      %s156 = sshll.u32 %s15, 4
      %s157 = int_to_ptr.hbm [resolvable:$true] %s156
      %s158 = sshll.u32 [#allocation13], 4
      %s159 = int_to_ptr.vmem [resolvable:$true] %s158
      %161 = dma.hbm_to_vmem [thread:$0]  %s157, 16, %s159, [#allocation12]
    $region33: #{ecg_autoencoder_forward.1} parent=1 // pred_fallthru
      _
    // Predicated region
    $region34: #{ecg_autoencoder_forward.1} parent=1 // pred_check
      _
    $region35: #{ecg_autoencoder_forward.1} parent=1 // pred_check_branch
      %163 = sbr.rel (0) target = $region37
    $region36: #{ecg_autoencoder_forward.1} parent=1 // pred_region
      %165 = vsyncadd [#allocation15], 0
      %s167 = sshll.u32 %s17, 4
      %s168 = int_to_ptr.hbm [resolvable:$true] %s167
      %s169 = sshll.u32 [#allocation14], 4
      %s170 = int_to_ptr.vmem [resolvable:$true] %s169
      %172 = dma.hbm_to_vmem [thread:$0]  %s168, 16, %s170, [#allocation15]
    $region37: #{ecg_autoencoder_forward.1} parent=1 // pred_fallthru
      _
    // Predicated region
    $region38: #{ecg_autoencoder_forward.1} parent=1 // pred_check
      _
    $region39: #{ecg_autoencoder_forward.1} parent=1 // pred_check_branch
      %174 = sbr.rel (0) target = $region41
    $region40: #{ecg_autoencoder_forward.1} parent=1 // pred_region
      %176 = vsyncadd [#allocation15], 0
      %s177 = sshll.u32 %s19, 4
      %s178 = int_to_ptr.hbm [resolvable:$true] %s177
      %s179 = sshll.u32 [#allocation16], 4
      %s180 = int_to_ptr.vmem [resolvable:$true] %s179
      %185 = dma.hbm_to_vmem [thread:$0]  %s178, 1024, %s180, [#allocation15], 64, 64, 4
    $region41: #{ecg_autoencoder_forward.1} parent=1 // pred_fallthru
      _
    // Predicated region
    $region42: #{ecg_autoencoder_forward.1} parent=1 // pred_check
      _
    $region43: #{ecg_autoencoder_forward.1} parent=1 // pred_check_branch
      %187 = sbr.rel (0) target = $region45
    $region44: #{ecg_autoencoder_forward.1} parent=1 // pred_region
      %189 = vsyncadd [#allocation18], 0
      %s191 = sshll.u32 %s21, 4
      %s192 = int_to_ptr.hbm [resolvable:$true] %s191
      %s193 = sshll.u32 [#allocation17], 4
      %s194 = int_to_ptr.vmem [resolvable:$true] %s193
      %196 = dma.hbm_to_vmem [thread:$0]  %s192, 16, %s194, [#allocation18]
    $region45: #{ecg_autoencoder_forward.1} parent=1 // pred_fallthru
      _
    // Predicated region
    $region46: #{ecg_autoencoder_forward.1} parent=1 // pred_check
      _
    $region47: #{ecg_autoencoder_forward.1} parent=1 // pred_check_branch
      %198 = sbr.rel (0) target = $region49
    $region48: #{ecg_autoencoder_forward.1} parent=1 // pred_region
      %200 = vsyncadd [#allocation18], 0
      %s202 = sshll.u32 %s23, 4
      %s203 = int_to_ptr.hbm [resolvable:$true] %s202
      %s204 = sshll.u32 [#allocation19], 4
      %s205 = int_to_ptr.vmem [resolvable:$true] %s204
      %207 = dma.hbm_to_vmem [thread:$0]  %s203, 16, %s205, [#allocation18]
    $region49: #{ecg_autoencoder_forward.1} parent=1 // pred_fallthru
      _
    // Predicated region
    $region50: #{ecg_autoencoder_forward.1} parent=1 // pred_check
      _
    $region51: #{ecg_autoencoder_forward.1} parent=1 // pred_check_branch
      %209 = sbr.rel (0) target = $region53
    $region52: #{ecg_autoencoder_forward.1} parent=1 // pred_region
      %211 = vsyncadd [#allocation21], 0
      %s213 = sshll.u32 %s25, 4
      %s214 = int_to_ptr.hbm [resolvable:$true] %s213
      %s215 = sshll.u32 [#allocation20], 4
      %s216 = int_to_ptr.vmem [resolvable:$true] %s215
      %218 = dma.hbm_to_vmem [thread:$0]  %s214, 16, %s216, [#allocation21]
    $region53: #{ecg_autoencoder_forward.1} parent=1 // pred_fallthru
      _
    // Predicated region
    $region54: #{ecg_autoencoder_forward.1} parent=1 // pred_check
      _
    $region55: #{ecg_autoencoder_forward.1} parent=1 // pred_check_branch
      %220 = sbr.rel (0) target = $region57
    $region56: #{ecg_autoencoder_forward.1} parent=1 // pred_region
      %222 = vsyncadd [#allocation21], 0
      %s223 = sshll.u32 %s27, 4
      %s224 = int_to_ptr.hbm [resolvable:$true] %s223
      %s225 = sshll.u32 [#allocation22], 4
      %s226 = int_to_ptr.vmem [resolvable:$true] %s225
      %231 = dma.hbm_to_vmem [thread:$0]  %s224, 1024, %s226, [#allocation21], 64, 64, 4
    $region57: #{ecg_autoencoder_forward.1} parent=1 // pred_fallthru
      _
    // Predicated region
    $region58: #{ecg_autoencoder_forward.1} parent=1 // pred_check
      _
    $region59: #{ecg_autoencoder_forward.1} parent=1 // pred_check_branch
      %233 = sbr.rel (0) target = $region61
    $region60: #{ecg_autoencoder_forward.1} parent=1 // pred_region
      _
    $region61: #{ecg_autoencoder_forward.1} parent=1 // pred_fallthru
      _
    // Predicated region
    $region62: #{ecg_autoencoder_forward.1} parent=1 // pred_check
      _
    $region63: #{ecg_autoencoder_forward.1} parent=1 // pred_check_branch
      %235 = sbr.rel (0) target = $region65
    $region64: #{ecg_autoencoder_forward.1} parent=1 // pred_region
      %237 = vsyncadd [#allocation24], 0
      %s238 = sshll.u32 %s31, 4
      %s239 = int_to_ptr.hbm [resolvable:$true] %s238
      %s240 = sshll.u32 [#allocation23], 4
      %s241 = int_to_ptr.vmem [resolvable:$true] %s240
      %246 = dma.hbm_to_vmem [thread:$0]  %s239, 1024, %s241, [#allocation24], 64, 64, 4
    $region65: #{ecg_autoencoder_forward.1} parent=1 // pred_fallthru
      _
    // Predicated region
    $region66: #{ecg_autoencoder_forward.1} parent=1 // pred_check
      _
    $region67: #{ecg_autoencoder_forward.1} parent=1 // pred_check_branch
      %248 = sbr.rel (0) target = $region69
    $region68: #{ecg_autoencoder_forward.1} parent=1 // pred_region
      _
    $region69: #{ecg_autoencoder_forward.1} parent=1 // pred_fallthru
      _
    // Predicated region
    $region70: #{ecg_autoencoder_forward.1} parent=1 // pred_check
      _
    $region71: #{ecg_autoencoder_forward.1} parent=1 // pred_check_branch
      %250 = sbr.rel (0) target = $region73
    $region72: #{ecg_autoencoder_forward.1} parent=1 // pred_region
      _
    $region73: #{ecg_autoencoder_forward.1} parent=1 // pred_fallthru
      _
    // Predicated region
    $region74: #{ecg_autoencoder_forward.1} parent=1 // pred_check
      _
    $region75: #{ecg_autoencoder_forward.1} parent=1 // pred_check_branch
      %252 = sbr.rel (0) target = $region77
    $region76: #{ecg_autoencoder_forward.1} parent=1 // pred_region
      _
    $region77: #{ecg_autoencoder_forward.1} parent=1 // pred_fallthru
      _
    // Predicated region
    $region78: #{ecg_autoencoder_forward.1} parent=1 // pred_check
      _
    $region79: #{ecg_autoencoder_forward.1} parent=1 // pred_check_branch
      %254 = sbr.rel (0) target = $region81
    $region80: #{ecg_autoencoder_forward.1} parent=1 // pred_region
      %256 = vsyncadd [#allocation24], 0
      %s257 = sshll.u32 %s39, 4
      %s258 = int_to_ptr.hbm [resolvable:$true] %s257
      %s259 = sshll.u32 [#allocation25], 4
      %s260 = int_to_ptr.vmem [resolvable:$true] %s259
      %265 = dma.hbm_to_vmem [thread:$0]  %s258, 1024, %s260, [#allocation24], 64, 64, 4
    $region81: #{ecg_autoencoder_forward.1} parent=1 // pred_fallthru
      _
    // Predicated region
    $region82: #{ecg_autoencoder_forward.1} parent=1 // pred_check
      _
    $region83: #{ecg_autoencoder_forward.1} parent=1 // pred_check_branch
      %267 = sbr.rel (0) target = $region85
    $region84: #{ecg_autoencoder_forward.1} parent=1 // pred_region
      _
    $region85: #{ecg_autoencoder_forward.1} parent=1 // pred_fallthru
      _
    // Predicated region
    $region86: #{ecg_autoencoder_forward.1} parent=1 // pred_check
      _
    $region87: #{ecg_autoencoder_forward.1} parent=1 // pred_check_branch
      %269 = sbr.rel (0) target = $region89
    $region88: #{ecg_autoencoder_forward.1} parent=1 // pred_region
      _
    $region89: #{ecg_autoencoder_forward.1} parent=1 // pred_fallthru
      _
    // Predicated region
    $region90: #{ecg_autoencoder_forward.1} parent=1 // pred_check
      _
    $region91: #{ecg_autoencoder_forward.1} parent=1 // pred_check_branch
      %271 = sbr.rel (0) target = $region93
    $region92: #{ecg_autoencoder_forward.1} parent=1 // pred_region
      _
    $region93: #{ecg_autoencoder_forward.1} parent=1 // pred_fallthru
      _
    // Predicated region
    $region94: #{ecg_autoencoder_forward.1} parent=1 // pred_check
      _
    $region95: #{ecg_autoencoder_forward.1} parent=1 // pred_check_branch
      %273 = sbr.rel (0) target = $region97
    $region96: #{ecg_autoencoder_forward.1} parent=1 // pred_region
      %275 = vsyncadd [#allocation27], 0
      %s276 = sshll.u32 %s47, 4
      %s277 = int_to_ptr.hbm [resolvable:$true] %s276
      %s278 = sshll.u32 [#allocation26], 4
      %s279 = int_to_ptr.vmem [resolvable:$true] %s278
      %284 = dma.hbm_to_vmem [thread:$0]  %s277, 2048, %s279, [#allocation27], 128, 128, 8
    $region97: #{ecg_autoencoder_forward.1} parent=1 // pred_fallthru
      _
    // Predicated region
    $region98: #{ecg_autoencoder_forward.1} parent=1 // pred_check
      _
    $region99: #{ecg_autoencoder_forward.1} parent=1 // pred_check_branch
      %286 = sbr.rel (0) target = $region101
    $region100: #{ecg_autoencoder_forward.1} parent=1 // pred_region
      _
    $region101: #{ecg_autoencoder_forward.1} parent=1 // pred_fallthru
      _
    // Predicated region
    $region102: #{ecg_autoencoder_forward.1} parent=1 // pred_check
      _
    $region103: #{ecg_autoencoder_forward.1} parent=1 // pred_check_branch
      %288 = sbr.rel (0) target = $region105
    $region104: #{ecg_autoencoder_forward.1} parent=1 // pred_region
      _
    $region105: #{ecg_autoencoder_forward.1} parent=1 // pred_fallthru
      _
    // Predicated region
    $region106: #{ecg_autoencoder_forward.1} parent=1 // pred_check
      _
    $region107: #{ecg_autoencoder_forward.1} parent=1 // pred_check_branch
      %290 = sbr.rel (0) target = $region109
    $region108: #{ecg_autoencoder_forward.1} parent=1 // pred_region
      _
    $region109: #{ecg_autoencoder_forward.1} parent=1 // pred_fallthru
      _
    // Predicated region
    $region110: #{ecg_autoencoder_forward.1} parent=1 // pred_check
      _
    $region111: #{ecg_autoencoder_forward.1} parent=1 // pred_check_branch
      %292 = sbr.rel (0) target = $region113
    $region112: #{ecg_autoencoder_forward.1} parent=1 // pred_region
      %294 = vsyncadd [#allocation27], 0
      %s295 = sshll.u32 %s55, 4
      %s296 = int_to_ptr.hbm [resolvable:$true] %s295
      %s297 = sshll.u32 [#allocation28], 4
      %s298 = int_to_ptr.vmem [resolvable:$true] %s297
      %303 = dma.hbm_to_vmem [thread:$0]  %s296, 8192, %s298, [#allocation27], 256, 256, 16
    $region113: #{ecg_autoencoder_forward.1} parent=1 // pred_fallthru
      _
    // Predicated region
    $region114: #{ecg_autoencoder_forward.1} parent=1 // pred_check
      _
    $region115: #{ecg_autoencoder_forward.1} parent=1 // pred_check_branch
      %305 = sbr.rel (0) target = $region117
    $region116: #{ecg_autoencoder_forward.1} parent=1 // pred_region
      _
    $region117: #{ecg_autoencoder_forward.1} parent=1 // pred_fallthru
      _
    // Predicated region
    $region118: #{ecg_autoencoder_forward.1} parent=1 // pred_check
      _
    $region119: #{ecg_autoencoder_forward.1} parent=1 // pred_check_branch
      %307 = sbr.rel (0) target = $region121
    $region120: #{ecg_autoencoder_forward.1} parent=1 // pred_region
      %309 = dma.done [#allocation3], 8192
    $region121: #{ecg_autoencoder_forward.1} parent=1 // pred_fallthru
      _
    // Predicated region
    $region122: #{ecg_autoencoder_forward.1} parent=1 // pred_check
      _
    $region123: #{ecg_autoencoder_forward.1} parent=1 // pred_check_branch
      %311 = sbr.rel (0) target = $region125
    $region124: #{ecg_autoencoder_forward.1} parent=1 // pred_region
      %313 = dma.done [#allocation6], 8192
    $region125: #{ecg_autoencoder_forward.1} parent=1 // pred_fallthru
      _
    // Predicated region
    $region126: #{ecg_autoencoder_forward.1} parent=1 // pred_check
      _
    $region127: #{ecg_autoencoder_forward.1} parent=1 // pred_check_branch
      %315 = sbr.rel (0) target = $region129
    $region128: #{ecg_autoencoder_forward.1} parent=1 // pred_region
      %317 = dma.done [#allocation6], 32
    $region129: #{ecg_autoencoder_forward.1} parent=1 // pred_fallthru
      _
    // Predicated region
    $region130: #{ecg_autoencoder_forward.1} parent=1 // pred_check
      _
    $region131: #{ecg_autoencoder_forward.1} parent=1 // pred_check_branch
      %319 = sbr.rel (0) target = $region133
    $region132: #{ecg_autoencoder_forward.1} parent=1 // pred_region
      %321 = dma.done [#allocation9], 32
    $region133: #{ecg_autoencoder_forward.1} parent=1 // pred_fallthru
      _
    // Predicated region
    $region134: #{ecg_autoencoder_forward.1} parent=1 // pred_check
      _
    $region135: #{ecg_autoencoder_forward.1} parent=1 // pred_check_branch
      %323 = sbr.rel (0) target = $region137
    $region136: #{ecg_autoencoder_forward.1} parent=1 // pred_region
      %325 = dma.done [#allocation9], 2048
    $region137: #{ecg_autoencoder_forward.1} parent=1 // pred_fallthru
      _
    // Predicated region
    $region138: #{ecg_autoencoder_forward.1} parent=1 // pred_check
      _
    $region139: #{ecg_autoencoder_forward.1} parent=1 // pred_check_branch
      %327 = sbr.rel (0) target = $region141
    $region140: #{ecg_autoencoder_forward.1} parent=1 // pred_region
      %329 = dma.done [#allocation12], 16
    $region141: #{ecg_autoencoder_forward.1} parent=1 // pred_fallthru
      _
    // Predicated region
    $region142: #{ecg_autoencoder_forward.1} parent=1 // pred_check
      _
    $region143: #{ecg_autoencoder_forward.1} parent=1 // pred_check_branch
      %331 = sbr.rel (0) target = $region145
    $region144: #{ecg_autoencoder_forward.1} parent=1 // pred_region
      %333 = dma.done [#allocation12], 16
    $region145: #{ecg_autoencoder_forward.1} parent=1 // pred_fallthru
      _
    // Predicated region
    $region146: #{ecg_autoencoder_forward.1} parent=1 // pred_check
      _
    $region147: #{ecg_autoencoder_forward.1} parent=1 // pred_check_branch
      %335 = sbr.rel (0) target = $region149
    $region148: #{ecg_autoencoder_forward.1} parent=1 // pred_region
      %337 = dma.done [#allocation15], 16
    $region149: #{ecg_autoencoder_forward.1} parent=1 // pred_fallthru
      _
    // Predicated region
    $region150: #{ecg_autoencoder_forward.1} parent=1 // pred_check
      _
    $region151: #{ecg_autoencoder_forward.1} parent=1 // pred_check_branch
      %339 = sbr.rel (0) target = $region153
    $region152: #{ecg_autoencoder_forward.1} parent=1 // pred_region
      %341 = dma.done [#allocation15], 1024
    $region153: #{ecg_autoencoder_forward.1} parent=1 // pred_fallthru
      _
    // Predicated region
    $region154: #{ecg_autoencoder_forward.1} parent=1 // pred_check
      _
    $region155: #{ecg_autoencoder_forward.1} parent=1 // pred_check_branch
      %343 = sbr.rel (0) target = $region157
    $region156: #{ecg_autoencoder_forward.1} parent=1 // pred_region
      %345 = dma.done [#allocation18], 16
    $region157: #{ecg_autoencoder_forward.1} parent=1 // pred_fallthru
      _
    // Predicated region
    $region158: #{ecg_autoencoder_forward.1} parent=1 // pred_check
      _
    $region159: #{ecg_autoencoder_forward.1} parent=1 // pred_check_branch
      %347 = sbr.rel (0) target = $region161
    $region160: #{ecg_autoencoder_forward.1} parent=1 // pred_region
      %349 = dma.done [#allocation18], 16
    $region161: #{ecg_autoencoder_forward.1} parent=1 // pred_fallthru
      _
    // Predicated region
    $region162: #{ecg_autoencoder_forward.1} parent=1 // pred_check
      _
    $region163: #{ecg_autoencoder_forward.1} parent=1 // pred_check_branch
      %351 = sbr.rel (0) target = $region165
    $region164: #{ecg_autoencoder_forward.1} parent=1 // pred_region
      %353 = dma.done [#allocation21], 16
    $region165: #{ecg_autoencoder_forward.1} parent=1 // pred_fallthru
      _
    // Predicated region
    $region166: #{ecg_autoencoder_forward.1} parent=1 // pred_check
      _
    $region167: #{ecg_autoencoder_forward.1} parent=1 // pred_check_branch
      %355 = sbr.rel (0) target = $region169
    $region168: #{ecg_autoencoder_forward.1} parent=1 // pred_region
      %357 = dma.done [#allocation21], 1024
    $region169: #{ecg_autoencoder_forward.1} parent=1 // pred_fallthru
      _
    // Predicated region
    $region170: #{ecg_autoencoder_forward.1} parent=1 // pred_check
      _
    $region171: #{ecg_autoencoder_forward.1} parent=1 // pred_check_branch
      %359 = sbr.rel (0) target = $region173
    $region172: #{ecg_autoencoder_forward.1} parent=1 // pred_region
      %361 = dma.done [#allocation24], 1024
    $region173: #{ecg_autoencoder_forward.1} parent=1 // pred_fallthru
      _
    // Predicated region
    $region174: #{ecg_autoencoder_forward.1} parent=1 // pred_check
      _
    $region175: #{ecg_autoencoder_forward.1} parent=1 // pred_check_branch
      %363 = sbr.rel (0) target = $region177
    $region176: #{ecg_autoencoder_forward.1} parent=1 // pred_region
      %365 = dma.done [#allocation24], 1024
    $region177: #{ecg_autoencoder_forward.1} parent=1 // pred_fallthru
      _
    // Predicated region
    $region178: #{ecg_autoencoder_forward.1} parent=1 // pred_check
      _
    $region179: #{ecg_autoencoder_forward.1} parent=1 // pred_check_branch
      %367 = sbr.rel (0) target = $region181
    $region180: #{ecg_autoencoder_forward.1} parent=1 // pred_region
      %369 = dma.done [#allocation27], 2048
    $region181: #{ecg_autoencoder_forward.1} parent=1 // pred_fallthru
      _
    // Predicated region
    $region182: #{ecg_autoencoder_forward.1} parent=1 // pred_check
      _
    $region183: #{ecg_autoencoder_forward.1} parent=1 // pred_check_branch
      %371 = sbr.rel (0) target = $region185
    $region184: #{ecg_autoencoder_forward.1} parent=1 // pred_region
      %373 = dma.done [#allocation27], 8192
    $region185: #{ecg_autoencoder_forward.1} parent=1 // pred_fallthru
      _
    %v374 = vld [vmem:[#allocation2] sm:$0xff]
    %v375 = vld [vmem:[#allocation2 + $0x8] sm:$0xff]
    %v376 = vld [vmem:[#allocation2 + $0x10] sm:$0xff]
    %v377 = vld [vmem:[#allocation2 + $0x18] sm:$0xff]
    %v378 = vld [vmem:[#allocation2 + $0x20] sm:$0xff]
    %v379 = vld [vmem:[#allocation2 + $0x28] sm:$0xff]
    %v380 = vld [vmem:[#allocation2 + $0x30] sm:$0xff]
    %v381 = vld [vmem:[#allocation2 + $0x38] sm:$0xff]
    %v382 = vld [vmem:[#allocation2 + $0x40] sm:$0xff]
    %v383 = vld [vmem:[#allocation2 + $0x48] sm:$0xff]
    %v384 = vld [vmem:[#allocation2 + $0x50] sm:$0xff]
    %v385 = vld [vmem:[#allocation2 + $0x58] sm:$0xff]
    %v386 = vld [vmem:[#allocation2 + $0x60] sm:$0xff]
    %v387 = vld [vmem:[#allocation2 + $0x68] sm:$0xff]
    %v388 = vld [vmem:[#allocation2 + $0x70] sm:$0xff]
    %v389 = vld [vmem:[#allocation2 + $0x78] sm:$0xff]
    %v390 = vld [vmem:[#allocation2 + $0x80] sm:$0xff]
    %v391 = vld [vmem:[#allocation2 + $0x88] sm:$0xff]
    %v392 = vld [vmem:[#allocation2 + $0x90] sm:$0xff]
    %v393 = vld [vmem:[#allocation2 + $0x98] sm:$0xff]
    %v394 = vld [vmem:[#allocation2 + $0xa0] sm:$0xff]
    %v395 = vld [vmem:[#allocation2 + $0xa8] sm:$0xff]
    %v396 = vld [vmem:[#allocation2 + $0xb0] sm:$0xff]
    %v397 = vld [vmem:[#allocation2 + $0xb8] sm:$0xff]
    %v398 = vld [vmem:[#allocation2 + $0xc0] sm:$0xff]
    %v399 = vld [vmem:[#allocation2 + $0xc8] sm:$0xff]
    %v400 = vld [vmem:[#allocation2 + $0xd0] sm:$0xff]
    %v401 = vld [vmem:[#allocation2 + $0xd8] sm:$0xff]
    %v402 = vld [vmem:[#allocation2 + $0xe0] sm:$0xff]
    %v403 = vld [vmem:[#allocation2 + $0xe8] sm:$0xff]
    %v404 = vld [vmem:[#allocation2 + $0xf0] sm:$0xff]
    %v405 = vld [vmem:[#allocation2 + $0xf8] sm:$0xff]
    %v406 = vld [vmem:[#allocation2 + $0x100] sm:$0xff]
    %v407 = vld [vmem:[#allocation2 + $0x108] sm:$0xff]
    %v408 = vld [vmem:[#allocation2 + $0x110] sm:$0xff]
    %v409 = vld [vmem:[#allocation2 + $0x118] sm:$0xff]
    %v410 = vld [vmem:[#allocation2 + $0x120] sm:$0xff]
    %v411 = vld [vmem:[#allocation2 + $0x128] sm:$0xff]
    %v412 = vld [vmem:[#allocation2 + $0x130] sm:$0xff]
    %v413 = vld [vmem:[#allocation2 + $0x138] sm:$0xff]
    %v414 = vld [vmem:[#allocation2 + $0x140] sm:$0xff]
    %v415 = vld [vmem:[#allocation2 + $0x148] sm:$0xff]
    %v416 = vld [vmem:[#allocation2 + $0x150] sm:$0xff]
    %v417 = vld [vmem:[#allocation2 + $0x158] sm:$0xff]
    %v418 = vld [vmem:[#allocation2 + $0x160] sm:$0xff]
    %v419 = vld [vmem:[#allocation2 + $0x168] sm:$0xff]
    %v420 = vld [vmem:[#allocation2 + $0x170] sm:$0xff]
    %v421 = vld [vmem:[#allocation2 + $0x178] sm:$0xff]
    %v422 = vld [vmem:[#allocation2 + $0x180] sm:$0xff]
    %v423 = vld [vmem:[#allocation2 + $0x188] sm:$0xff]
    %v424 = vld [vmem:[#allocation2 + $0x190] sm:$0xff]
    %v425 = vld [vmem:[#allocation2 + $0x198] sm:$0xff]
    %v426 = vld [vmem:[#allocation2 + $0x1a0] sm:$0xff]
    %v427 = vld [vmem:[#allocation2 + $0x1a8] sm:$0xff]
    %v428 = vld [vmem:[#allocation2 + $0x1b0] sm:$0xff]
    %v429 = vld [vmem:[#allocation2 + $0x1b8] sm:$0xff]
    %v430 = vld [vmem:[#allocation2 + $0x1c0] sm:$0xff]
    %v431 = vld [vmem:[#allocation2 + $0x1c8] sm:$0xff]
    %v432 = vld [vmem:[#allocation2 + $0x1d0] sm:$0xff]
    %v433 = vld [vmem:[#allocation2 + $0x1d8] sm:$0xff]
    %v434 = vld [vmem:[#allocation2 + $0x1e0] sm:$0xff]
    %v435 = vld [vmem:[#allocation2 + $0x1e8] sm:$0xff]
    %v436 = vld [vmem:[#allocation2 + $0x1f0] sm:$0xff]
    %v437 = vld [vmem:[#allocation2 + $0x1f8] sm:$0xff]
    %v438 = vpack.c.bf16 %v378, %v374
    %v439 = vpack.c.bf16 %v379, %v375
    %v440 = vpack.c.bf16 %v380, %v376
    %v441 = vpack.c.bf16 %v381, %v377
    %v442 = vpack.c.bf16 %v386, %v382
    %v443 = vpack.c.bf16 %v387, %v383
    %v444 = vpack.c.bf16 %v388, %v384
    %v445 = vpack.c.bf16 %v389, %v385
    %v446 = vpack.c.bf16 %v394, %v390
    %v447 = vpack.c.bf16 %v395, %v391
    %v448 = vpack.c.bf16 %v396, %v392
    %v449 = vpack.c.bf16 %v397, %v393
    %v450 = vpack.c.bf16 %v402, %v398
    %v451 = vpack.c.bf16 %v403, %v399
    %v452 = vpack.c.bf16 %v404, %v400
    %v453 = vpack.c.bf16 %v405, %v401
    %v454 = vpack.c.bf16 %v410, %v406
    %v455 = vpack.c.bf16 %v411, %v407
    %v456 = vpack.c.bf16 %v412, %v408
    %v457 = vpack.c.bf16 %v413, %v409
    %v458 = vpack.c.bf16 %v418, %v414
    %v459 = vpack.c.bf16 %v419, %v415
    %v460 = vpack.c.bf16 %v420, %v416
    %v461 = vpack.c.bf16 %v421, %v417
    %v462 = vpack.c.bf16 %v426, %v422
    %v463 = vpack.c.bf16 %v427, %v423
    %v464 = vpack.c.bf16 %v428, %v424
    %v465 = vpack.c.bf16 %v429, %v425
    %v466 = vpack.c.bf16 %v434, %v430
    %v467 = vpack.c.bf16 %v435, %v431
    %v468 = vpack.c.bf16 %v436, %v432
    %v469 = vpack.c.bf16 %v437, %v433
    %v470 = vld [vmem:[#allocation5] sm:$0xff]
    %v471 = vld [vmem:[#allocation5 + $0x8] sm:$0xff]
    %v472 = vld [vmem:[#allocation5 + $0x10] sm:$0xff]
    %v473 = vld [vmem:[#allocation5 + $0x18] sm:$0xff]
    %v474 = vld [vmem:[#allocation5 + $0x20] sm:$0xff]
    %v475 = vld [vmem:[#allocation5 + $0x28] sm:$0xff]
    %v476 = vld [vmem:[#allocation5 + $0x30] sm:$0xff]
    %v477 = vld [vmem:[#allocation5 + $0x38] sm:$0xff]
    %v478 = vld [vmem:[#allocation5 + $0x40] sm:$0xff]
    %v479 = vld [vmem:[#allocation5 + $0x48] sm:$0xff]
    %v480 = vld [vmem:[#allocation5 + $0x50] sm:$0xff]
    %v481 = vld [vmem:[#allocation5 + $0x58] sm:$0xff]
    %v482 = vld [vmem:[#allocation5 + $0x60] sm:$0xff]
    %v483 = vld [vmem:[#allocation5 + $0x68] sm:$0xff]
    %v484 = vld [vmem:[#allocation5 + $0x70] sm:$0xff]
    %v485 = vld [vmem:[#allocation5 + $0x78] sm:$0xff]
    %v486 = vld [vmem:[#allocation5 + $0x80] sm:$0xff]
    %v487 = vld [vmem:[#allocation5 + $0x88] sm:$0xff]
    %v488 = vld [vmem:[#allocation5 + $0x90] sm:$0xff]
    %v489 = vld [vmem:[#allocation5 + $0x98] sm:$0xff]
    %v490 = vld [vmem:[#allocation5 + $0xa0] sm:$0xff]
    %v491 = vld [vmem:[#allocation5 + $0xa8] sm:$0xff]
    %v492 = vld [vmem:[#allocation5 + $0xb0] sm:$0xff]
    %v493 = vld [vmem:[#allocation5 + $0xb8] sm:$0xff]
    %v494 = vld [vmem:[#allocation5 + $0xc0] sm:$0xff]
    %v495 = vld [vmem:[#allocation5 + $0xc8] sm:$0xff]
    %v496 = vld [vmem:[#allocation5 + $0xd0] sm:$0xff]
    %v497 = vld [vmem:[#allocation5 + $0xd8] sm:$0xff]
    %v498 = vld [vmem:[#allocation5 + $0xe0] sm:$0xff]
    %v499 = vld [vmem:[#allocation5 + $0xe8] sm:$0xff]
    %v500 = vld [vmem:[#allocation5 + $0xf0] sm:$0xff]
    %v501 = vld [vmem:[#allocation5 + $0xf8] sm:$0xff]
    %v502 = vld [vmem:[#allocation5 + $0x100] sm:$0xff]
    %v503 = vld [vmem:[#allocation5 + $0x108] sm:$0xff]
    %v504 = vld [vmem:[#allocation5 + $0x110] sm:$0xff]
    %v505 = vld [vmem:[#allocation5 + $0x118] sm:$0xff]
    %v506 = vld [vmem:[#allocation5 + $0x120] sm:$0xff]
    %v507 = vld [vmem:[#allocation5 + $0x128] sm:$0xff]
    %v508 = vld [vmem:[#allocation5 + $0x130] sm:$0xff]
    %v509 = vld [vmem:[#allocation5 + $0x138] sm:$0xff]
    %v510 = vld [vmem:[#allocation5 + $0x140] sm:$0xff]
    %v511 = vld [vmem:[#allocation5 + $0x148] sm:$0xff]
    %v512 = vld [vmem:[#allocation5 + $0x150] sm:$0xff]
    %v513 = vld [vmem:[#allocation5 + $0x158] sm:$0xff]
    %v514 = vld [vmem:[#allocation5 + $0x160] sm:$0xff]
    %v515 = vld [vmem:[#allocation5 + $0x168] sm:$0xff]
    %v516 = vld [vmem:[#allocation5 + $0x170] sm:$0xff]
    %v517 = vld [vmem:[#allocation5 + $0x178] sm:$0xff]
    %v518 = vld [vmem:[#allocation5 + $0x180] sm:$0xff]
    %v519 = vld [vmem:[#allocation5 + $0x188] sm:$0xff]
    %v520 = vld [vmem:[#allocation5 + $0x190] sm:$0xff]
    %v521 = vld [vmem:[#allocation5 + $0x198] sm:$0xff]
    %v522 = vld [vmem:[#allocation5 + $0x1a0] sm:$0xff]
    %v523 = vld [vmem:[#allocation5 + $0x1a8] sm:$0xff]
    %v524 = vld [vmem:[#allocation5 + $0x1b0] sm:$0xff]
    %v525 = vld [vmem:[#allocation5 + $0x1b8] sm:$0xff]
    %v526 = vld [vmem:[#allocation5 + $0x1c0] sm:$0xff]
    %v527 = vld [vmem:[#allocation5 + $0x1c8] sm:$0xff]
    %v528 = vld [vmem:[#allocation5 + $0x1d0] sm:$0xff]
    %v529 = vld [vmem:[#allocation5 + $0x1d8] sm:$0xff]
    %v530 = vld [vmem:[#allocation5 + $0x1e0] sm:$0xff]
    %v531 = vld [vmem:[#allocation5 + $0x1e8] sm:$0xff]
    %v532 = vld [vmem:[#allocation5 + $0x1f0] sm:$0xff]
    %v533 = vld [vmem:[#allocation5 + $0x1f8] sm:$0xff]
    %v534 = vld [vmem:[#allocation7] sm:$0x3]
    %v536 = vperm.slane %v534, 0
    %v537 = vperm.slane %v534, 1
    %v604 = vunpack.c.l.b16 %v470
    %v605 = vunpack.c.h.b16 %v470
    %v606 = vunpack.c.l.b16 %v471
    %v607 = vunpack.c.h.b16 %v471
    %v608 = vunpack.c.l.b16 %v472
    %v609 = vunpack.c.h.b16 %v472
    %v610 = vunpack.c.l.b16 %v473
    %v611 = vunpack.c.h.b16 %v473
    %v612 = vunpack.c.l.b16 %v474
    %v613 = vunpack.c.h.b16 %v474
    %v614 = vunpack.c.l.b16 %v475
    %v615 = vunpack.c.h.b16 %v475
    %v616 = vunpack.c.l.b16 %v476
    %v617 = vunpack.c.h.b16 %v476
    %v618 = vunpack.c.l.b16 %v477
    %v619 = vunpack.c.h.b16 %v477
    %v620 = vunpack.c.l.b16 %v478
    %v621 = vunpack.c.h.b16 %v478
    %v622 = vunpack.c.l.b16 %v479
    %v623 = vunpack.c.h.b16 %v479
    %v624 = vunpack.c.l.b16 %v480
    %v625 = vunpack.c.h.b16 %v480
    %v626 = vunpack.c.l.b16 %v481
    %v627 = vunpack.c.h.b16 %v481
    %v628 = vunpack.c.l.b16 %v482
    %v629 = vunpack.c.h.b16 %v482
    %v630 = vunpack.c.l.b16 %v483
    %v631 = vunpack.c.h.b16 %v483
    %v632 = vunpack.c.l.b16 %v484
    %v633 = vunpack.c.h.b16 %v484
    %v634 = vunpack.c.l.b16 %v485
    %v635 = vunpack.c.h.b16 %v485
    %v636 = vunpack.c.l.b16 %v486
    %v637 = vunpack.c.h.b16 %v486
    %v638 = vunpack.c.l.b16 %v487
    %v639 = vunpack.c.h.b16 %v487
    %v640 = vunpack.c.l.b16 %v488
    %v641 = vunpack.c.h.b16 %v488
    %v642 = vunpack.c.l.b16 %v489
    %v643 = vunpack.c.h.b16 %v489
    %v644 = vunpack.c.l.b16 %v490
    %v645 = vunpack.c.h.b16 %v490
    %v646 = vunpack.c.l.b16 %v491
    %v647 = vunpack.c.h.b16 %v491
    %v648 = vunpack.c.l.b16 %v492
    %v649 = vunpack.c.h.b16 %v492
    %v650 = vunpack.c.l.b16 %v493
    %v651 = vunpack.c.h.b16 %v493
    %v652 = vunpack.c.l.b16 %v494
    %v653 = vunpack.c.h.b16 %v494
    %v654 = vunpack.c.l.b16 %v495
    %v655 = vunpack.c.h.b16 %v495
    %v656 = vunpack.c.l.b16 %v496
    %v657 = vunpack.c.h.b16 %v496
    %v658 = vunpack.c.l.b16 %v497
    %v659 = vunpack.c.h.b16 %v497
    %v660 = vunpack.c.l.b16 %v498
    %v661 = vunpack.c.h.b16 %v498
    %v662 = vunpack.c.l.b16 %v499
    %v663 = vunpack.c.h.b16 %v499
    %v664 = vunpack.c.l.b16 %v500
    %v665 = vunpack.c.h.b16 %v500
    %v666 = vunpack.c.l.b16 %v501
    %v667 = vunpack.c.h.b16 %v501
    %v668 = vunpack.c.l.b16 %v502
    %v669 = vunpack.c.h.b16 %v502
    %v670 = vunpack.c.l.b16 %v503
    %v671 = vunpack.c.h.b16 %v503
    %v672 = vunpack.c.l.b16 %v504
    %v673 = vunpack.c.h.b16 %v504
    %v674 = vunpack.c.l.b16 %v505
    %v675 = vunpack.c.h.b16 %v505
    %v676 = vunpack.c.l.b16 %v506
    %v677 = vunpack.c.h.b16 %v506
    %v678 = vunpack.c.l.b16 %v507
    %v679 = vunpack.c.h.b16 %v507
    %v680 = vunpack.c.l.b16 %v508
    %v681 = vunpack.c.h.b16 %v508
    %v682 = vunpack.c.l.b16 %v509
    %v683 = vunpack.c.h.b16 %v509
    %v684 = vunpack.c.l.b16 %v510
    %v685 = vunpack.c.h.b16 %v510
    %v686 = vunpack.c.l.b16 %v511
    %v687 = vunpack.c.h.b16 %v511
    %v688 = vunpack.c.l.b16 %v512
    %v689 = vunpack.c.h.b16 %v512
    %v690 = vunpack.c.l.b16 %v513
    %v691 = vunpack.c.h.b16 %v513
    %v692 = vunpack.c.l.b16 %v514
    %v693 = vunpack.c.h.b16 %v514
    %v694 = vunpack.c.l.b16 %v515
    %v695 = vunpack.c.h.b16 %v515
    %v696 = vunpack.c.l.b16 %v516
    %v697 = vunpack.c.h.b16 %v516
    %v698 = vunpack.c.l.b16 %v517
    %v699 = vunpack.c.h.b16 %v517
    %v700 = vunpack.c.l.b16 %v518
    %v701 = vunpack.c.h.b16 %v518
    %v702 = vunpack.c.l.b16 %v519
    %v703 = vunpack.c.h.b16 %v519
    %v704 = vunpack.c.l.b16 %v520
    %v705 = vunpack.c.h.b16 %v520
    %v706 = vunpack.c.l.b16 %v521
    %v707 = vunpack.c.h.b16 %v521
    %v708 = vunpack.c.l.b16 %v522
    %v709 = vunpack.c.h.b16 %v522
    %v710 = vunpack.c.l.b16 %v523
    %v711 = vunpack.c.h.b16 %v523
    %v712 = vunpack.c.l.b16 %v524
    %v713 = vunpack.c.h.b16 %v524
    %v714 = vunpack.c.l.b16 %v525
    %v715 = vunpack.c.h.b16 %v525
    %v716 = vunpack.c.l.b16 %v526
    %v717 = vunpack.c.h.b16 %v526
    %v718 = vunpack.c.l.b16 %v527
    %v719 = vunpack.c.h.b16 %v527
    %v720 = vunpack.c.l.b16 %v528
    %v721 = vunpack.c.h.b16 %v528
    %v722 = vunpack.c.l.b16 %v529
    %v723 = vunpack.c.h.b16 %v529
    %v724 = vunpack.c.l.b16 %v530
    %v725 = vunpack.c.h.b16 %v530
    %v726 = vunpack.c.l.b16 %v531
    %v727 = vunpack.c.h.b16 %v531
    %v728 = vunpack.c.l.b16 %v532
    %v729 = vunpack.c.h.b16 %v532
    %v730 = vunpack.c.l.b16 %v533
    %v731 = vunpack.c.h.b16 %v533
    %v732 = vpack.c.b16 %v606, %v604
    %v733 = vpack.c.b16 %v607, %v605
    %v734 = vpack.c.b16 %v610, %v608
    %v735 = vpack.c.b16 %v611, %v609
    %v736 = vpack.c.b16 %v614, %v612
    %v737 = vpack.c.b16 %v615, %v613
    %v738 = vpack.c.b16 %v618, %v616
    %v739 = vpack.c.b16 %v619, %v617
    %v740 = vpack.c.b16 %v622, %v620
    %v741 = vpack.c.b16 %v623, %v621
    %v742 = vpack.c.b16 %v626, %v624
    %v743 = vpack.c.b16 %v627, %v625
    %v744 = vpack.c.b16 %v630, %v628
    %v745 = vpack.c.b16 %v631, %v629
    %v746 = vpack.c.b16 %v634, %v632
    %v747 = vpack.c.b16 %v635, %v633
    %v748 = vpack.c.b16 %v638, %v636
    %v749 = vpack.c.b16 %v639, %v637
    %v750 = vpack.c.b16 %v642, %v640
    %v751 = vpack.c.b16 %v643, %v641
    %v752 = vpack.c.b16 %v646, %v644
    %v753 = vpack.c.b16 %v647, %v645
    %v754 = vpack.c.b16 %v650, %v648
    %v755 = vpack.c.b16 %v651, %v649
    %v756 = vpack.c.b16 %v654, %v652
    %v757 = vpack.c.b16 %v655, %v653
    %v758 = vpack.c.b16 %v658, %v656
    %v759 = vpack.c.b16 %v659, %v657
    %v760 = vpack.c.b16 %v662, %v660
    %v761 = vpack.c.b16 %v663, %v661
    %v762 = vpack.c.b16 %v666, %v664
    %v763 = vpack.c.b16 %v667, %v665
    %v764 = vpack.c.b16 %v670, %v668
    %v765 = vpack.c.b16 %v671, %v669
    %v766 = vpack.c.b16 %v674, %v672
    %v767 = vpack.c.b16 %v675, %v673
    %v768 = vpack.c.b16 %v678, %v676
    %v769 = vpack.c.b16 %v679, %v677
    %v770 = vpack.c.b16 %v682, %v680
    %v771 = vpack.c.b16 %v683, %v681
    %v772 = vpack.c.b16 %v686, %v684
    %v773 = vpack.c.b16 %v687, %v685
    %v774 = vpack.c.b16 %v690, %v688
    %v775 = vpack.c.b16 %v691, %v689
    %v776 = vpack.c.b16 %v694, %v692
    %v777 = vpack.c.b16 %v695, %v693
    %v778 = vpack.c.b16 %v698, %v696
    %v779 = vpack.c.b16 %v699, %v697
    %v780 = vpack.c.b16 %v702, %v700
    %v781 = vpack.c.b16 %v703, %v701
    %v782 = vpack.c.b16 %v706, %v704
    %v783 = vpack.c.b16 %v707, %v705
    %v784 = vpack.c.b16 %v710, %v708
    %v785 = vpack.c.b16 %v711, %v709
    %v786 = vpack.c.b16 %v714, %v712
    %v787 = vpack.c.b16 %v715, %v713
    %v788 = vpack.c.b16 %v718, %v716
    %v789 = vpack.c.b16 %v719, %v717
    %v790 = vpack.c.b16 %v722, %v720
    %v791 = vpack.c.b16 %v723, %v721
    %v792 = vpack.c.b16 %v726, %v724
    %v793 = vpack.c.b16 %v727, %v725
    %v794 = vpack.c.b16 %v730, %v728
    %v795 = vpack.c.b16 %v731, %v729
    %860 = vmatpush.bf16.msra.mxu0 %v746
    %861 = vmatpush.bf16.msra.mxu0 %v744
    %862 = vmatpush.bf16.msra.mxu0 %v742
    %863 = vmatpush.bf16.msra.mxu0 %v740
    %864 = vmatpush.bf16.msra.mxu0 %v738
    %865 = vmatpush.bf16.msra.mxu0 %v736
    %866 = vmatpush.bf16.msra.mxu0 %v734
    %867 = vmatpush.bf16.msra.mxu0 %v732
    %868 = vmatmul.bf16.gmra.mxu0 %v438
    %v869 = vpop.f32.mrf.mxu0
    %v870 = vadd.f32 %v536, %v869
    %v871 = vpop.f32.mrf.mxu0
    %v872 = vadd.f32 %v536, %v871
    %873 = vmatmul.bf16.gmra.mxu0 %v442
    %v874 = vpop.f32.mrf.mxu0
    %v875 = vadd.f32 %v536, %v874
    %v876 = vpop.f32.mrf.mxu0
    %v877 = vadd.f32 %v536, %v876
    %878 = vmatmul.bf16.gmra.mxu0 %v446
    %v879 = vpop.f32.mrf.mxu0
    %v880 = vadd.f32 %v536, %v879
    %v881 = vpop.f32.mrf.mxu0
    %v882 = vadd.f32 %v536, %v881
    %883 = vmatmul.bf16.gmra.mxu0 %v450
    %v884 = vpop.f32.mrf.mxu0
    %v885 = vadd.f32 %v536, %v884
    %v886 = vpop.f32.mrf.mxu0
    %v887 = vadd.f32 %v536, %v886
    %888 = vmatmul.bf16.gmra.mxu0 %v454
    %v889 = vpop.f32.mrf.mxu0
    %v890 = vadd.f32 %v536, %v889
    %v891 = vpop.f32.mrf.mxu0
    %v892 = vadd.f32 %v536, %v891
    %893 = vmatmul.bf16.gmra.mxu0 %v458
    %v894 = vpop.f32.mrf.mxu0
    %v895 = vadd.f32 %v536, %v894
    %v896 = vpop.f32.mrf.mxu0
    %v897 = vadd.f32 %v536, %v896
    %898 = vmatmul.bf16.gmra.mxu0 %v462
    %v899 = vpop.f32.mrf.mxu0
    %v900 = vadd.f32 %v536, %v899
    %v901 = vpop.f32.mrf.mxu0
    %v902 = vadd.f32 %v536, %v901
    %903 = vmatmul.bf16.gmra.mxu0 %v466
    %v904 = vpop.f32.mrf.mxu0
    %v905 = vadd.f32 %v536, %v904
    %v906 = vpop.f32.mrf.mxu0
    %v907 = vadd.f32 %v536, %v906
    %908 = vdwg.mxu0
    %909 = vmatpush.bf16.msra.mxu0 %v762
    %910 = vmatpush.bf16.msra.mxu0 %v760
    %911 = vmatpush.bf16.msra.mxu0 %v758
    %912 = vmatpush.bf16.msra.mxu0 %v756
    %913 = vmatpush.bf16.msra.mxu0 %v754
    %914 = vmatpush.bf16.msra.mxu0 %v752
    %915 = vmatpush.bf16.msra.mxu0 %v750
    %916 = vmatpush.bf16.msra.mxu0 %v748
    %917 = vmatmul.bf16.gmra.mxu0 %v439
    %v918 = vpop.f32.mrf.mxu0
    %v919 = vadd.f32 %v870, %v918
    %v920 = vpop.f32.mrf.mxu0
    %v921 = vadd.f32 %v872, %v920
    %922 = vmatmul.bf16.gmra.mxu0 %v443
    %v923 = vpop.f32.mrf.mxu0
    %v924 = vadd.f32 %v875, %v923
    %v925 = vpop.f32.mrf.mxu0
    %v926 = vadd.f32 %v877, %v925
    %927 = vmatmul.bf16.gmra.mxu0 %v447
    %v928 = vpop.f32.mrf.mxu0
    %v929 = vadd.f32 %v880, %v928
    %v930 = vpop.f32.mrf.mxu0
    %v931 = vadd.f32 %v882, %v930
    %932 = vmatmul.bf16.gmra.mxu0 %v451
    %v933 = vpop.f32.mrf.mxu0
    %v934 = vadd.f32 %v885, %v933
    %v935 = vpop.f32.mrf.mxu0
    %v936 = vadd.f32 %v887, %v935
    %937 = vmatmul.bf16.gmra.mxu0 %v455
    %v938 = vpop.f32.mrf.mxu0
    %v939 = vadd.f32 %v890, %v938
    %v940 = vpop.f32.mrf.mxu0
    %v941 = vadd.f32 %v892, %v940
    %942 = vmatmul.bf16.gmra.mxu0 %v459
    %v943 = vpop.f32.mrf.mxu0
    %v944 = vadd.f32 %v895, %v943
    %v945 = vpop.f32.mrf.mxu0
    %v946 = vadd.f32 %v897, %v945
    %947 = vmatmul.bf16.gmra.mxu0 %v463
    %v948 = vpop.f32.mrf.mxu0
    %v949 = vadd.f32 %v900, %v948
    %v950 = vpop.f32.mrf.mxu0
    %v951 = vadd.f32 %v902, %v950
    %952 = vmatmul.bf16.gmra.mxu0 %v467
    %v953 = vpop.f32.mrf.mxu0
    %v954 = vadd.f32 %v905, %v953
    %v955 = vpop.f32.mrf.mxu0
    %v956 = vadd.f32 %v907, %v955
    %957 = vdwg.mxu0
    %958 = vmatpush.bf16.msra.mxu0 %v778
    %959 = vmatpush.bf16.msra.mxu0 %v776
    %960 = vmatpush.bf16.msra.mxu0 %v774
    %961 = vmatpush.bf16.msra.mxu0 %v772
    %962 = vmatpush.bf16.msra.mxu0 %v770
    %963 = vmatpush.bf16.msra.mxu0 %v768
    %964 = vmatpush.bf16.msra.mxu0 %v766
    %965 = vmatpush.bf16.msra.mxu0 %v764
    %966 = vmatmul.bf16.gmra.mxu0 %v440
    %v967 = vpop.f32.mrf.mxu0
    %v968 = vadd.f32 %v919, %v967
    %v969 = vpop.f32.mrf.mxu0
    %v970 = vadd.f32 %v921, %v969
    %971 = vmatmul.bf16.gmra.mxu0 %v444
    %v972 = vpop.f32.mrf.mxu0
    %v973 = vadd.f32 %v924, %v972
    %v974 = vpop.f32.mrf.mxu0
    %v975 = vadd.f32 %v926, %v974
    %976 = vmatmul.bf16.gmra.mxu0 %v448
    %v977 = vpop.f32.mrf.mxu0
    %v978 = vadd.f32 %v929, %v977
    %v979 = vpop.f32.mrf.mxu0
    %v980 = vadd.f32 %v931, %v979
    %981 = vmatmul.bf16.gmra.mxu0 %v452
    %v982 = vpop.f32.mrf.mxu0
    %v983 = vadd.f32 %v934, %v982
    %v984 = vpop.f32.mrf.mxu0
    %v985 = vadd.f32 %v936, %v984
    %986 = vmatmul.bf16.gmra.mxu0 %v456
    %v987 = vpop.f32.mrf.mxu0
    %v988 = vadd.f32 %v939, %v987
    %v989 = vpop.f32.mrf.mxu0
    %v990 = vadd.f32 %v941, %v989
    %991 = vmatmul.bf16.gmra.mxu0 %v460
    %v992 = vpop.f32.mrf.mxu0
    %v993 = vadd.f32 %v944, %v992
    %v994 = vpop.f32.mrf.mxu0
    %v995 = vadd.f32 %v946, %v994
    %996 = vmatmul.bf16.gmra.mxu0 %v464
    %v997 = vpop.f32.mrf.mxu0
    %v998 = vadd.f32 %v949, %v997
    %v999 = vpop.f32.mrf.mxu0
    %v1000 = vadd.f32 %v951, %v999
    %1001 = vmatmul.bf16.gmra.mxu0 %v468
    %v1002 = vpop.f32.mrf.mxu0
    %v1003 = vadd.f32 %v954, %v1002
    %v1004 = vpop.f32.mrf.mxu0
    %v1005 = vadd.f32 %v956, %v1004
    %1006 = vdwg.mxu0
    %1007 = vmatpush.bf16.msra.mxu0 %v794
    %1008 = vmatpush.bf16.msra.mxu0 %v792
    %1009 = vmatpush.bf16.msra.mxu0 %v790
    %1010 = vmatpush.bf16.msra.mxu0 %v788
    %1011 = vmatpush.bf16.msra.mxu0 %v786
    %1012 = vmatpush.bf16.msra.mxu0 %v784
    %1013 = vmatpush.bf16.msra.mxu0 %v782
    %1014 = vmatpush.bf16.msra.mxu0 %v780
    %1015 = vmatmul.bf16.gmra.mxu0 %v441
    %v1016 = vpop.f32.mrf.mxu0
    %v1017 = vadd.f32 %v968, %v1016
    %v1018 = vpop.f32.mrf.mxu0
    %v1019 = vadd.f32 %v970, %v1018
    %1020 = vmatmul.bf16.gmra.mxu0 %v445
    %v1021 = vpop.f32.mrf.mxu0
    %v1022 = vadd.f32 %v973, %v1021
    %v1023 = vpop.f32.mrf.mxu0
    %v1024 = vadd.f32 %v975, %v1023
    %1025 = vmatmul.bf16.gmra.mxu0 %v449
    %v1026 = vpop.f32.mrf.mxu0
    %v1027 = vadd.f32 %v978, %v1026
    %v1028 = vpop.f32.mrf.mxu0
    %v1029 = vadd.f32 %v980, %v1028
    %1030 = vmatmul.bf16.gmra.mxu0 %v453
    %v1031 = vpop.f32.mrf.mxu0
    %v1032 = vadd.f32 %v983, %v1031
    %v1033 = vpop.f32.mrf.mxu0
    %v1034 = vadd.f32 %v985, %v1033
    %1035 = vmatmul.bf16.gmra.mxu0 %v457
    %v1036 = vpop.f32.mrf.mxu0
    %v1037 = vadd.f32 %v988, %v1036
    %v1038 = vpop.f32.mrf.mxu0
    %v1039 = vadd.f32 %v990, %v1038
    %1040 = vmatmul.bf16.gmra.mxu0 %v461
    %v1041 = vpop.f32.mrf.mxu0
    %v1042 = vadd.f32 %v993, %v1041
    %v1043 = vpop.f32.mrf.mxu0
    %v1044 = vadd.f32 %v995, %v1043
    %1045 = vmatmul.bf16.gmra.mxu0 %v465
    %v1046 = vpop.f32.mrf.mxu0
    %v1047 = vadd.f32 %v998, %v1046
    %v1048 = vpop.f32.mrf.mxu0
    %v1049 = vadd.f32 %v1000, %v1048
    %1050 = vmatmul.bf16.gmra.mxu0 %v469
    %v1051 = vpop.f32.mrf.mxu0
    %v1052 = vadd.f32 %v1003, %v1051
    %v1053 = vpop.f32.mrf.mxu0
    %v1054 = vadd.f32 %v1005, %v1053
    %1055 = vdwg.mxu0
    %1056 = vmatpush.bf16.msra.mxu0 %v747
    %1057 = vmatpush.bf16.msra.mxu0 %v745
    %1058 = vmatpush.bf16.msra.mxu0 %v743
    %1059 = vmatpush.bf16.msra.mxu0 %v741
    %1060 = vmatpush.bf16.msra.mxu0 %v739
    %1061 = vmatpush.bf16.msra.mxu0 %v737
    %1062 = vmatpush.bf16.msra.mxu0 %v735
    %1063 = vmatpush.bf16.msra.mxu0 %v733
    %1064 = vmatmul.bf16.gmra.mxu0 %v438
    %v1065 = vpop.f32.mrf.mxu0
    %v1066 = vadd.f32 %v537, %v1065
    %v1067 = vpop.f32.mrf.mxu0
    %v1068 = vadd.f32 %v537, %v1067
    %1069 = vmatmul.bf16.gmra.mxu0 %v442
    %v1070 = vpop.f32.mrf.mxu0
    %v1071 = vadd.f32 %v537, %v1070
    %v1072 = vpop.f32.mrf.mxu0
    %v1073 = vadd.f32 %v537, %v1072
    %1074 = vmatmul.bf16.gmra.mxu0 %v446
    %v1075 = vpop.f32.mrf.mxu0
    %v1076 = vadd.f32 %v537, %v1075
    %v1077 = vpop.f32.mrf.mxu0
    %v1078 = vadd.f32 %v537, %v1077
    %1079 = vmatmul.bf16.gmra.mxu0 %v450
    %v1080 = vpop.f32.mrf.mxu0
    %v1081 = vadd.f32 %v537, %v1080
    %v1082 = vpop.f32.mrf.mxu0
    %v1083 = vadd.f32 %v537, %v1082
    %1084 = vmatmul.bf16.gmra.mxu0 %v454
    %v1085 = vpop.f32.mrf.mxu0
    %v1086 = vadd.f32 %v537, %v1085
    %v1087 = vpop.f32.mrf.mxu0
    %v1088 = vadd.f32 %v537, %v1087
    %1089 = vmatmul.bf16.gmra.mxu0 %v458
    %v1090 = vpop.f32.mrf.mxu0
    %v1091 = vadd.f32 %v537, %v1090
    %v1092 = vpop.f32.mrf.mxu0
    %v1093 = vadd.f32 %v537, %v1092
    %1094 = vmatmul.bf16.gmra.mxu0 %v462
    %v1095 = vpop.f32.mrf.mxu0
    %v1096 = vadd.f32 %v537, %v1095
    %v1097 = vpop.f32.mrf.mxu0
    %v1098 = vadd.f32 %v537, %v1097
    %1099 = vmatmul.bf16.gmra.mxu0 %v466
    %v1100 = vpop.f32.mrf.mxu0
    %v1101 = vadd.f32 %v537, %v1100
    %v1102 = vpop.f32.mrf.mxu0
    %v1103 = vadd.f32 %v537, %v1102
    %1104 = vdwg.mxu0
    %1105 = vmatpush.bf16.msra.mxu0 %v763
    %1106 = vmatpush.bf16.msra.mxu0 %v761
    %1107 = vmatpush.bf16.msra.mxu0 %v759
    %1108 = vmatpush.bf16.msra.mxu0 %v757
    %1109 = vmatpush.bf16.msra.mxu0 %v755
    %1110 = vmatpush.bf16.msra.mxu0 %v753
    %1111 = vmatpush.bf16.msra.mxu0 %v751
    %1112 = vmatpush.bf16.msra.mxu0 %v749
    %1113 = vmatmul.bf16.gmra.mxu0 %v439
    %v1114 = vpop.f32.mrf.mxu0
    %v1115 = vadd.f32 %v1066, %v1114
    %v1116 = vpop.f32.mrf.mxu0
    %v1117 = vadd.f32 %v1068, %v1116
    %1118 = vmatmul.bf16.gmra.mxu0 %v443
    %v1119 = vpop.f32.mrf.mxu0
    %v1120 = vadd.f32 %v1071, %v1119
    %v1121 = vpop.f32.mrf.mxu0
    %v1122 = vadd.f32 %v1073, %v1121
    %1123 = vmatmul.bf16.gmra.mxu0 %v447
    %v1124 = vpop.f32.mrf.mxu0
    %v1125 = vadd.f32 %v1076, %v1124
    %v1126 = vpop.f32.mrf.mxu0
    %v1127 = vadd.f32 %v1078, %v1126
    %1128 = vmatmul.bf16.gmra.mxu0 %v451
    %v1129 = vpop.f32.mrf.mxu0
    %v1130 = vadd.f32 %v1081, %v1129
    %v1131 = vpop.f32.mrf.mxu0
    %v1132 = vadd.f32 %v1083, %v1131
    %1133 = vmatmul.bf16.gmra.mxu0 %v455
    %v1134 = vpop.f32.mrf.mxu0
    %v1135 = vadd.f32 %v1086, %v1134
    %v1136 = vpop.f32.mrf.mxu0
    %v1137 = vadd.f32 %v1088, %v1136
    %1138 = vmatmul.bf16.gmra.mxu0 %v459
    %v1139 = vpop.f32.mrf.mxu0
    %v1140 = vadd.f32 %v1091, %v1139
    %v1141 = vpop.f32.mrf.mxu0
    %v1142 = vadd.f32 %v1093, %v1141
    %1143 = vmatmul.bf16.gmra.mxu0 %v463
    %v1144 = vpop.f32.mrf.mxu0
    %v1145 = vadd.f32 %v1096, %v1144
    %v1146 = vpop.f32.mrf.mxu0
    %v1147 = vadd.f32 %v1098, %v1146
    %1148 = vmatmul.bf16.gmra.mxu0 %v467
    %v1149 = vpop.f32.mrf.mxu0
    %v1150 = vadd.f32 %v1101, %v1149
    %v1151 = vpop.f32.mrf.mxu0
    %v1152 = vadd.f32 %v1103, %v1151
    %1153 = vdwg.mxu0
    %1154 = vmatpush.bf16.msra.mxu0 %v779
    %1155 = vmatpush.bf16.msra.mxu0 %v777
    %1156 = vmatpush.bf16.msra.mxu0 %v775
    %1157 = vmatpush.bf16.msra.mxu0 %v773
    %1158 = vmatpush.bf16.msra.mxu0 %v771
    %1159 = vmatpush.bf16.msra.mxu0 %v769
    %1160 = vmatpush.bf16.msra.mxu0 %v767
    %1161 = vmatpush.bf16.msra.mxu0 %v765
    %1162 = vmatmul.bf16.gmra.mxu0 %v440
    %v1163 = vpop.f32.mrf.mxu0
    %v1164 = vadd.f32 %v1115, %v1163
    %v1165 = vpop.f32.mrf.mxu0
    %v1166 = vadd.f32 %v1117, %v1165
    %1167 = vmatmul.bf16.gmra.mxu0 %v444
    %v1168 = vpop.f32.mrf.mxu0
    %v1169 = vadd.f32 %v1120, %v1168
    %v1170 = vpop.f32.mrf.mxu0
    %v1171 = vadd.f32 %v1122, %v1170
    %1172 = vmatmul.bf16.gmra.mxu0 %v448
    %v1173 = vpop.f32.mrf.mxu0
    %v1174 = vadd.f32 %v1125, %v1173
    %v1175 = vpop.f32.mrf.mxu0
    %v1176 = vadd.f32 %v1127, %v1175
    %1177 = vmatmul.bf16.gmra.mxu0 %v452
    %v1178 = vpop.f32.mrf.mxu0
    %v1179 = vadd.f32 %v1130, %v1178
    %v1180 = vpop.f32.mrf.mxu0
    %v1181 = vadd.f32 %v1132, %v1180
    %1182 = vmatmul.bf16.gmra.mxu0 %v456
    %v1183 = vpop.f32.mrf.mxu0
    %v1184 = vadd.f32 %v1135, %v1183
    %v1185 = vpop.f32.mrf.mxu0
    %v1186 = vadd.f32 %v1137, %v1185
    %1187 = vmatmul.bf16.gmra.mxu0 %v460
    %v1188 = vpop.f32.mrf.mxu0
    %v1189 = vadd.f32 %v1140, %v1188
    %v1190 = vpop.f32.mrf.mxu0
    %v1191 = vadd.f32 %v1142, %v1190
    %1192 = vmatmul.bf16.gmra.mxu0 %v464
    %v1193 = vpop.f32.mrf.mxu0
    %v1194 = vadd.f32 %v1145, %v1193
    %v1195 = vpop.f32.mrf.mxu0
    %v1196 = vadd.f32 %v1147, %v1195
    %1197 = vmatmul.bf16.gmra.mxu0 %v468
    %v1198 = vpop.f32.mrf.mxu0
    %v1199 = vadd.f32 %v1150, %v1198
    %v1200 = vpop.f32.mrf.mxu0
    %v1201 = vadd.f32 %v1152, %v1200
    %1202 = vdwg.mxu0
    %1203 = vmatpush.bf16.msra.mxu0 %v795
    %1204 = vmatpush.bf16.msra.mxu0 %v793
    %1205 = vmatpush.bf16.msra.mxu0 %v791
    %1206 = vmatpush.bf16.msra.mxu0 %v789
    %1207 = vmatpush.bf16.msra.mxu0 %v787
    %1208 = vmatpush.bf16.msra.mxu0 %v785
    %1209 = vmatpush.bf16.msra.mxu0 %v783
    %1210 = vmatpush.bf16.msra.mxu0 %v781
    %1211 = vmatmul.bf16.gmra.mxu0 %v441
    %v1212 = vpop.f32.mrf.mxu0
    %v1213 = vadd.f32 %v1164, %v1212
    %v1214 = vpop.f32.mrf.mxu0
    %v1215 = vadd.f32 %v1166, %v1214
    %1216 = vmatmul.bf16.gmra.mxu0 %v445
    %v1217 = vpop.f32.mrf.mxu0
    %v1218 = vadd.f32 %v1169, %v1217
    %v1219 = vpop.f32.mrf.mxu0
    %v1220 = vadd.f32 %v1171, %v1219
    %1221 = vmatmul.bf16.gmra.mxu0 %v449
    %v1222 = vpop.f32.mrf.mxu0
    %v1223 = vadd.f32 %v1174, %v1222
    %v1224 = vpop.f32.mrf.mxu0
    %v1225 = vadd.f32 %v1176, %v1224
    %1226 = vmatmul.bf16.gmra.mxu0 %v453
    %v1227 = vpop.f32.mrf.mxu0
    %v1228 = vadd.f32 %v1179, %v1227
    %v1229 = vpop.f32.mrf.mxu0
    %v1230 = vadd.f32 %v1181, %v1229
    %1231 = vmatmul.bf16.gmra.mxu0 %v457
    %v1232 = vpop.f32.mrf.mxu0
    %v1233 = vadd.f32 %v1184, %v1232
    %v1234 = vpop.f32.mrf.mxu0
    %v1235 = vadd.f32 %v1186, %v1234
    %1236 = vmatmul.bf16.gmra.mxu0 %v461
    %v1237 = vpop.f32.mrf.mxu0
    %v1238 = vadd.f32 %v1189, %v1237
    %v1239 = vpop.f32.mrf.mxu0
    %v1240 = vadd.f32 %v1191, %v1239
    %1241 = vmatmul.bf16.gmra.mxu0 %v465
    %v1242 = vpop.f32.mrf.mxu0
    %v1243 = vadd.f32 %v1194, %v1242
    %v1244 = vpop.f32.mrf.mxu0
    %v1245 = vadd.f32 %v1196, %v1244
    %1246 = vmatmul.bf16.gmra.mxu0 %v469
    %v1247 = vpop.f32.mrf.mxu0
    %v1248 = vadd.f32 %v1199, %v1247
    %v1249 = vpop.f32.mrf.mxu0
    %v1250 = vadd.f32 %v1201, %v1249
    %1251 = vdwg.mxu0
    %v1252 = vmax.f32 %v1017, 0.0
    %v1253 = vmax.f32 %v1213, 0.0
    %v1254 = vmax.f32 %v1019, 0.0
    %v1255 = vmax.f32 %v1215, 0.0
    %v1256 = vmax.f32 %v1022, 0.0
    %v1257 = vmax.f32 %v1218, 0.0
    %v1258 = vmax.f32 %v1024, 0.0
    %v1259 = vmax.f32 %v1220, 0.0
    %v1260 = vmax.f32 %v1027, 0.0
    %v1261 = vmax.f32 %v1223, 0.0
    %v1262 = vmax.f32 %v1029, 0.0
    %v1263 = vmax.f32 %v1225, 0.0
    %v1264 = vmax.f32 %v1032, 0.0
    %v1265 = vmax.f32 %v1228, 0.0
    %v1266 = vmax.f32 %v1034, 0.0
    %v1267 = vmax.f32 %v1230, 0.0
    %v1268 = vmax.f32 %v1037, 0.0
    %v1269 = vmax.f32 %v1233, 0.0
    %v1270 = vmax.f32 %v1039, 0.0
    %v1271 = vmax.f32 %v1235, 0.0
    %v1272 = vmax.f32 %v1042, 0.0
    %v1273 = vmax.f32 %v1238, 0.0
    %v1274 = vmax.f32 %v1044, 0.0
    %v1275 = vmax.f32 %v1240, 0.0
    %v1276 = vmax.f32 %v1047, 0.0
    %v1277 = vmax.f32 %v1243, 0.0
    %v1278 = vmax.f32 %v1049, 0.0
    %v1279 = vmax.f32 %v1245, 0.0
    %v1280 = vmax.f32 %v1052, 0.0
    %v1281 = vmax.f32 %v1248, 0.0
    %v1282 = vmax.f32 %v1054, 0.0
    %v1283 = vmax.f32 %v1250, 0.0
    %v1284 = vadd.f32 %v1252, %v1254
    %v1285 = vadd.f32 %v1284, %v1256
    %v1286 = vadd.f32 %v1285, %v1258
    %v1287 = vadd.f32 %v1286, %v1260
    %v1288 = vadd.f32 %v1287, %v1262
    %v1289 = vadd.f32 %v1288, %v1264
    %v1290 = vadd.f32 %v1289, %v1266
    %v1291 = vadd.f32 %v1290, %v1268
    %v1292 = vadd.f32 %v1291, %v1270
    %v1293 = vadd.f32 %v1292, %v1272
    %v1294 = vadd.f32 %v1293, %v1274
    %v1295 = vadd.f32 %v1294, %v1276
    %v1296 = vadd.f32 %v1295, %v1278
    %v1297 = vadd.f32 %v1296, %v1280
    %v1298 = vadd.f32 %v1297, %v1282
    %v1299 = vrot.slane %v1298, 4
    %v1300 = vadd.f32 %v1298, %v1299
    %v1301 = vrot.slane %v1300, 2
    %v1302 = vadd.f32 %v1300, %v1301
    %v1303 = vrot.slane %v1302, 1
    %v1304 = vadd.f32 %v1302, %v1303
    %v1305 = vadd.f32 %v1253, %v1255
    %v1306 = vadd.f32 %v1305, %v1257
    %v1307 = vadd.f32 %v1306, %v1259
    %v1308 = vadd.f32 %v1307, %v1261
    %v1309 = vadd.f32 %v1308, %v1263
    %v1310 = vadd.f32 %v1309, %v1265
    %v1311 = vadd.f32 %v1310, %v1267
    %v1312 = vadd.f32 %v1311, %v1269
    %v1313 = vadd.f32 %v1312, %v1271
    %v1314 = vadd.f32 %v1313, %v1273
    %v1315 = vadd.f32 %v1314, %v1275
    %v1316 = vadd.f32 %v1315, %v1277
    %v1317 = vadd.f32 %v1316, %v1279
    %v1318 = vadd.f32 %v1317, %v1281
    %v1319 = vadd.f32 %v1318, %v1283
    %v1320 = vrot.slane %v1319, 4
    %v1321 = vadd.f32 %v1319, %v1320
    %v1322 = vrot.slane %v1321, 2
    %v1323 = vadd.f32 %v1321, %v1322
    %v1324 = vrot.slane %v1323, 1
    %v1325 = vadd.f32 %v1323, %v1324
    %v1326 = vrcp.pop 128.0
    %v1327 = vmul.f32 128.0, %v1326
    %v1328 = vsub.f32 1.0, %v1327
    %v1329 = vmul.f32 %v1326, %v1328
    %v1330 = vadd.f32 %v1326, %v1329
    %vm1331 = vweird.f32 %v1326
    %v1332 = vsel %vm1331, %v1326, %v1330
    %v1333 = vmul.f32 %v1304, %v1332
    %v1334 = vmul.f32 %v1325, %v1332
    %v1335 = vmul.f32 %v1252, %v1252
    %v1336 = vmul.f32 %v1253, %v1253
    %v1337 = vmul.f32 %v1254, %v1254
    %v1338 = vmul.f32 %v1255, %v1255
    %v1339 = vmul.f32 %v1256, %v1256
    %v1340 = vmul.f32 %v1257, %v1257
    %v1341 = vmul.f32 %v1258, %v1258
    %v1342 = vmul.f32 %v1259, %v1259
    %v1343 = vmul.f32 %v1260, %v1260
    %v1344 = vmul.f32 %v1261, %v1261
    %v1345 = vmul.f32 %v1262, %v1262
    %v1346 = vmul.f32 %v1263, %v1263
    %v1347 = vmul.f32 %v1264, %v1264
    %v1348 = vmul.f32 %v1265, %v1265
    %v1349 = vmul.f32 %v1266, %v1266
    %v1350 = vmul.f32 %v1267, %v1267
    %v1351 = vmul.f32 %v1268, %v1268
    %v1352 = vmul.f32 %v1269, %v1269
    %v1353 = vmul.f32 %v1270, %v1270
    %v1354 = vmul.f32 %v1271, %v1271
    %v1355 = vmul.f32 %v1272, %v1272
    %v1356 = vmul.f32 %v1273, %v1273
    %v1357 = vmul.f32 %v1274, %v1274
    %v1358 = vmul.f32 %v1275, %v1275
    %v1359 = vmul.f32 %v1276, %v1276
    %v1360 = vmul.f32 %v1277, %v1277
    %v1361 = vmul.f32 %v1278, %v1278
    %v1362 = vmul.f32 %v1279, %v1279
    %v1363 = vmul.f32 %v1280, %v1280
    %v1364 = vmul.f32 %v1281, %v1281
    %v1365 = vmul.f32 %v1282, %v1282
    %v1366 = vmul.f32 %v1283, %v1283
    %v1367 = vadd.f32 %v1335, %v1337
    %v1368 = vadd.f32 %v1367, %v1339
    %v1369 = vadd.f32 %v1368, %v1341
    %v1370 = vadd.f32 %v1369, %v1343
    %v1371 = vadd.f32 %v1370, %v1345
    %v1372 = vadd.f32 %v1371, %v1347
    %v1373 = vadd.f32 %v1372, %v1349
    %v1374 = vadd.f32 %v1373, %v1351
    %v1375 = vadd.f32 %v1374, %v1353
    %v1376 = vadd.f32 %v1375, %v1355
    %v1377 = vadd.f32 %v1376, %v1357
    %v1378 = vadd.f32 %v1377, %v1359
    %v1379 = vadd.f32 %v1378, %v1361
    %v1380 = vadd.f32 %v1379, %v1363
    %v1381 = vadd.f32 %v1380, %v1365
    %v1382 = vrot.slane %v1381, 4
    %v1383 = vadd.f32 %v1381, %v1382
    %v1384 = vrot.slane %v1383, 2
    %v1385 = vadd.f32 %v1383, %v1384
    %v1386 = vrot.slane %v1385, 1
    %v1387 = vadd.f32 %v1385, %v1386
    %v1388 = vadd.f32 %v1336, %v1338
    %v1389 = vadd.f32 %v1388, %v1340
    %v1390 = vadd.f32 %v1389, %v1342
    %v1391 = vadd.f32 %v1390, %v1344
    %v1392 = vadd.f32 %v1391, %v1346
    %v1393 = vadd.f32 %v1392, %v1348
    %v1394 = vadd.f32 %v1393, %v1350
    %v1395 = vadd.f32 %v1394, %v1352
    %v1396 = vadd.f32 %v1395, %v1354
    %v1397 = vadd.f32 %v1396, %v1356
    %v1398 = vadd.f32 %v1397, %v1358
    %v1399 = vadd.f32 %v1398, %v1360
    %v1400 = vadd.f32 %v1399, %v1362
    %v1401 = vadd.f32 %v1400, %v1364
    %v1402 = vadd.f32 %v1401, %v1366
    %v1403 = vrot.slane %v1402, 4
    %v1404 = vadd.f32 %v1402, %v1403
    %v1405 = vrot.slane %v1404, 2
    %v1406 = vadd.f32 %v1404, %v1405
    %v1407 = vrot.slane %v1406, 1
    %v1408 = vadd.f32 %v1406, %v1407
    %v1409 = vmul.f32 %v1387, %v1332
    %v1410 = vmul.f32 %v1408, %v1332
    %v1411 = vmul.f32 %v1333, %v1333
    %v1412 = vmul.f32 %v1334, %v1334
    %v1413 = vsub.f32 %v1409, %v1411
    %v1414 = vsub.f32 %v1410, %v1412
    %v1415 = vmax.f32 %v1413, 0.0
    %v1416 = vmax.f32 %v1414, 0.0
    %v1417 = vld [vmem:[%s7] sm:$0x3]
    %v1418 = vadd.f32 %v1415, 1e-05
    %v1419 = vadd.f32 %v1416, 1e-05
    %v1420 = vrsqrt.pop %v1418
    %v1421 = vmul.f32 %v1420, %v1418
    %v1422 = vmul.f32 %v1421, %v1420
    %v1423 = vmul.f32 0.5, %v1422
    %v1424 = vsub.f32 1.5, %v1423
    %v1425 = vmul.f32 %v1420, %v1424
    %vm1426 = vweird.f32 %v1418
    %vm1427 = vweird.f32 %v1420
    %vm1428 = vmor %vm1426, %vm1427
    %v1429 = vsel %vm1428, %v1420, %v1425
    %v1430 = vrsqrt.pop %v1419
    %v1431 = vmul.f32 %v1430, %v1419
    %v1432 = vmul.f32 %v1431, %v1430
    %v1433 = vmul.f32 0.5, %v1432
    %v1434 = vsub.f32 1.5, %v1433
    %v1435 = vmul.f32 %v1430, %v1434
    %vm1436 = vweird.f32 %v1419
    %vm1437 = vweird.f32 %v1430
    %vm1438 = vmor %vm1436, %vm1437
    %v1439 = vsel %vm1438, %v1430, %v1435
    %v1442 = vrot.slane %v1439, 7
    %vm1443 = vcmask 1040384
    %v1444 = vsel %vm1443, %v1429, %v1442
    %v1446 = vmul.f32 %v1417, %v1444
    %v1447 = vld [vmem:[#allocation8] sm:$0x3]
    %v1449 = vperm.slane %v1446, 0
    %v1450 = vperm.slane %v1446, 1
    %v1453 = vmul.f32 %v1333, %v1449
    %v1454 = vmul.f32 %v1334, %v1450
    %v1457 = vrot.slane %v1454, 7
    %v1458 = vsel %vm1443, %v1453, %v1457
    %v1460 = vsub.f32 %v1447, %v1458
    %v1461 = vmul.f32 %v1252, %v1449
    %v1462 = vmul.f32 %v1253, %v1450
    %v1463 = vmul.f32 %v1254, %v1449
    %v1464 = vmul.f32 %v1255, %v1450
    %v1465 = vmul.f32 %v1256, %v1449
    %v1466 = vmul.f32 %v1257, %v1450
    %v1467 = vmul.f32 %v1258, %v1449
    %v1468 = vmul.f32 %v1259, %v1450
    %v1469 = vmul.f32 %v1260, %v1449
    %v1470 = vmul.f32 %v1261, %v1450
    %v1471 = vmul.f32 %v1262, %v1449
    %v1472 = vmul.f32 %v1263, %v1450
    %v1473 = vmul.f32 %v1264, %v1449
    %v1474 = vmul.f32 %v1265, %v1450
    %v1475 = vmul.f32 %v1266, %v1449
    %v1476 = vmul.f32 %v1267, %v1450
    %v1477 = vmul.f32 %v1268, %v1449
    %v1478 = vmul.f32 %v1269, %v1450
    %v1479 = vmul.f32 %v1270, %v1449
    %v1480 = vmul.f32 %v1271, %v1450
    %v1481 = vmul.f32 %v1272, %v1449
    %v1482 = vmul.f32 %v1273, %v1450
    %v1483 = vmul.f32 %v1274, %v1449
    %v1484 = vmul.f32 %v1275, %v1450
    %v1485 = vmul.f32 %v1276, %v1449
    %v1486 = vmul.f32 %v1277, %v1450
    %v1487 = vmul.f32 %v1278, %v1449
    %v1488 = vmul.f32 %v1279, %v1450
    %v1489 = vmul.f32 %v1280, %v1449
    %v1490 = vmul.f32 %v1281, %v1450
    %v1491 = vmul.f32 %v1282, %v1449
    %v1492 = vmul.f32 %v1283, %v1450
    %v1494 = vperm.slane %v1460, 0
    %v1495 = vperm.slane %v1460, 1
    %v1498 = vadd.f32 %v1461, %v1494
    %v1499 = vadd.f32 %v1462, %v1495
    %v1500 = vadd.f32 %v1463, %v1494
    %v1501 = vadd.f32 %v1464, %v1495
    %v1502 = vadd.f32 %v1465, %v1494
    %v1503 = vadd.f32 %v1466, %v1495
    %v1504 = vadd.f32 %v1467, %v1494
    %v1505 = vadd.f32 %v1468, %v1495
    %v1506 = vadd.f32 %v1469, %v1494
    %v1507 = vadd.f32 %v1470, %v1495
    %v1508 = vadd.f32 %v1471, %v1494
    %v1509 = vadd.f32 %v1472, %v1495
    %v1510 = vadd.f32 %v1473, %v1494
    %v1511 = vadd.f32 %v1474, %v1495
    %v1512 = vadd.f32 %v1475, %v1494
    %v1513 = vadd.f32 %v1476, %v1495
    %v1514 = vadd.f32 %v1477, %v1494
    %v1515 = vadd.f32 %v1478, %v1495
    %v1516 = vadd.f32 %v1479, %v1494
    %v1517 = vadd.f32 %v1480, %v1495
    %v1518 = vadd.f32 %v1481, %v1494
    %v1519 = vadd.f32 %v1482, %v1495
    %v1520 = vadd.f32 %v1483, %v1494
    %v1521 = vadd.f32 %v1484, %v1495
    %v1522 = vadd.f32 %v1485, %v1494
    %v1523 = vadd.f32 %v1486, %v1495
    %v1524 = vadd.f32 %v1487, %v1494
    %v1525 = vadd.f32 %v1488, %v1495
    %v1526 = vadd.f32 %v1489, %v1494
    %v1527 = vadd.f32 %v1490, %v1495
    %v1528 = vadd.f32 %v1491, %v1494
    %v1529 = vadd.f32 %v1492, %v1495
    %v1530 = vpack.c.bf16 %v1500, %v1498
    %v1531 = vpack.c.bf16 %v1501, %v1499
    %v1532 = vpack.c.bf16 %v1504, %v1502
    %v1533 = vpack.c.bf16 %v1505, %v1503
    %v1534 = vpack.c.bf16 %v1508, %v1506
    %v1535 = vpack.c.bf16 %v1509, %v1507
    %v1536 = vpack.c.bf16 %v1512, %v1510
    %v1537 = vpack.c.bf16 %v1513, %v1511
    %v1538 = vpack.c.bf16 %v1516, %v1514
    %v1539 = vpack.c.bf16 %v1517, %v1515
    %v1540 = vpack.c.bf16 %v1520, %v1518
    %v1541 = vpack.c.bf16 %v1521, %v1519
    %v1542 = vpack.c.bf16 %v1524, %v1522
    %v1543 = vpack.c.bf16 %v1525, %v1523
    %v1544 = vpack.c.bf16 %v1528, %v1526
    %v1545 = vpack.c.bf16 %v1529, %v1527
    %v1546 = vld [vmem:[#allocation10] sm:$0xf]
    %v1547 = vld [vmem:[#allocation10 + $0x4] sm:$0xf]
    %v1548 = vld [vmem:[#allocation10 + $0x8] sm:$0xf]
    %v1549 = vld [vmem:[#allocation10 + $0xc] sm:$0xf]
    %v1550 = vld [vmem:[#allocation10 + $0x10] sm:$0xf]
    %v1551 = vld [vmem:[#allocation10 + $0x14] sm:$0xf]
    %v1552 = vld [vmem:[#allocation10 + $0x18] sm:$0xf]
    %v1553 = vld [vmem:[#allocation10 + $0x1c] sm:$0xf]
    %v1554 = vld [vmem:[#allocation10 + $0x20] sm:$0xf]
    %v1555 = vld [vmem:[#allocation10 + $0x24] sm:$0xf]
    %v1556 = vld [vmem:[#allocation10 + $0x28] sm:$0xf]
    %v1557 = vld [vmem:[#allocation10 + $0x2c] sm:$0xf]
    %v1558 = vld [vmem:[#allocation10 + $0x30] sm:$0xf]
    %v1559 = vld [vmem:[#allocation10 + $0x34] sm:$0xf]
    %v1560 = vld [vmem:[#allocation10 + $0x38] sm:$0xf]
    %v1561 = vld [vmem:[#allocation10 + $0x3c] sm:$0xf]
    %v1562 = vld [vmem:[#allocation10 + $0x40] sm:$0xf]
    %v1563 = vld [vmem:[#allocation10 + $0x44] sm:$0xf]
    %v1564 = vld [vmem:[#allocation10 + $0x48] sm:$0xf]
    %v1565 = vld [vmem:[#allocation10 + $0x4c] sm:$0xf]
    %v1566 = vld [vmem:[#allocation10 + $0x50] sm:$0xf]
    %v1567 = vld [vmem:[#allocation10 + $0x54] sm:$0xf]
    %v1568 = vld [vmem:[#allocation10 + $0x58] sm:$0xf]
    %v1569 = vld [vmem:[#allocation10 + $0x5c] sm:$0xf]
    %v1570 = vld [vmem:[#allocation10 + $0x60] sm:$0xf]
    %v1571 = vld [vmem:[#allocation10 + $0x64] sm:$0xf]
    %v1572 = vld [vmem:[#allocation10 + $0x68] sm:$0xf]
    %v1573 = vld [vmem:[#allocation10 + $0x6c] sm:$0xf]
    %v1574 = vld [vmem:[#allocation10 + $0x70] sm:$0xf]
    %v1575 = vld [vmem:[#allocation10 + $0x74] sm:$0xf]
    %v1576 = vld [vmem:[#allocation10 + $0x78] sm:$0xf]
    %v1577 = vld [vmem:[#allocation10 + $0x7c] sm:$0xf]
    %v1578 = vld [vmem:[#allocation11] sm:$0x1]
    %v1580 = vperm.slane %v1578, 0
    %v1614 = vunpack.c.l.b16 %v1546
    %v1615 = vunpack.c.l.b16 %v1547
    %v1616 = vunpack.c.l.b16 %v1548
    %v1617 = vunpack.c.l.b16 %v1549
    %v1618 = vunpack.c.l.b16 %v1550
    %v1619 = vunpack.c.l.b16 %v1551
    %v1620 = vunpack.c.l.b16 %v1552
    %v1621 = vunpack.c.l.b16 %v1553
    %v1622 = vunpack.c.l.b16 %v1554
    %v1623 = vunpack.c.l.b16 %v1555
    %v1624 = vunpack.c.l.b16 %v1556
    %v1625 = vunpack.c.l.b16 %v1557
    %v1626 = vunpack.c.l.b16 %v1558
    %v1627 = vunpack.c.l.b16 %v1559
    %v1628 = vunpack.c.l.b16 %v1560
    %v1629 = vunpack.c.l.b16 %v1561
    %v1630 = vunpack.c.l.b16 %v1562
    %v1631 = vunpack.c.l.b16 %v1563
    %v1632 = vunpack.c.l.b16 %v1564
    %v1633 = vunpack.c.l.b16 %v1565
    %v1634 = vunpack.c.l.b16 %v1566
    %v1635 = vunpack.c.l.b16 %v1567
    %v1636 = vunpack.c.l.b16 %v1568
    %v1637 = vunpack.c.l.b16 %v1569
    %v1638 = vunpack.c.l.b16 %v1570
    %v1639 = vunpack.c.l.b16 %v1571
    %v1640 = vunpack.c.l.b16 %v1572
    %v1641 = vunpack.c.l.b16 %v1573
    %v1642 = vunpack.c.l.b16 %v1574
    %v1643 = vunpack.c.l.b16 %v1575
    %v1644 = vunpack.c.l.b16 %v1576
    %v1645 = vunpack.c.l.b16 %v1577
    %v1646 = vpack.c.b16 %v1615, %v1614
    %v1647 = vpack.c.b16 %v1617, %v1616
    %v1648 = vpack.c.b16 %v1619, %v1618
    %v1649 = vpack.c.b16 %v1621, %v1620
    %v1650 = vpack.c.b16 %v1623, %v1622
    %v1651 = vpack.c.b16 %v1625, %v1624
    %v1652 = vpack.c.b16 %v1627, %v1626
    %v1653 = vpack.c.b16 %v1629, %v1628
    %v1654 = vpack.c.b16 %v1631, %v1630
    %v1655 = vpack.c.b16 %v1633, %v1632
    %v1656 = vpack.c.b16 %v1635, %v1634
    %v1657 = vpack.c.b16 %v1637, %v1636
    %v1658 = vpack.c.b16 %v1639, %v1638
    %v1659 = vpack.c.b16 %v1641, %v1640
    %v1660 = vpack.c.b16 %v1643, %v1642
    %v1661 = vpack.c.b16 %v1645, %v1644
    %1678 = vmatpush.bf16.msra.mxu0 %v1653
    %1679 = vmatpush.bf16.msra.mxu0 %v1652
    %1680 = vmatpush.bf16.msra.mxu0 %v1651
    %1681 = vmatpush.bf16.msra.mxu0 %v1650
    %1682 = vmatpush.bf16.msra.mxu0 %v1649
    %1683 = vmatpush.bf16.msra.mxu0 %v1648
    %1684 = vmatpush.bf16.msra.mxu0 %v1647
    %1685 = vmatpush.bf16.msra.mxu0 %v1646
    %1686 = vmatmul.bf16.gmra.mxu0 %v1530
    %v1687 = vpop.f32.mrf.mxu0
    %v1688 = vadd.f32 %v1580, %v1687
    %v1689 = vpop.f32.mrf.mxu0
    %v1690 = vadd.f32 %v1580, %v1689
    %1691 = vmatmul.bf16.gmra.mxu0 %v1532
    %v1692 = vpop.f32.mrf.mxu0
    %v1693 = vadd.f32 %v1580, %v1692
    %v1694 = vpop.f32.mrf.mxu0
    %v1695 = vadd.f32 %v1580, %v1694
    %1696 = vmatmul.bf16.gmra.mxu0 %v1534
    %v1697 = vpop.f32.mrf.mxu0
    %v1698 = vadd.f32 %v1580, %v1697
    %v1699 = vpop.f32.mrf.mxu0
    %v1700 = vadd.f32 %v1580, %v1699
    %1701 = vmatmul.bf16.gmra.mxu0 %v1536
    %v1702 = vpop.f32.mrf.mxu0
    %v1703 = vadd.f32 %v1580, %v1702
    %v1704 = vpop.f32.mrf.mxu0
    %v1705 = vadd.f32 %v1580, %v1704
    %1706 = vmatmul.bf16.gmra.mxu0 %v1538
    %v1707 = vpop.f32.mrf.mxu0
    %v1708 = vadd.f32 %v1580, %v1707
    %v1709 = vpop.f32.mrf.mxu0
    %v1710 = vadd.f32 %v1580, %v1709
    %1711 = vmatmul.bf16.gmra.mxu0 %v1540
    %v1712 = vpop.f32.mrf.mxu0
    %v1713 = vadd.f32 %v1580, %v1712
    %v1714 = vpop.f32.mrf.mxu0
    %v1715 = vadd.f32 %v1580, %v1714
    %1716 = vmatmul.bf16.gmra.mxu0 %v1542
    %v1717 = vpop.f32.mrf.mxu0
    %v1718 = vadd.f32 %v1580, %v1717
    %v1719 = vpop.f32.mrf.mxu0
    %v1720 = vadd.f32 %v1580, %v1719
    %1721 = vmatmul.bf16.gmra.mxu0 %v1544
    %v1722 = vpop.f32.mrf.mxu0
    %v1723 = vadd.f32 %v1580, %v1722
    %v1724 = vpop.f32.mrf.mxu0
    %v1725 = vadd.f32 %v1580, %v1724
    %1726 = vdwg.mxu0
    %1727 = vmatpush.bf16.msra.mxu0 %v1661
    %1728 = vmatpush.bf16.msra.mxu0 %v1660
    %1729 = vmatpush.bf16.msra.mxu0 %v1659
    %1730 = vmatpush.bf16.msra.mxu0 %v1658
    %1731 = vmatpush.bf16.msra.mxu0 %v1657
    %1732 = vmatpush.bf16.msra.mxu0 %v1656
    %1733 = vmatpush.bf16.msra.mxu0 %v1655
    %1734 = vmatpush.bf16.msra.mxu0 %v1654
    %1735 = vmatmul.bf16.gmra.mxu0 %v1531
    %v1736 = vpop.f32.mrf.mxu0
    %v1737 = vadd.f32 %v1688, %v1736
    %v1738 = vpop.f32.mrf.mxu0
    %v1739 = vadd.f32 %v1690, %v1738
    %1740 = vmatmul.bf16.gmra.mxu0 %v1533
    %v1741 = vpop.f32.mrf.mxu0
    %v1742 = vadd.f32 %v1693, %v1741
    %v1743 = vpop.f32.mrf.mxu0
    %v1744 = vadd.f32 %v1695, %v1743
    %1745 = vmatmul.bf16.gmra.mxu0 %v1535
    %v1746 = vpop.f32.mrf.mxu0
    %v1747 = vadd.f32 %v1698, %v1746
    %v1748 = vpop.f32.mrf.mxu0
    %v1749 = vadd.f32 %v1700, %v1748
    %1750 = vmatmul.bf16.gmra.mxu0 %v1537
    %v1751 = vpop.f32.mrf.mxu0
    %v1752 = vadd.f32 %v1703, %v1751
    %v1753 = vpop.f32.mrf.mxu0
    %v1754 = vadd.f32 %v1705, %v1753
    %1755 = vmatmul.bf16.gmra.mxu0 %v1539
    %v1756 = vpop.f32.mrf.mxu0
    %v1757 = vadd.f32 %v1708, %v1756
    %v1758 = vpop.f32.mrf.mxu0
    %v1759 = vadd.f32 %v1710, %v1758
    %1760 = vmatmul.bf16.gmra.mxu0 %v1541
    %v1761 = vpop.f32.mrf.mxu0
    %v1762 = vadd.f32 %v1713, %v1761
    %v1763 = vpop.f32.mrf.mxu0
    %v1764 = vadd.f32 %v1715, %v1763
    %1765 = vmatmul.bf16.gmra.mxu0 %v1543
    %v1766 = vpop.f32.mrf.mxu0
    %v1767 = vadd.f32 %v1718, %v1766
    %v1768 = vpop.f32.mrf.mxu0
    %v1769 = vadd.f32 %v1720, %v1768
    %1770 = vmatmul.bf16.gmra.mxu0 %v1545
    %v1771 = vpop.f32.mrf.mxu0
    %v1772 = vadd.f32 %v1723, %v1771
    %v1773 = vpop.f32.mrf.mxu0
    %v1774 = vadd.f32 %v1725, %v1773
    %1775 = vdwg.mxu0
    %v1776 = vmax.f32 %v1737, 0.0
    %v1777 = vmax.f32 %v1739, 0.0
    %v1778 = vmax.f32 %v1742, 0.0
    %v1779 = vmax.f32 %v1744, 0.0
    %v1780 = vmax.f32 %v1747, 0.0
    %v1781 = vmax.f32 %v1749, 0.0
    %v1782 = vmax.f32 %v1752, 0.0
    %v1783 = vmax.f32 %v1754, 0.0
    %v1784 = vmax.f32 %v1757, 0.0
    %v1785 = vmax.f32 %v1759, 0.0
    %v1786 = vmax.f32 %v1762, 0.0
    %v1787 = vmax.f32 %v1764, 0.0
    %v1788 = vmax.f32 %v1767, 0.0
    %v1789 = vmax.f32 %v1769, 0.0
    %v1790 = vmax.f32 %v1772, 0.0
    %v1791 = vmax.f32 %v1774, 0.0
    %v1792 = vadd.f32 %v1776, %v1777
    %v1793 = vadd.f32 %v1792, %v1778
    %v1794 = vadd.f32 %v1793, %v1779
    %v1795 = vadd.f32 %v1794, %v1780
    %v1796 = vadd.f32 %v1795, %v1781
    %v1797 = vadd.f32 %v1796, %v1782
    %v1798 = vadd.f32 %v1797, %v1783
    %v1799 = vadd.f32 %v1798, %v1784
    %v1800 = vadd.f32 %v1799, %v1785
    %v1801 = vadd.f32 %v1800, %v1786
    %v1802 = vadd.f32 %v1801, %v1787
    %v1803 = vadd.f32 %v1802, %v1788
    %v1804 = vadd.f32 %v1803, %v1789
    %v1805 = vadd.f32 %v1804, %v1790
    %v1806 = vadd.f32 %v1805, %v1791
    %v1807 = vrot.slane %v1806, 4
    %v1808 = vadd.f32 %v1806, %v1807
    %v1809 = vrot.slane %v1808, 2
    %v1810 = vadd.f32 %v1808, %v1809
    %v1811 = vrot.slane %v1810, 1
    %v1812 = vadd.f32 %v1810, %v1811
    %v1813 = vmul.f32 %v1812, %v1332
    %v1814 = vmul.f32 %v1776, %v1776
    %v1815 = vmul.f32 %v1777, %v1777
    %v1816 = vmul.f32 %v1778, %v1778
    %v1817 = vmul.f32 %v1779, %v1779
    %v1818 = vmul.f32 %v1780, %v1780
    %v1819 = vmul.f32 %v1781, %v1781
    %v1820 = vmul.f32 %v1782, %v1782
    %v1821 = vmul.f32 %v1783, %v1783
    %v1822 = vmul.f32 %v1784, %v1784
    %v1823 = vmul.f32 %v1785, %v1785
    %v1824 = vmul.f32 %v1786, %v1786
    %v1825 = vmul.f32 %v1787, %v1787
    %v1826 = vmul.f32 %v1788, %v1788
    %v1827 = vmul.f32 %v1789, %v1789
    %v1828 = vmul.f32 %v1790, %v1790
    %v1829 = vmul.f32 %v1791, %v1791
    %v1830 = vadd.f32 %v1814, %v1815
    %v1831 = vadd.f32 %v1830, %v1816
    %v1832 = vadd.f32 %v1831, %v1817
    %v1833 = vadd.f32 %v1832, %v1818
    %v1834 = vadd.f32 %v1833, %v1819
    %v1835 = vadd.f32 %v1834, %v1820
    %v1836 = vadd.f32 %v1835, %v1821
    %v1837 = vadd.f32 %v1836, %v1822
    %v1838 = vadd.f32 %v1837, %v1823
    %v1839 = vadd.f32 %v1838, %v1824
    %v1840 = vadd.f32 %v1839, %v1825
    %v1841 = vadd.f32 %v1840, %v1826
    %v1842 = vadd.f32 %v1841, %v1827
    %v1843 = vadd.f32 %v1842, %v1828
    %v1844 = vadd.f32 %v1843, %v1829
    %v1845 = vrot.slane %v1844, 4
    %v1846 = vadd.f32 %v1844, %v1845
    %v1847 = vrot.slane %v1846, 2
    %v1848 = vadd.f32 %v1846, %v1847
    %v1849 = vrot.slane %v1848, 1
    %v1850 = vadd.f32 %v1848, %v1849
    %v1851 = vmul.f32 %v1850, %v1332
    %v1852 = vmul.f32 %v1813, %v1813
    %v1853 = vsub.f32 %v1851, %v1852
    %v1854 = vmax.f32 %v1853, 0.0
    %v1855 = vld [vmem:[#allocation13] sm:$0x1]
    %v1856 = vadd.f32 %v1854, 1e-05
    %v1857 = vrsqrt.pop %v1856
    %v1858 = vmul.f32 %v1857, %v1856
    %v1859 = vmul.f32 %v1858, %v1857
    %v1860 = vmul.f32 0.5, %v1859
    %v1861 = vsub.f32 1.5, %v1860
    %v1862 = vmul.f32 %v1857, %v1861
    %vm1863 = vweird.f32 %v1856
    %vm1864 = vweird.f32 %v1857
    %vm1865 = vmor %vm1863, %vm1864
    %v1866 = vsel %vm1865, %v1857, %v1862
    %v1867 = vmul.f32 %v1855, %v1866
    %v1868 = vld [vmem:[#allocation14] sm:$0x1]
    %v1869 = vmul.f32 %v1813, %v1867
    %v1870 = vsub.f32 %v1868, %v1869
    %v1872 = vperm.slane %v1867, 0
    %v1874 = vmul.f32 %v1776, %v1872
    %v1875 = vmul.f32 %v1777, %v1872
    %v1876 = vmul.f32 %v1778, %v1872
    %v1877 = vmul.f32 %v1779, %v1872
    %v1878 = vmul.f32 %v1780, %v1872
    %v1879 = vmul.f32 %v1781, %v1872
    %v1880 = vmul.f32 %v1782, %v1872
    %v1881 = vmul.f32 %v1783, %v1872
    %v1882 = vmul.f32 %v1784, %v1872
    %v1883 = vmul.f32 %v1785, %v1872
    %v1884 = vmul.f32 %v1786, %v1872
    %v1885 = vmul.f32 %v1787, %v1872
    %v1886 = vmul.f32 %v1788, %v1872
    %v1887 = vmul.f32 %v1789, %v1872
    %v1888 = vmul.f32 %v1790, %v1872
    %v1889 = vmul.f32 %v1791, %v1872
    %v1891 = vperm.slane %v1870, 0
    %v1893 = vadd.f32 %v1874, %v1891
    %v1894 = vadd.f32 %v1875, %v1891
    %v1895 = vadd.f32 %v1876, %v1891
    %v1896 = vadd.f32 %v1877, %v1891
    %v1897 = vadd.f32 %v1878, %v1891
    %v1898 = vadd.f32 %v1879, %v1891
    %v1899 = vadd.f32 %v1880, %v1891
    %v1900 = vadd.f32 %v1881, %v1891
    %v1901 = vadd.f32 %v1882, %v1891
    %v1902 = vadd.f32 %v1883, %v1891
    %v1903 = vadd.f32 %v1884, %v1891
    %v1904 = vadd.f32 %v1885, %v1891
    %v1905 = vadd.f32 %v1886, %v1891
    %v1906 = vadd.f32 %v1887, %v1891
    %v1907 = vadd.f32 %v1888, %v1891
    %v1908 = vadd.f32 %v1889, %v1891
    %v1909 = vpack.c.bf16 %v1894, %v1893
    %v1910 = vpack.c.bf16 %v1896, %v1895
    %v1911 = vpack.c.bf16 %v1898, %v1897
    %v1912 = vpack.c.bf16 %v1900, %v1899
    %v1913 = vpack.c.bf16 %v1902, %v1901
    %v1914 = vpack.c.bf16 %v1904, %v1903
    %v1915 = vpack.c.bf16 %v1906, %v1905
    %v1916 = vpack.c.bf16 %v1908, %v1907
    %v1917 = vld [vmem:[#allocation16] sm:$0xf]
    %v1918 = vld [vmem:[#allocation16 + $0x4] sm:$0xf]
    %v1919 = vld [vmem:[#allocation16 + $0x8] sm:$0xf]
    %v1920 = vld [vmem:[#allocation16 + $0xc] sm:$0xf]
    %v1921 = vld [vmem:[#allocation16 + $0x10] sm:$0xf]
    %v1922 = vld [vmem:[#allocation16 + $0x14] sm:$0xf]
    %v1923 = vld [vmem:[#allocation16 + $0x18] sm:$0xf]
    %v1924 = vld [vmem:[#allocation16 + $0x1c] sm:$0xf]
    %v1925 = vld [vmem:[#allocation16 + $0x20] sm:$0xf]
    %v1926 = vld [vmem:[#allocation16 + $0x24] sm:$0xf]
    %v1927 = vld [vmem:[#allocation16 + $0x28] sm:$0xf]
    %v1928 = vld [vmem:[#allocation16 + $0x2c] sm:$0xf]
    %v1929 = vld [vmem:[#allocation16 + $0x30] sm:$0xf]
    %v1930 = vld [vmem:[#allocation16 + $0x34] sm:$0xf]
    %v1931 = vld [vmem:[#allocation16 + $0x38] sm:$0xf]
    %v1932 = vld [vmem:[#allocation16 + $0x3c] sm:$0xf]
    %v1933 = vld [vmem:[#allocation17] sm:$0x1]
    %v1935 = vperm.slane %v1933, 0
    %v1953 = vunpack.c.l.b16 %v1917
    %v1954 = vunpack.c.l.b16 %v1918
    %v1955 = vunpack.c.l.b16 %v1919
    %v1956 = vunpack.c.l.b16 %v1920
    %v1957 = vunpack.c.l.b16 %v1921
    %v1958 = vunpack.c.l.b16 %v1922
    %v1959 = vunpack.c.l.b16 %v1923
    %v1960 = vunpack.c.l.b16 %v1924
    %v1961 = vunpack.c.l.b16 %v1925
    %v1962 = vunpack.c.l.b16 %v1926
    %v1963 = vunpack.c.l.b16 %v1927
    %v1964 = vunpack.c.l.b16 %v1928
    %v1965 = vunpack.c.l.b16 %v1929
    %v1966 = vunpack.c.l.b16 %v1930
    %v1967 = vunpack.c.l.b16 %v1931
    %v1968 = vunpack.c.l.b16 %v1932
    %v1969 = vpack.c.b16 %v1954, %v1953
    %v1970 = vpack.c.b16 %v1956, %v1955
    %v1971 = vpack.c.b16 %v1958, %v1957
    %v1972 = vpack.c.b16 %v1960, %v1959
    %v1973 = vpack.c.b16 %v1962, %v1961
    %v1974 = vpack.c.b16 %v1964, %v1963
    %v1975 = vpack.c.b16 %v1966, %v1965
    %v1976 = vpack.c.b16 %v1968, %v1967
    %1985 = vmatpush.bf16.msra.mxu0 %v1976
    %1986 = vmatpush.bf16.msra.mxu0 %v1975
    %1987 = vmatpush.bf16.msra.mxu0 %v1974
    %1988 = vmatpush.bf16.msra.mxu0 %v1973
    %1989 = vmatpush.bf16.msra.mxu0 %v1972
    %1990 = vmatpush.bf16.msra.mxu0 %v1971
    %1991 = vmatpush.bf16.msra.mxu0 %v1970
    %1992 = vmatpush.bf16.msra.mxu0 %v1969
    %1993 = vmatmul.bf16.gmra.mxu0 %v1909
    %v1994 = vpop.f32.mrf.mxu0
    %v1995 = vadd.f32 %v1935, %v1994
    %v1996 = vpop.f32.mrf.mxu0
    %v1997 = vadd.f32 %v1935, %v1996
    %1998 = vmatmul.bf16.gmra.mxu0 %v1910
    %v1999 = vpop.f32.mrf.mxu0
    %v2000 = vadd.f32 %v1935, %v1999
    %v2001 = vpop.f32.mrf.mxu0
    %v2002 = vadd.f32 %v1935, %v2001
    %2003 = vmatmul.bf16.gmra.mxu0 %v1911
    %v2004 = vpop.f32.mrf.mxu0
    %v2005 = vadd.f32 %v1935, %v2004
    %v2006 = vpop.f32.mrf.mxu0
    %v2007 = vadd.f32 %v1935, %v2006
    %2008 = vmatmul.bf16.gmra.mxu0 %v1912
    %v2009 = vpop.f32.mrf.mxu0
    %v2010 = vadd.f32 %v1935, %v2009
    %v2011 = vpop.f32.mrf.mxu0
    %v2012 = vadd.f32 %v1935, %v2011
    %2013 = vmatmul.bf16.gmra.mxu0 %v1913
    %v2014 = vpop.f32.mrf.mxu0
    %v2015 = vadd.f32 %v1935, %v2014
    %v2016 = vpop.f32.mrf.mxu0
    %v2017 = vadd.f32 %v1935, %v2016
    %2018 = vmatmul.bf16.gmra.mxu0 %v1914
    %v2019 = vpop.f32.mrf.mxu0
    %v2020 = vadd.f32 %v1935, %v2019
    %v2021 = vpop.f32.mrf.mxu0
    %v2022 = vadd.f32 %v1935, %v2021
    %2023 = vmatmul.bf16.gmra.mxu0 %v1915
    %v2024 = vpop.f32.mrf.mxu0
    %v2025 = vadd.f32 %v1935, %v2024
    %v2026 = vpop.f32.mrf.mxu0
    %v2027 = vadd.f32 %v1935, %v2026
    %2028 = vmatmul.bf16.gmra.mxu0 %v1916
    %v2029 = vpop.f32.mrf.mxu0
    %v2030 = vadd.f32 %v1935, %v2029
    %v2031 = vpop.f32.mrf.mxu0
    %v2032 = vadd.f32 %v1935, %v2031
    %2033 = vdwg.mxu0
    %v2034 = vmax.f32 %v1995, 0.0
    %v2035 = vmax.f32 %v1997, 0.0
    %v2036 = vmax.f32 %v2000, 0.0
    %v2037 = vmax.f32 %v2002, 0.0
    %v2038 = vmax.f32 %v2005, 0.0
    %v2039 = vmax.f32 %v2007, 0.0
    %v2040 = vmax.f32 %v2010, 0.0
    %v2041 = vmax.f32 %v2012, 0.0
    %v2042 = vmax.f32 %v2015, 0.0
    %v2043 = vmax.f32 %v2017, 0.0
    %v2044 = vmax.f32 %v2020, 0.0
    %v2045 = vmax.f32 %v2022, 0.0
    %v2046 = vmax.f32 %v2025, 0.0
    %v2047 = vmax.f32 %v2027, 0.0
    %v2048 = vmax.f32 %v2030, 0.0
    %v2049 = vmax.f32 %v2032, 0.0
    %v2050 = vadd.f32 %v2034, %v2035
    %v2051 = vadd.f32 %v2050, %v2036
    %v2052 = vadd.f32 %v2051, %v2037
    %v2053 = vadd.f32 %v2052, %v2038
    %v2054 = vadd.f32 %v2053, %v2039
    %v2055 = vadd.f32 %v2054, %v2040
    %v2056 = vadd.f32 %v2055, %v2041
    %v2057 = vadd.f32 %v2056, %v2042
    %v2058 = vadd.f32 %v2057, %v2043
    %v2059 = vadd.f32 %v2058, %v2044
    %v2060 = vadd.f32 %v2059, %v2045
    %v2061 = vadd.f32 %v2060, %v2046
    %v2062 = vadd.f32 %v2061, %v2047
    %v2063 = vadd.f32 %v2062, %v2048
    %v2064 = vadd.f32 %v2063, %v2049
    %v2065 = vrot.slane %v2064, 4
    %v2066 = vadd.f32 %v2064, %v2065
    %v2067 = vrot.slane %v2066, 2
    %v2068 = vadd.f32 %v2066, %v2067
    %v2069 = vrot.slane %v2068, 1
    %v2070 = vadd.f32 %v2068, %v2069
    %v2071 = vmul.f32 %v2070, %v1332
    %v2072 = vmul.f32 %v2034, %v2034
    %v2073 = vmul.f32 %v2035, %v2035
    %v2074 = vmul.f32 %v2036, %v2036
    %v2075 = vmul.f32 %v2037, %v2037
    %v2076 = vmul.f32 %v2038, %v2038
    %v2077 = vmul.f32 %v2039, %v2039
    %v2078 = vmul.f32 %v2040, %v2040
    %v2079 = vmul.f32 %v2041, %v2041
    %v2080 = vmul.f32 %v2042, %v2042
    %v2081 = vmul.f32 %v2043, %v2043
    %v2082 = vmul.f32 %v2044, %v2044
    %v2083 = vmul.f32 %v2045, %v2045
    %v2084 = vmul.f32 %v2046, %v2046
    %v2085 = vmul.f32 %v2047, %v2047
    %v2086 = vmul.f32 %v2048, %v2048
    %v2087 = vmul.f32 %v2049, %v2049
    %v2088 = vadd.f32 %v2072, %v2073
    %v2089 = vadd.f32 %v2088, %v2074
    %v2090 = vadd.f32 %v2089, %v2075
    %v2091 = vadd.f32 %v2090, %v2076
    %v2092 = vadd.f32 %v2091, %v2077
    %v2093 = vadd.f32 %v2092, %v2078
    %v2094 = vadd.f32 %v2093, %v2079
    %v2095 = vadd.f32 %v2094, %v2080
    %v2096 = vadd.f32 %v2095, %v2081
    %v2097 = vadd.f32 %v2096, %v2082
    %v2098 = vadd.f32 %v2097, %v2083
    %v2099 = vadd.f32 %v2098, %v2084
    %v2100 = vadd.f32 %v2099, %v2085
    %v2101 = vadd.f32 %v2100, %v2086
    %v2102 = vadd.f32 %v2101, %v2087
    %v2103 = vrot.slane %v2102, 4
    %v2104 = vadd.f32 %v2102, %v2103
    %v2105 = vrot.slane %v2104, 2
    %v2106 = vadd.f32 %v2104, %v2105
    %v2107 = vrot.slane %v2106, 1
    %v2108 = vadd.f32 %v2106, %v2107
    %v2109 = vmul.f32 %v2108, %v1332
    %v2110 = vmul.f32 %v2071, %v2071
    %v2111 = vsub.f32 %v2109, %v2110
    %v2112 = vmax.f32 %v2111, 0.0
    %v2113 = vld [vmem:[#allocation19] sm:$0x1]
    %v2114 = vadd.f32 %v2112, 1e-05
    %v2115 = vrsqrt.pop %v2114
    %v2116 = vmul.f32 %v2115, %v2114
    %v2117 = vmul.f32 %v2116, %v2115
    %v2118 = vmul.f32 0.5, %v2117
    %v2119 = vsub.f32 1.5, %v2118
    %v2120 = vmul.f32 %v2115, %v2119
    %vm2121 = vweird.f32 %v2114
    %vm2122 = vweird.f32 %v2115
    %vm2123 = vmor %vm2121, %vm2122
    %v2124 = vsel %vm2123, %v2115, %v2120
    %v2125 = vmul.f32 %v2113, %v2124
    %v2126 = vld [vmem:[#allocation20] sm:$0x1]
    %v2127 = vmul.f32 %v2071, %v2125
    %v2128 = vsub.f32 %v2126, %v2127
    %v2130 = vperm.slane %v2125, 0
    %v2132 = vmul.f32 %v2034, %v2130
    %v2133 = vmul.f32 %v2035, %v2130
    %v2134 = vmul.f32 %v2036, %v2130
    %v2135 = vmul.f32 %v2037, %v2130
    %v2136 = vmul.f32 %v2038, %v2130
    %v2137 = vmul.f32 %v2039, %v2130
    %v2138 = vmul.f32 %v2040, %v2130
    %v2139 = vmul.f32 %v2041, %v2130
    %v2140 = vmul.f32 %v2042, %v2130
    %v2141 = vmul.f32 %v2043, %v2130
    %v2142 = vmul.f32 %v2044, %v2130
    %v2143 = vmul.f32 %v2045, %v2130
    %v2144 = vmul.f32 %v2046, %v2130
    %v2145 = vmul.f32 %v2047, %v2130
    %v2146 = vmul.f32 %v2048, %v2130
    %v2147 = vmul.f32 %v2049, %v2130
    %v2149 = vperm.slane %v2128, 0
    %v2151 = vadd.f32 %v2132, %v2149
    %v2152 = vadd.f32 %v2133, %v2149
    %v2153 = vadd.f32 %v2134, %v2149
    %v2154 = vadd.f32 %v2135, %v2149
    %v2155 = vadd.f32 %v2136, %v2149
    %v2156 = vadd.f32 %v2137, %v2149
    %v2157 = vadd.f32 %v2138, %v2149
    %v2158 = vadd.f32 %v2139, %v2149
    %v2159 = vadd.f32 %v2140, %v2149
    %v2160 = vadd.f32 %v2141, %v2149
    %v2161 = vadd.f32 %v2142, %v2149
    %v2162 = vadd.f32 %v2143, %v2149
    %v2163 = vadd.f32 %v2144, %v2149
    %v2164 = vadd.f32 %v2145, %v2149
    %v2165 = vadd.f32 %v2146, %v2149
    %v2166 = vadd.f32 %v2147, %v2149
    %v2167 = vpack.c.bf16 %v2152, %v2151
    %v2168 = vpack.c.bf16 %v2154, %v2153
    %v2169 = vpack.c.bf16 %v2156, %v2155
    %v2170 = vpack.c.bf16 %v2158, %v2157
    %v2171 = vpack.c.bf16 %v2160, %v2159
    %v2172 = vpack.c.bf16 %v2162, %v2161
    %v2173 = vpack.c.bf16 %v2164, %v2163
    %v2174 = vpack.c.bf16 %v2166, %v2165
    %v2175 = vld [vmem:[#allocation22] sm:$0xf]
    %v2176 = vld [vmem:[#allocation22 + $0x4] sm:$0xf]
    %v2177 = vld [vmem:[#allocation22 + $0x8] sm:$0xf]
    %v2178 = vld [vmem:[#allocation22 + $0xc] sm:$0xf]
    %v2179 = vld [vmem:[#allocation22 + $0x10] sm:$0xf]
    %v2180 = vld [vmem:[#allocation22 + $0x14] sm:$0xf]
    %v2181 = vld [vmem:[#allocation22 + $0x18] sm:$0xf]
    %v2182 = vld [vmem:[#allocation22 + $0x1c] sm:$0xf]
    %v2183 = vld [vmem:[#allocation22 + $0x20] sm:$0xf]
    %v2184 = vld [vmem:[#allocation22 + $0x24] sm:$0xf]
    %v2185 = vld [vmem:[#allocation22 + $0x28] sm:$0xf]
    %v2186 = vld [vmem:[#allocation22 + $0x2c] sm:$0xf]
    %v2187 = vld [vmem:[#allocation22 + $0x30] sm:$0xf]
    %v2188 = vld [vmem:[#allocation22 + $0x34] sm:$0xf]
    %v2189 = vld [vmem:[#allocation22 + $0x38] sm:$0xf]
    %v2190 = vld [vmem:[#allocation22 + $0x3c] sm:$0xf]
    %v2191 = vld [vmem:[%s29] sm:$0x1]
    %v2193 = vperm.slane %v2191, 0
    %v2211 = vunpack.c.l.b16 %v2175
    %v2212 = vunpack.c.l.b16 %v2176
    %v2213 = vunpack.c.l.b16 %v2177
    %v2214 = vunpack.c.l.b16 %v2178
    %v2215 = vunpack.c.l.b16 %v2179
    %v2216 = vunpack.c.l.b16 %v2180
    %v2217 = vunpack.c.l.b16 %v2181
    %v2218 = vunpack.c.l.b16 %v2182
    %v2219 = vunpack.c.l.b16 %v2183
    %v2220 = vunpack.c.l.b16 %v2184
    %v2221 = vunpack.c.l.b16 %v2185
    %v2222 = vunpack.c.l.b16 %v2186
    %v2223 = vunpack.c.l.b16 %v2187
    %v2224 = vunpack.c.l.b16 %v2188
    %v2225 = vunpack.c.l.b16 %v2189
    %v2226 = vunpack.c.l.b16 %v2190
    %v2227 = vpack.c.b16 %v2212, %v2211
    %v2228 = vpack.c.b16 %v2214, %v2213
    %v2229 = vpack.c.b16 %v2216, %v2215
    %v2230 = vpack.c.b16 %v2218, %v2217
    %v2231 = vpack.c.b16 %v2220, %v2219
    %v2232 = vpack.c.b16 %v2222, %v2221
    %v2233 = vpack.c.b16 %v2224, %v2223
    %v2234 = vpack.c.b16 %v2226, %v2225
    %2243 = vmatpush.bf16.msra.mxu0 %v2234
    %2244 = vmatpush.bf16.msra.mxu0 %v2233
    %2245 = vmatpush.bf16.msra.mxu0 %v2232
    %2246 = vmatpush.bf16.msra.mxu0 %v2231
    %2247 = vmatpush.bf16.msra.mxu0 %v2230
    %2248 = vmatpush.bf16.msra.mxu0 %v2229
    %2249 = vmatpush.bf16.msra.mxu0 %v2228
    %2250 = vmatpush.bf16.msra.mxu0 %v2227
    %2251 = vmatmul.bf16.gmra.mxu0 %v2167
    %v2252 = vpop.f32.mrf.mxu0
    %v2253 = vadd.f32 %v2193, %v2252
    %v2254 = vpop.f32.mrf.mxu0
    %v2255 = vadd.f32 %v2193, %v2254
    %2256 = vmatmul.bf16.gmra.mxu0 %v2168
    %v2257 = vpop.f32.mrf.mxu0
    %v2258 = vadd.f32 %v2193, %v2257
    %v2259 = vpop.f32.mrf.mxu0
    %v2260 = vadd.f32 %v2193, %v2259
    %2261 = vmatmul.bf16.gmra.mxu0 %v2169
    %v2262 = vpop.f32.mrf.mxu0
    %v2263 = vadd.f32 %v2193, %v2262
    %v2264 = vpop.f32.mrf.mxu0
    %v2265 = vadd.f32 %v2193, %v2264
    %2266 = vmatmul.bf16.gmra.mxu0 %v2170
    %v2267 = vpop.f32.mrf.mxu0
    %v2268 = vadd.f32 %v2193, %v2267
    %v2269 = vpop.f32.mrf.mxu0
    %v2270 = vadd.f32 %v2193, %v2269
    %2271 = vmatmul.bf16.gmra.mxu0 %v2171
    %v2272 = vpop.f32.mrf.mxu0
    %v2273 = vadd.f32 %v2193, %v2272
    %v2274 = vpop.f32.mrf.mxu0
    %v2275 = vadd.f32 %v2193, %v2274
    %2276 = vmatmul.bf16.gmra.mxu0 %v2172
    %v2277 = vpop.f32.mrf.mxu0
    %v2278 = vadd.f32 %v2193, %v2277
    %v2279 = vpop.f32.mrf.mxu0
    %v2280 = vadd.f32 %v2193, %v2279
    %2281 = vmatmul.bf16.gmra.mxu0 %v2173
    %v2282 = vpop.f32.mrf.mxu0
    %v2283 = vadd.f32 %v2193, %v2282
    %v2284 = vpop.f32.mrf.mxu0
    %v2285 = vadd.f32 %v2193, %v2284
    %2286 = vmatmul.bf16.gmra.mxu0 %v2174
    %v2287 = vpop.f32.mrf.mxu0
    %v2288 = vadd.f32 %v2193, %v2287
    %v2289 = vpop.f32.mrf.mxu0
    %v2290 = vadd.f32 %v2193, %v2289
    %2291 = vdwg.mxu0
    %vm2292 = vcmask 261120
    %2293 = vst.msk [vmem:[%s61] sm:$0xff] %vm2292, %v2253
    %2294 = vst.msk [vmem:[%s61 + $0x8] sm:$0xff] %vm2292, %v2255
    %2295 = vst.msk [vmem:[%s61 + $0x10] sm:$0xff] %vm2292, %v2258
    %2296 = vst.msk [vmem:[%s61 + $0x18] sm:$0xff] %vm2292, %v2260
    %2297 = vst.msk [vmem:[%s61 + $0x20] sm:$0xff] %vm2292, %v2263
    %2298 = vst.msk [vmem:[%s61 + $0x28] sm:$0xff] %vm2292, %v2265
    %2299 = vst.msk [vmem:[%s61 + $0x30] sm:$0xff] %vm2292, %v2268
    %2300 = vst.msk [vmem:[%s61 + $0x38] sm:$0xff] %vm2292, %v2270
    %2301 = vst.msk [vmem:[%s61 + $0x40] sm:$0xff] %vm2292, %v2273
    %2302 = vst.msk [vmem:[%s61 + $0x48] sm:$0xff] %vm2292, %v2275
    %2303 = vst.msk [vmem:[%s61 + $0x50] sm:$0xff] %vm2292, %v2278
    %2304 = vst.msk [vmem:[%s61 + $0x58] sm:$0xff] %vm2292, %v2280
    %2305 = vst.msk [vmem:[%s61 + $0x60] sm:$0xff] %vm2292, %v2283
    %2306 = vst.msk [vmem:[%s61 + $0x68] sm:$0xff] %vm2292, %v2285
    %2307 = vst.msk [vmem:[%s61 + $0x70] sm:$0xff] %vm2292, %v2288
    %2308 = vst.msk [vmem:[%s61 + $0x78] sm:$0xff] %vm2292, %v2290
    %v2309 = vpack.c.bf16 %v2255, %v2253
    %v2310 = vpack.c.bf16 %v2260, %v2258
    %v2311 = vpack.c.bf16 %v2265, %v2263
    %v2312 = vpack.c.bf16 %v2270, %v2268
    %v2313 = vpack.c.bf16 %v2275, %v2273
    %v2314 = vpack.c.bf16 %v2280, %v2278
    %v2315 = vpack.c.bf16 %v2285, %v2283
    %v2316 = vpack.c.bf16 %v2290, %v2288
    %v2317 = vld [vmem:[#allocation23] sm:$0xf]
    %v2318 = vld [vmem:[#allocation23 + $0x4] sm:$0xf]
    %v2319 = vld [vmem:[#allocation23 + $0x8] sm:$0xf]
    %v2320 = vld [vmem:[#allocation23 + $0xc] sm:$0xf]
    %v2321 = vld [vmem:[#allocation23 + $0x10] sm:$0xf]
    %v2322 = vld [vmem:[#allocation23 + $0x14] sm:$0xf]
    %v2323 = vld [vmem:[#allocation23 + $0x18] sm:$0xf]
    %v2324 = vld [vmem:[#allocation23 + $0x1c] sm:$0xf]
    %v2325 = vld [vmem:[#allocation23 + $0x20] sm:$0xf]
    %v2326 = vld [vmem:[#allocation23 + $0x24] sm:$0xf]
    %v2327 = vld [vmem:[#allocation23 + $0x28] sm:$0xf]
    %v2328 = vld [vmem:[#allocation23 + $0x2c] sm:$0xf]
    %v2329 = vld [vmem:[#allocation23 + $0x30] sm:$0xf]
    %v2330 = vld [vmem:[#allocation23 + $0x34] sm:$0xf]
    %v2331 = vld [vmem:[#allocation23 + $0x38] sm:$0xf]
    %v2332 = vld [vmem:[#allocation23 + $0x3c] sm:$0xf]
    %v2333 = vld [vmem:[%s33] sm:$0x1]
    %v2335 = vperm.slane %v2333, 0
    %v2353 = vunpack.c.l.b16 %v2317
    %v2354 = vunpack.c.l.b16 %v2318
    %v2355 = vunpack.c.l.b16 %v2319
    %v2356 = vunpack.c.l.b16 %v2320
    %v2357 = vunpack.c.l.b16 %v2321
    %v2358 = vunpack.c.l.b16 %v2322
    %v2359 = vunpack.c.l.b16 %v2323
    %v2360 = vunpack.c.l.b16 %v2324
    %v2361 = vunpack.c.l.b16 %v2325
    %v2362 = vunpack.c.l.b16 %v2326
    %v2363 = vunpack.c.l.b16 %v2327
    %v2364 = vunpack.c.l.b16 %v2328
    %v2365 = vunpack.c.l.b16 %v2329
    %v2366 = vunpack.c.l.b16 %v2330
    %v2367 = vunpack.c.l.b16 %v2331
    %v2368 = vunpack.c.l.b16 %v2332
    %v2369 = vpack.c.b16 %v2354, %v2353
    %v2370 = vpack.c.b16 %v2356, %v2355
    %v2371 = vpack.c.b16 %v2358, %v2357
    %v2372 = vpack.c.b16 %v2360, %v2359
    %v2373 = vpack.c.b16 %v2362, %v2361
    %v2374 = vpack.c.b16 %v2364, %v2363
    %v2375 = vpack.c.b16 %v2366, %v2365
    %v2376 = vpack.c.b16 %v2368, %v2367
    %2385 = vmatpush.bf16.msra.mxu0 %v2376
    %2386 = vmatpush.bf16.msra.mxu0 %v2375
    %2387 = vmatpush.bf16.msra.mxu0 %v2374
    %2388 = vmatpush.bf16.msra.mxu0 %v2373
    %2389 = vmatpush.bf16.msra.mxu0 %v2372
    %2390 = vmatpush.bf16.msra.mxu0 %v2371
    %2391 = vmatpush.bf16.msra.mxu0 %v2370
    %2392 = vmatpush.bf16.msra.mxu0 %v2369
    %2393 = vmatmul.bf16.gmra.mxu0 %v2309
    %v2394 = vpop.f32.mrf.mxu0
    %v2395 = vadd.f32 %v2335, %v2394
    %v2396 = vpop.f32.mrf.mxu0
    %v2397 = vadd.f32 %v2335, %v2396
    %2398 = vmatmul.bf16.gmra.mxu0 %v2310
    %v2399 = vpop.f32.mrf.mxu0
    %v2400 = vadd.f32 %v2335, %v2399
    %v2401 = vpop.f32.mrf.mxu0
    %v2402 = vadd.f32 %v2335, %v2401
    %2403 = vmatmul.bf16.gmra.mxu0 %v2311
    %v2404 = vpop.f32.mrf.mxu0
    %v2405 = vadd.f32 %v2335, %v2404
    %v2406 = vpop.f32.mrf.mxu0
    %v2407 = vadd.f32 %v2335, %v2406
    %2408 = vmatmul.bf16.gmra.mxu0 %v2312
    %v2409 = vpop.f32.mrf.mxu0
    %v2410 = vadd.f32 %v2335, %v2409
    %v2411 = vpop.f32.mrf.mxu0
    %v2412 = vadd.f32 %v2335, %v2411
    %2413 = vmatmul.bf16.gmra.mxu0 %v2313
    %v2414 = vpop.f32.mrf.mxu0
    %v2415 = vadd.f32 %v2335, %v2414
    %v2416 = vpop.f32.mrf.mxu0
    %v2417 = vadd.f32 %v2335, %v2416
    %2418 = vmatmul.bf16.gmra.mxu0 %v2314
    %v2419 = vpop.f32.mrf.mxu0
    %v2420 = vadd.f32 %v2335, %v2419
    %v2421 = vpop.f32.mrf.mxu0
    %v2422 = vadd.f32 %v2335, %v2421
    %2423 = vmatmul.bf16.gmra.mxu0 %v2315
    %v2424 = vpop.f32.mrf.mxu0
    %v2425 = vadd.f32 %v2335, %v2424
    %v2426 = vpop.f32.mrf.mxu0
    %v2427 = vadd.f32 %v2335, %v2426
    %2428 = vmatmul.bf16.gmra.mxu0 %v2316
    %v2429 = vpop.f32.mrf.mxu0
    %v2430 = vadd.f32 %v2335, %v2429
    %v2431 = vpop.f32.mrf.mxu0
    %v2432 = vadd.f32 %v2335, %v2431
    %2433 = vdwg.mxu0
    %v2434 = vmax.f32 %v2395, 0.0
    %v2435 = vmax.f32 %v2397, 0.0
    %v2436 = vmax.f32 %v2400, 0.0
    %v2437 = vmax.f32 %v2402, 0.0
    %v2438 = vmax.f32 %v2405, 0.0
    %v2439 = vmax.f32 %v2407, 0.0
    %v2440 = vmax.f32 %v2410, 0.0
    %v2441 = vmax.f32 %v2412, 0.0
    %v2442 = vmax.f32 %v2415, 0.0
    %v2443 = vmax.f32 %v2417, 0.0
    %v2444 = vmax.f32 %v2420, 0.0
    %v2445 = vmax.f32 %v2422, 0.0
    %v2446 = vmax.f32 %v2425, 0.0
    %v2447 = vmax.f32 %v2427, 0.0
    %v2448 = vmax.f32 %v2430, 0.0
    %v2449 = vmax.f32 %v2432, 0.0
    %v2450 = vadd.f32 %v2434, %v2435
    %v2451 = vadd.f32 %v2450, %v2436
    %v2452 = vadd.f32 %v2451, %v2437
    %v2453 = vadd.f32 %v2452, %v2438
    %v2454 = vadd.f32 %v2453, %v2439
    %v2455 = vadd.f32 %v2454, %v2440
    %v2456 = vadd.f32 %v2455, %v2441
    %v2457 = vadd.f32 %v2456, %v2442
    %v2458 = vadd.f32 %v2457, %v2443
    %v2459 = vadd.f32 %v2458, %v2444
    %v2460 = vadd.f32 %v2459, %v2445
    %v2461 = vadd.f32 %v2460, %v2446
    %v2462 = vadd.f32 %v2461, %v2447
    %v2463 = vadd.f32 %v2462, %v2448
    %v2464 = vadd.f32 %v2463, %v2449
    %v2465 = vrot.slane %v2464, 4
    %v2466 = vadd.f32 %v2464, %v2465
    %v2467 = vrot.slane %v2466, 2
    %v2468 = vadd.f32 %v2466, %v2467
    %v2469 = vrot.slane %v2468, 1
    %v2470 = vadd.f32 %v2468, %v2469
    %v2471 = vmul.f32 %v2470, %v1332
    %v2472 = vmul.f32 %v2434, %v2434
    %v2473 = vmul.f32 %v2435, %v2435
    %v2474 = vmul.f32 %v2436, %v2436
    %v2475 = vmul.f32 %v2437, %v2437
    %v2476 = vmul.f32 %v2438, %v2438
    %v2477 = vmul.f32 %v2439, %v2439
    %v2478 = vmul.f32 %v2440, %v2440
    %v2479 = vmul.f32 %v2441, %v2441
    %v2480 = vmul.f32 %v2442, %v2442
    %v2481 = vmul.f32 %v2443, %v2443
    %v2482 = vmul.f32 %v2444, %v2444
    %v2483 = vmul.f32 %v2445, %v2445
    %v2484 = vmul.f32 %v2446, %v2446
    %v2485 = vmul.f32 %v2447, %v2447
    %v2486 = vmul.f32 %v2448, %v2448
    %v2487 = vmul.f32 %v2449, %v2449
    %v2488 = vadd.f32 %v2472, %v2473
    %v2489 = vadd.f32 %v2488, %v2474
    %v2490 = vadd.f32 %v2489, %v2475
    %v2491 = vadd.f32 %v2490, %v2476
    %v2492 = vadd.f32 %v2491, %v2477
    %v2493 = vadd.f32 %v2492, %v2478
    %v2494 = vadd.f32 %v2493, %v2479
    %v2495 = vadd.f32 %v2494, %v2480
    %v2496 = vadd.f32 %v2495, %v2481
    %v2497 = vadd.f32 %v2496, %v2482
    %v2498 = vadd.f32 %v2497, %v2483
    %v2499 = vadd.f32 %v2498, %v2484
    %v2500 = vadd.f32 %v2499, %v2485
    %v2501 = vadd.f32 %v2500, %v2486
    %v2502 = vadd.f32 %v2501, %v2487
    %v2503 = vrot.slane %v2502, 4
    %v2504 = vadd.f32 %v2502, %v2503
    %v2505 = vrot.slane %v2504, 2
    %v2506 = vadd.f32 %v2504, %v2505
    %v2507 = vrot.slane %v2506, 1
    %v2508 = vadd.f32 %v2506, %v2507
    %v2509 = vmul.f32 %v2508, %v1332
    %v2510 = vmul.f32 %v2471, %v2471
    %v2511 = vsub.f32 %v2509, %v2510
    %v2512 = vmax.f32 %v2511, 0.0
    %v2513 = vld [vmem:[%s35] sm:$0x1]
    %v2514 = vadd.f32 %v2512, 1e-05
    %v2515 = vrsqrt.pop %v2514
    %v2516 = vmul.f32 %v2515, %v2514
    %v2517 = vmul.f32 %v2516, %v2515
    %v2518 = vmul.f32 0.5, %v2517
    %v2519 = vsub.f32 1.5, %v2518
    %v2520 = vmul.f32 %v2515, %v2519
    %vm2521 = vweird.f32 %v2514
    %vm2522 = vweird.f32 %v2515
    %vm2523 = vmor %vm2521, %vm2522
    %v2524 = vsel %vm2523, %v2515, %v2520
    %v2525 = vmul.f32 %v2513, %v2524
    %v2526 = vld [vmem:[%s37] sm:$0x1]
    %v2527 = vmul.f32 %v2471, %v2525
    %v2528 = vsub.f32 %v2526, %v2527
    %v2530 = vperm.slane %v2525, 0
    %v2532 = vmul.f32 %v2434, %v2530
    %v2533 = vmul.f32 %v2435, %v2530
    %v2534 = vmul.f32 %v2436, %v2530
    %v2535 = vmul.f32 %v2437, %v2530
    %v2536 = vmul.f32 %v2438, %v2530
    %v2537 = vmul.f32 %v2439, %v2530
    %v2538 = vmul.f32 %v2440, %v2530
    %v2539 = vmul.f32 %v2441, %v2530
    %v2540 = vmul.f32 %v2442, %v2530
    %v2541 = vmul.f32 %v2443, %v2530
    %v2542 = vmul.f32 %v2444, %v2530
    %v2543 = vmul.f32 %v2445, %v2530
    %v2544 = vmul.f32 %v2446, %v2530
    %v2545 = vmul.f32 %v2447, %v2530
    %v2546 = vmul.f32 %v2448, %v2530
    %v2547 = vmul.f32 %v2449, %v2530
    %v2549 = vperm.slane %v2528, 0
    %v2551 = vadd.f32 %v2532, %v2549
    %v2552 = vadd.f32 %v2533, %v2549
    %v2553 = vadd.f32 %v2534, %v2549
    %v2554 = vadd.f32 %v2535, %v2549
    %v2555 = vadd.f32 %v2536, %v2549
    %v2556 = vadd.f32 %v2537, %v2549
    %v2557 = vadd.f32 %v2538, %v2549
    %v2558 = vadd.f32 %v2539, %v2549
    %v2559 = vadd.f32 %v2540, %v2549
    %v2560 = vadd.f32 %v2541, %v2549
    %v2561 = vadd.f32 %v2542, %v2549
    %v2562 = vadd.f32 %v2543, %v2549
    %v2563 = vadd.f32 %v2544, %v2549
    %v2564 = vadd.f32 %v2545, %v2549
    %v2565 = vadd.f32 %v2546, %v2549
    %v2566 = vadd.f32 %v2547, %v2549
    %v2567 = vpack.c.bf16 %v2552, %v2551
    %v2568 = vpack.c.bf16 %v2554, %v2553
    %v2569 = vpack.c.bf16 %v2556, %v2555
    %v2570 = vpack.c.bf16 %v2558, %v2557
    %v2571 = vpack.c.bf16 %v2560, %v2559
    %v2572 = vpack.c.bf16 %v2562, %v2561
    %v2573 = vpack.c.bf16 %v2564, %v2563
    %v2574 = vpack.c.bf16 %v2566, %v2565
    %v2575 = vld [vmem:[#allocation25] sm:$0xf]
    %v2576 = vld [vmem:[#allocation25 + $0x4] sm:$0xf]
    %v2577 = vld [vmem:[#allocation25 + $0x8] sm:$0xf]
    %v2578 = vld [vmem:[#allocation25 + $0xc] sm:$0xf]
    %v2579 = vld [vmem:[#allocation25 + $0x10] sm:$0xf]
    %v2580 = vld [vmem:[#allocation25 + $0x14] sm:$0xf]
    %v2581 = vld [vmem:[#allocation25 + $0x18] sm:$0xf]
    %v2582 = vld [vmem:[#allocation25 + $0x1c] sm:$0xf]
    %v2583 = vld [vmem:[#allocation25 + $0x20] sm:$0xf]
    %v2584 = vld [vmem:[#allocation25 + $0x24] sm:$0xf]
    %v2585 = vld [vmem:[#allocation25 + $0x28] sm:$0xf]
    %v2586 = vld [vmem:[#allocation25 + $0x2c] sm:$0xf]
    %v2587 = vld [vmem:[#allocation25 + $0x30] sm:$0xf]
    %v2588 = vld [vmem:[#allocation25 + $0x34] sm:$0xf]
    %v2589 = vld [vmem:[#allocation25 + $0x38] sm:$0xf]
    %v2590 = vld [vmem:[#allocation25 + $0x3c] sm:$0xf]
    %v2591 = vld [vmem:[%s41] sm:$0x1]
    %v2593 = vperm.slane %v2591, 0
    %v2611 = vunpack.c.l.b16 %v2575
    %v2612 = vunpack.c.l.b16 %v2576
    %v2613 = vunpack.c.l.b16 %v2577
    %v2614 = vunpack.c.l.b16 %v2578
    %v2615 = vunpack.c.l.b16 %v2579
    %v2616 = vunpack.c.l.b16 %v2580
    %v2617 = vunpack.c.l.b16 %v2581
    %v2618 = vunpack.c.l.b16 %v2582
    %v2619 = vunpack.c.l.b16 %v2583
    %v2620 = vunpack.c.l.b16 %v2584
    %v2621 = vunpack.c.l.b16 %v2585
    %v2622 = vunpack.c.l.b16 %v2586
    %v2623 = vunpack.c.l.b16 %v2587
    %v2624 = vunpack.c.l.b16 %v2588
    %v2625 = vunpack.c.l.b16 %v2589
    %v2626 = vunpack.c.l.b16 %v2590
    %v2627 = vpack.c.b16 %v2612, %v2611
    %v2628 = vpack.c.b16 %v2614, %v2613
    %v2629 = vpack.c.b16 %v2616, %v2615
    %v2630 = vpack.c.b16 %v2618, %v2617
    %v2631 = vpack.c.b16 %v2620, %v2619
    %v2632 = vpack.c.b16 %v2622, %v2621
    %v2633 = vpack.c.b16 %v2624, %v2623
    %v2634 = vpack.c.b16 %v2626, %v2625
    %2643 = vmatpush.bf16.msra.mxu0 %v2634
    %2644 = vmatpush.bf16.msra.mxu0 %v2633
    %2645 = vmatpush.bf16.msra.mxu0 %v2632
    %2646 = vmatpush.bf16.msra.mxu0 %v2631
    %2647 = vmatpush.bf16.msra.mxu0 %v2630
    %2648 = vmatpush.bf16.msra.mxu0 %v2629
    %2649 = vmatpush.bf16.msra.mxu0 %v2628
    %2650 = vmatpush.bf16.msra.mxu0 %v2627
    %2651 = vmatmul.bf16.gmra.mxu0 %v2567
    %v2652 = vpop.f32.mrf.mxu0
    %v2653 = vadd.f32 %v2593, %v2652
    %v2654 = vpop.f32.mrf.mxu0
    %v2655 = vadd.f32 %v2593, %v2654
    %2656 = vmatmul.bf16.gmra.mxu0 %v2568
    %v2657 = vpop.f32.mrf.mxu0
    %v2658 = vadd.f32 %v2593, %v2657
    %v2659 = vpop.f32.mrf.mxu0
    %v2660 = vadd.f32 %v2593, %v2659
    %2661 = vmatmul.bf16.gmra.mxu0 %v2569
    %v2662 = vpop.f32.mrf.mxu0
    %v2663 = vadd.f32 %v2593, %v2662
    %v2664 = vpop.f32.mrf.mxu0
    %v2665 = vadd.f32 %v2593, %v2664
    %2666 = vmatmul.bf16.gmra.mxu0 %v2570
    %v2667 = vpop.f32.mrf.mxu0
    %v2668 = vadd.f32 %v2593, %v2667
    %v2669 = vpop.f32.mrf.mxu0
    %v2670 = vadd.f32 %v2593, %v2669
    %2671 = vmatmul.bf16.gmra.mxu0 %v2571
    %v2672 = vpop.f32.mrf.mxu0
    %v2673 = vadd.f32 %v2593, %v2672
    %v2674 = vpop.f32.mrf.mxu0
    %v2675 = vadd.f32 %v2593, %v2674
    %2676 = vmatmul.bf16.gmra.mxu0 %v2572
    %v2677 = vpop.f32.mrf.mxu0
    %v2678 = vadd.f32 %v2593, %v2677
    %v2679 = vpop.f32.mrf.mxu0
    %v2680 = vadd.f32 %v2593, %v2679
    %2681 = vmatmul.bf16.gmra.mxu0 %v2573
    %v2682 = vpop.f32.mrf.mxu0
    %v2683 = vadd.f32 %v2593, %v2682
    %v2684 = vpop.f32.mrf.mxu0
    %v2685 = vadd.f32 %v2593, %v2684
    %2686 = vmatmul.bf16.gmra.mxu0 %v2574
    %v2687 = vpop.f32.mrf.mxu0
    %v2688 = vadd.f32 %v2593, %v2687
    %v2689 = vpop.f32.mrf.mxu0
    %v2690 = vadd.f32 %v2593, %v2689
    %2691 = vdwg.mxu0
    %v2692 = vmax.f32 %v2653, 0.0
    %v2693 = vmax.f32 %v2655, 0.0
    %v2694 = vmax.f32 %v2658, 0.0
    %v2695 = vmax.f32 %v2660, 0.0
    %v2696 = vmax.f32 %v2663, 0.0
    %v2697 = vmax.f32 %v2665, 0.0
    %v2698 = vmax.f32 %v2668, 0.0
    %v2699 = vmax.f32 %v2670, 0.0
    %v2700 = vmax.f32 %v2673, 0.0
    %v2701 = vmax.f32 %v2675, 0.0
    %v2702 = vmax.f32 %v2678, 0.0
    %v2703 = vmax.f32 %v2680, 0.0
    %v2704 = vmax.f32 %v2683, 0.0
    %v2705 = vmax.f32 %v2685, 0.0
    %v2706 = vmax.f32 %v2688, 0.0
    %v2707 = vmax.f32 %v2690, 0.0
    %v2708 = vadd.f32 %v2692, %v2693
    %v2709 = vadd.f32 %v2708, %v2694
    %v2710 = vadd.f32 %v2709, %v2695
    %v2711 = vadd.f32 %v2710, %v2696
    %v2712 = vadd.f32 %v2711, %v2697
    %v2713 = vadd.f32 %v2712, %v2698
    %v2714 = vadd.f32 %v2713, %v2699
    %v2715 = vadd.f32 %v2714, %v2700
    %v2716 = vadd.f32 %v2715, %v2701
    %v2717 = vadd.f32 %v2716, %v2702
    %v2718 = vadd.f32 %v2717, %v2703
    %v2719 = vadd.f32 %v2718, %v2704
    %v2720 = vadd.f32 %v2719, %v2705
    %v2721 = vadd.f32 %v2720, %v2706
    %v2722 = vadd.f32 %v2721, %v2707
    %v2723 = vrot.slane %v2722, 4
    %v2724 = vadd.f32 %v2722, %v2723
    %v2725 = vrot.slane %v2724, 2
    %v2726 = vadd.f32 %v2724, %v2725
    %v2727 = vrot.slane %v2726, 1
    %v2728 = vadd.f32 %v2726, %v2727
    %v2729 = vmul.f32 %v2728, %v1332
    %v2730 = vmul.f32 %v2692, %v2692
    %v2731 = vmul.f32 %v2693, %v2693
    %v2732 = vmul.f32 %v2694, %v2694
    %v2733 = vmul.f32 %v2695, %v2695
    %v2734 = vmul.f32 %v2696, %v2696
    %v2735 = vmul.f32 %v2697, %v2697
    %v2736 = vmul.f32 %v2698, %v2698
    %v2737 = vmul.f32 %v2699, %v2699
    %v2738 = vmul.f32 %v2700, %v2700
    %v2739 = vmul.f32 %v2701, %v2701
    %v2740 = vmul.f32 %v2702, %v2702
    %v2741 = vmul.f32 %v2703, %v2703
    %v2742 = vmul.f32 %v2704, %v2704
    %v2743 = vmul.f32 %v2705, %v2705
    %v2744 = vmul.f32 %v2706, %v2706
    %v2745 = vmul.f32 %v2707, %v2707
    %v2746 = vadd.f32 %v2730, %v2731
    %v2747 = vadd.f32 %v2746, %v2732
    %v2748 = vadd.f32 %v2747, %v2733
    %v2749 = vadd.f32 %v2748, %v2734
    %v2750 = vadd.f32 %v2749, %v2735
    %v2751 = vadd.f32 %v2750, %v2736
    %v2752 = vadd.f32 %v2751, %v2737
    %v2753 = vadd.f32 %v2752, %v2738
    %v2754 = vadd.f32 %v2753, %v2739
    %v2755 = vadd.f32 %v2754, %v2740
    %v2756 = vadd.f32 %v2755, %v2741
    %v2757 = vadd.f32 %v2756, %v2742
    %v2758 = vadd.f32 %v2757, %v2743
    %v2759 = vadd.f32 %v2758, %v2744
    %v2760 = vadd.f32 %v2759, %v2745
    %v2761 = vrot.slane %v2760, 4
    %v2762 = vadd.f32 %v2760, %v2761
    %v2763 = vrot.slane %v2762, 2
    %v2764 = vadd.f32 %v2762, %v2763
    %v2765 = vrot.slane %v2764, 1
    %v2766 = vadd.f32 %v2764, %v2765
    %v2767 = vmul.f32 %v2766, %v1332
    %v2768 = vmul.f32 %v2729, %v2729
    %v2769 = vsub.f32 %v2767, %v2768
    %v2770 = vmax.f32 %v2769, 0.0
    %v2771 = vld [vmem:[%s43] sm:$0x1]
    %v2772 = vadd.f32 %v2770, 1e-05
    %v2773 = vrsqrt.pop %v2772
    %v2774 = vmul.f32 %v2773, %v2772
    %v2775 = vmul.f32 %v2774, %v2773
    %v2776 = vmul.f32 0.5, %v2775
    %v2777 = vsub.f32 1.5, %v2776
    %v2778 = vmul.f32 %v2773, %v2777
    %vm2779 = vweird.f32 %v2772
    %vm2780 = vweird.f32 %v2773
    %vm2781 = vmor %vm2779, %vm2780
    %v2782 = vsel %vm2781, %v2773, %v2778
    %v2783 = vmul.f32 %v2771, %v2782
    %v2784 = vld [vmem:[%s45] sm:$0x1]
    %v2785 = vmul.f32 %v2729, %v2783
    %v2786 = vsub.f32 %v2784, %v2785
    %v2788 = vperm.slane %v2783, 0
    %v2790 = vmul.f32 %v2692, %v2788
    %v2791 = vmul.f32 %v2693, %v2788
    %v2792 = vmul.f32 %v2694, %v2788
    %v2793 = vmul.f32 %v2695, %v2788
    %v2794 = vmul.f32 %v2696, %v2788
    %v2795 = vmul.f32 %v2697, %v2788
    %v2796 = vmul.f32 %v2698, %v2788
    %v2797 = vmul.f32 %v2699, %v2788
    %v2798 = vmul.f32 %v2700, %v2788
    %v2799 = vmul.f32 %v2701, %v2788
    %v2800 = vmul.f32 %v2702, %v2788
    %v2801 = vmul.f32 %v2703, %v2788
    %v2802 = vmul.f32 %v2704, %v2788
    %v2803 = vmul.f32 %v2705, %v2788
    %v2804 = vmul.f32 %v2706, %v2788
    %v2805 = vmul.f32 %v2707, %v2788
    %v2807 = vperm.slane %v2786, 0
    %v2809 = vadd.f32 %v2790, %v2807
    %v2810 = vadd.f32 %v2791, %v2807
    %v2811 = vadd.f32 %v2792, %v2807
    %v2812 = vadd.f32 %v2793, %v2807
    %v2813 = vadd.f32 %v2794, %v2807
    %v2814 = vadd.f32 %v2795, %v2807
    %v2815 = vadd.f32 %v2796, %v2807
    %v2816 = vadd.f32 %v2797, %v2807
    %v2817 = vadd.f32 %v2798, %v2807
    %v2818 = vadd.f32 %v2799, %v2807
    %v2819 = vadd.f32 %v2800, %v2807
    %v2820 = vadd.f32 %v2801, %v2807
    %v2821 = vadd.f32 %v2802, %v2807
    %v2822 = vadd.f32 %v2803, %v2807
    %v2823 = vadd.f32 %v2804, %v2807
    %v2824 = vadd.f32 %v2805, %v2807
    %v2825 = vpack.c.bf16 %v2810, %v2809
    %v2826 = vpack.c.bf16 %v2812, %v2811
    %v2827 = vpack.c.bf16 %v2814, %v2813
    %v2828 = vpack.c.bf16 %v2816, %v2815
    %v2829 = vpack.c.bf16 %v2818, %v2817
    %v2830 = vpack.c.bf16 %v2820, %v2819
    %v2831 = vpack.c.bf16 %v2822, %v2821
    %v2832 = vpack.c.bf16 %v2824, %v2823
    %v2833 = vld [vmem:[#allocation26] sm:$0xff]
    %v2834 = vld [vmem:[#allocation26 + $0x8] sm:$0xff]
    %v2835 = vld [vmem:[#allocation26 + $0x10] sm:$0xff]
    %v2836 = vld [vmem:[#allocation26 + $0x18] sm:$0xff]
    %v2837 = vld [vmem:[#allocation26 + $0x20] sm:$0xff]
    %v2838 = vld [vmem:[#allocation26 + $0x28] sm:$0xff]
    %v2839 = vld [vmem:[#allocation26 + $0x30] sm:$0xff]
    %v2840 = vld [vmem:[#allocation26 + $0x38] sm:$0xff]
    %v2841 = vld [vmem:[#allocation26 + $0x40] sm:$0xff]
    %v2842 = vld [vmem:[#allocation26 + $0x48] sm:$0xff]
    %v2843 = vld [vmem:[#allocation26 + $0x50] sm:$0xff]
    %v2844 = vld [vmem:[#allocation26 + $0x58] sm:$0xff]
    %v2845 = vld [vmem:[#allocation26 + $0x60] sm:$0xff]
    %v2846 = vld [vmem:[#allocation26 + $0x68] sm:$0xff]
    %v2847 = vld [vmem:[#allocation26 + $0x70] sm:$0xff]
    %v2848 = vld [vmem:[#allocation26 + $0x78] sm:$0xff]
    %v2849 = vld [vmem:[%s49] sm:$0x3]
    %v2851 = vperm.slane %v2849, 0
    %v2852 = vperm.slane %v2849, 1
    %v2871 = vunpack.c.l.b16 %v2833
    %v2872 = vunpack.c.h.b16 %v2833
    %v2873 = vunpack.c.l.b16 %v2834
    %v2874 = vunpack.c.h.b16 %v2834
    %v2875 = vunpack.c.l.b16 %v2835
    %v2876 = vunpack.c.h.b16 %v2835
    %v2877 = vunpack.c.l.b16 %v2836
    %v2878 = vunpack.c.h.b16 %v2836
    %v2879 = vunpack.c.l.b16 %v2837
    %v2880 = vunpack.c.h.b16 %v2837
    %v2881 = vunpack.c.l.b16 %v2838
    %v2882 = vunpack.c.h.b16 %v2838
    %v2883 = vunpack.c.l.b16 %v2839
    %v2884 = vunpack.c.h.b16 %v2839
    %v2885 = vunpack.c.l.b16 %v2840
    %v2886 = vunpack.c.h.b16 %v2840
    %v2887 = vunpack.c.l.b16 %v2841
    %v2888 = vunpack.c.h.b16 %v2841
    %v2889 = vunpack.c.l.b16 %v2842
    %v2890 = vunpack.c.h.b16 %v2842
    %v2891 = vunpack.c.l.b16 %v2843
    %v2892 = vunpack.c.h.b16 %v2843
    %v2893 = vunpack.c.l.b16 %v2844
    %v2894 = vunpack.c.h.b16 %v2844
    %v2895 = vunpack.c.l.b16 %v2845
    %v2896 = vunpack.c.h.b16 %v2845
    %v2897 = vunpack.c.l.b16 %v2846
    %v2898 = vunpack.c.h.b16 %v2846
    %v2899 = vunpack.c.l.b16 %v2847
    %v2900 = vunpack.c.h.b16 %v2847
    %v2901 = vunpack.c.l.b16 %v2848
    %v2902 = vunpack.c.h.b16 %v2848
    %v2903 = vpack.c.b16 %v2873, %v2871
    %v2904 = vpack.c.b16 %v2874, %v2872
    %v2905 = vpack.c.b16 %v2877, %v2875
    %v2906 = vpack.c.b16 %v2878, %v2876
    %v2907 = vpack.c.b16 %v2881, %v2879
    %v2908 = vpack.c.b16 %v2882, %v2880
    %v2909 = vpack.c.b16 %v2885, %v2883
    %v2910 = vpack.c.b16 %v2886, %v2884
    %v2911 = vpack.c.b16 %v2889, %v2887
    %v2912 = vpack.c.b16 %v2890, %v2888
    %v2913 = vpack.c.b16 %v2893, %v2891
    %v2914 = vpack.c.b16 %v2894, %v2892
    %v2915 = vpack.c.b16 %v2897, %v2895
    %v2916 = vpack.c.b16 %v2898, %v2896
    %v2917 = vpack.c.b16 %v2901, %v2899
    %v2918 = vpack.c.b16 %v2902, %v2900
    %2935 = vmatpush.bf16.msra.mxu0 %v2917
    %2936 = vmatpush.bf16.msra.mxu0 %v2915
    %2937 = vmatpush.bf16.msra.mxu0 %v2913
    %2938 = vmatpush.bf16.msra.mxu0 %v2911
    %2939 = vmatpush.bf16.msra.mxu0 %v2909
    %2940 = vmatpush.bf16.msra.mxu0 %v2907
    %2941 = vmatpush.bf16.msra.mxu0 %v2905
    %2942 = vmatpush.bf16.msra.mxu0 %v2903
    %2943 = vmatmul.bf16.gmra.mxu0 %v2825
    %v2944 = vpop.f32.mrf.mxu0
    %v2945 = vadd.f32 %v2851, %v2944
    %v2946 = vpop.f32.mrf.mxu0
    %v2947 = vadd.f32 %v2851, %v2946
    %2948 = vmatmul.bf16.gmra.mxu0 %v2826
    %v2949 = vpop.f32.mrf.mxu0
    %v2950 = vadd.f32 %v2851, %v2949
    %v2951 = vpop.f32.mrf.mxu0
    %v2952 = vadd.f32 %v2851, %v2951
    %2953 = vmatmul.bf16.gmra.mxu0 %v2827
    %v2954 = vpop.f32.mrf.mxu0
    %v2955 = vadd.f32 %v2851, %v2954
    %v2956 = vpop.f32.mrf.mxu0
    %v2957 = vadd.f32 %v2851, %v2956
    %2958 = vmatmul.bf16.gmra.mxu0 %v2828
    %v2959 = vpop.f32.mrf.mxu0
    %v2960 = vadd.f32 %v2851, %v2959
    %v2961 = vpop.f32.mrf.mxu0
    %v2962 = vadd.f32 %v2851, %v2961
    %2963 = vmatmul.bf16.gmra.mxu0 %v2829
    %v2964 = vpop.f32.mrf.mxu0
    %v2965 = vadd.f32 %v2851, %v2964
    %v2966 = vpop.f32.mrf.mxu0
    %v2967 = vadd.f32 %v2851, %v2966
    %2968 = vmatmul.bf16.gmra.mxu0 %v2830
    %v2969 = vpop.f32.mrf.mxu0
    %v2970 = vadd.f32 %v2851, %v2969
    %v2971 = vpop.f32.mrf.mxu0
    %v2972 = vadd.f32 %v2851, %v2971
    %2973 = vmatmul.bf16.gmra.mxu0 %v2831
    %v2974 = vpop.f32.mrf.mxu0
    %v2975 = vadd.f32 %v2851, %v2974
    %v2976 = vpop.f32.mrf.mxu0
    %v2977 = vadd.f32 %v2851, %v2976
    %2978 = vmatmul.bf16.gmra.mxu0 %v2832
    %v2979 = vpop.f32.mrf.mxu0
    %v2980 = vadd.f32 %v2851, %v2979
    %v2981 = vpop.f32.mrf.mxu0
    %v2982 = vadd.f32 %v2851, %v2981
    %2983 = vdwg.mxu0
    %2984 = vmatpush.bf16.msra.mxu0 %v2918
    %2985 = vmatpush.bf16.msra.mxu0 %v2916
    %2986 = vmatpush.bf16.msra.mxu0 %v2914
    %2987 = vmatpush.bf16.msra.mxu0 %v2912
    %2988 = vmatpush.bf16.msra.mxu0 %v2910
    %2989 = vmatpush.bf16.msra.mxu0 %v2908
    %2990 = vmatpush.bf16.msra.mxu0 %v2906
    %2991 = vmatpush.bf16.msra.mxu0 %v2904
    %2992 = vmatmul.bf16.gmra.mxu0 %v2825
    %v2993 = vpop.f32.mrf.mxu0
    %v2994 = vadd.f32 %v2852, %v2993
    %v2995 = vpop.f32.mrf.mxu0
    %v2996 = vadd.f32 %v2852, %v2995
    %2997 = vmatmul.bf16.gmra.mxu0 %v2826
    %v2998 = vpop.f32.mrf.mxu0
    %v2999 = vadd.f32 %v2852, %v2998
    %v3000 = vpop.f32.mrf.mxu0
    %v3001 = vadd.f32 %v2852, %v3000
    %3002 = vmatmul.bf16.gmra.mxu0 %v2827
    %v3003 = vpop.f32.mrf.mxu0
    %v3004 = vadd.f32 %v2852, %v3003
    %v3005 = vpop.f32.mrf.mxu0
    %v3006 = vadd.f32 %v2852, %v3005
    %3007 = vmatmul.bf16.gmra.mxu0 %v2828
    %v3008 = vpop.f32.mrf.mxu0
    %v3009 = vadd.f32 %v2852, %v3008
    %v3010 = vpop.f32.mrf.mxu0
    %v3011 = vadd.f32 %v2852, %v3010
    %3012 = vmatmul.bf16.gmra.mxu0 %v2829
    %v3013 = vpop.f32.mrf.mxu0
    %v3014 = vadd.f32 %v2852, %v3013
    %v3015 = vpop.f32.mrf.mxu0
    %v3016 = vadd.f32 %v2852, %v3015
    %3017 = vmatmul.bf16.gmra.mxu0 %v2830
    %v3018 = vpop.f32.mrf.mxu0
    %v3019 = vadd.f32 %v2852, %v3018
    %v3020 = vpop.f32.mrf.mxu0
    %v3021 = vadd.f32 %v2852, %v3020
    %3022 = vmatmul.bf16.gmra.mxu0 %v2831
    %v3023 = vpop.f32.mrf.mxu0
    %v3024 = vadd.f32 %v2852, %v3023
    %v3025 = vpop.f32.mrf.mxu0
    %v3026 = vadd.f32 %v2852, %v3025
    %3027 = vmatmul.bf16.gmra.mxu0 %v2832
    %v3028 = vpop.f32.mrf.mxu0
    %v3029 = vadd.f32 %v2852, %v3028
    %v3030 = vpop.f32.mrf.mxu0
    %v3031 = vadd.f32 %v2852, %v3030
    %3032 = vdwg.mxu0
    %v3033 = vmax.f32 %v2945, 0.0
    %v3034 = vmax.f32 %v2994, 0.0
    %v3035 = vmax.f32 %v2947, 0.0
    %v3036 = vmax.f32 %v2996, 0.0
    %v3037 = vmax.f32 %v2950, 0.0
    %v3038 = vmax.f32 %v2999, 0.0
    %v3039 = vmax.f32 %v2952, 0.0
    %v3040 = vmax.f32 %v3001, 0.0
    %v3041 = vmax.f32 %v2955, 0.0
    %v3042 = vmax.f32 %v3004, 0.0
    %v3043 = vmax.f32 %v2957, 0.0
    %v3044 = vmax.f32 %v3006, 0.0
    %v3045 = vmax.f32 %v2960, 0.0
    %v3046 = vmax.f32 %v3009, 0.0
    %v3047 = vmax.f32 %v2962, 0.0
    %v3048 = vmax.f32 %v3011, 0.0
    %v3049 = vmax.f32 %v2965, 0.0
    %v3050 = vmax.f32 %v3014, 0.0
    %v3051 = vmax.f32 %v2967, 0.0
    %v3052 = vmax.f32 %v3016, 0.0
    %v3053 = vmax.f32 %v2970, 0.0
    %v3054 = vmax.f32 %v3019, 0.0
    %v3055 = vmax.f32 %v2972, 0.0
    %v3056 = vmax.f32 %v3021, 0.0
    %v3057 = vmax.f32 %v2975, 0.0
    %v3058 = vmax.f32 %v3024, 0.0
    %v3059 = vmax.f32 %v2977, 0.0
    %v3060 = vmax.f32 %v3026, 0.0
    %v3061 = vmax.f32 %v2980, 0.0
    %v3062 = vmax.f32 %v3029, 0.0
    %v3063 = vmax.f32 %v2982, 0.0
    %v3064 = vmax.f32 %v3031, 0.0
    %v3065 = vadd.f32 %v3033, %v3035
    %v3066 = vadd.f32 %v3065, %v3037
    %v3067 = vadd.f32 %v3066, %v3039
    %v3068 = vadd.f32 %v3067, %v3041
    %v3069 = vadd.f32 %v3068, %v3043
    %v3070 = vadd.f32 %v3069, %v3045
    %v3071 = vadd.f32 %v3070, %v3047
    %v3072 = vadd.f32 %v3071, %v3049
    %v3073 = vadd.f32 %v3072, %v3051
    %v3074 = vadd.f32 %v3073, %v3053
    %v3075 = vadd.f32 %v3074, %v3055
    %v3076 = vadd.f32 %v3075, %v3057
    %v3077 = vadd.f32 %v3076, %v3059
    %v3078 = vadd.f32 %v3077, %v3061
    %v3079 = vadd.f32 %v3078, %v3063
    %v3080 = vrot.slane %v3079, 4
    %v3081 = vadd.f32 %v3079, %v3080
    %v3082 = vrot.slane %v3081, 2
    %v3083 = vadd.f32 %v3081, %v3082
    %v3084 = vrot.slane %v3083, 1
    %v3085 = vadd.f32 %v3083, %v3084
    %v3086 = vadd.f32 %v3034, %v3036
    %v3087 = vadd.f32 %v3086, %v3038
    %v3088 = vadd.f32 %v3087, %v3040
    %v3089 = vadd.f32 %v3088, %v3042
    %v3090 = vadd.f32 %v3089, %v3044
    %v3091 = vadd.f32 %v3090, %v3046
    %v3092 = vadd.f32 %v3091, %v3048
    %v3093 = vadd.f32 %v3092, %v3050
    %v3094 = vadd.f32 %v3093, %v3052
    %v3095 = vadd.f32 %v3094, %v3054
    %v3096 = vadd.f32 %v3095, %v3056
    %v3097 = vadd.f32 %v3096, %v3058
    %v3098 = vadd.f32 %v3097, %v3060
    %v3099 = vadd.f32 %v3098, %v3062
    %v3100 = vadd.f32 %v3099, %v3064
    %v3101 = vrot.slane %v3100, 4
    %v3102 = vadd.f32 %v3100, %v3101
    %v3103 = vrot.slane %v3102, 2
    %v3104 = vadd.f32 %v3102, %v3103
    %v3105 = vrot.slane %v3104, 1
    %v3106 = vadd.f32 %v3104, %v3105
    %v3107 = vmul.f32 %v3085, %v1332
    %v3108 = vmul.f32 %v3106, %v1332
    %v3109 = vmul.f32 %v3033, %v3033
    %v3110 = vmul.f32 %v3034, %v3034
    %v3111 = vmul.f32 %v3035, %v3035
    %v3112 = vmul.f32 %v3036, %v3036
    %v3113 = vmul.f32 %v3037, %v3037
    %v3114 = vmul.f32 %v3038, %v3038
    %v3115 = vmul.f32 %v3039, %v3039
    %v3116 = vmul.f32 %v3040, %v3040
    %v3117 = vmul.f32 %v3041, %v3041
    %v3118 = vmul.f32 %v3042, %v3042
    %v3119 = vmul.f32 %v3043, %v3043
    %v3120 = vmul.f32 %v3044, %v3044
    %v3121 = vmul.f32 %v3045, %v3045
    %v3122 = vmul.f32 %v3046, %v3046
    %v3123 = vmul.f32 %v3047, %v3047
    %v3124 = vmul.f32 %v3048, %v3048
    %v3125 = vmul.f32 %v3049, %v3049
    %v3126 = vmul.f32 %v3050, %v3050
    %v3127 = vmul.f32 %v3051, %v3051
    %v3128 = vmul.f32 %v3052, %v3052
    %v3129 = vmul.f32 %v3053, %v3053
    %v3130 = vmul.f32 %v3054, %v3054
    %v3131 = vmul.f32 %v3055, %v3055
    %v3132 = vmul.f32 %v3056, %v3056
    %v3133 = vmul.f32 %v3057, %v3057
    %v3134 = vmul.f32 %v3058, %v3058
    %v3135 = vmul.f32 %v3059, %v3059
    %v3136 = vmul.f32 %v3060, %v3060
    %v3137 = vmul.f32 %v3061, %v3061
    %v3138 = vmul.f32 %v3062, %v3062
    %v3139 = vmul.f32 %v3063, %v3063
    %v3140 = vmul.f32 %v3064, %v3064
    %v3141 = vadd.f32 %v3109, %v3111
    %v3142 = vadd.f32 %v3141, %v3113
    %v3143 = vadd.f32 %v3142, %v3115
    %v3144 = vadd.f32 %v3143, %v3117
    %v3145 = vadd.f32 %v3144, %v3119
    %v3146 = vadd.f32 %v3145, %v3121
    %v3147 = vadd.f32 %v3146, %v3123
    %v3148 = vadd.f32 %v3147, %v3125
    %v3149 = vadd.f32 %v3148, %v3127
    %v3150 = vadd.f32 %v3149, %v3129
    %v3151 = vadd.f32 %v3150, %v3131
    %v3152 = vadd.f32 %v3151, %v3133
    %v3153 = vadd.f32 %v3152, %v3135
    %v3154 = vadd.f32 %v3153, %v3137
    %v3155 = vadd.f32 %v3154, %v3139
    %v3156 = vrot.slane %v3155, 4
    %v3157 = vadd.f32 %v3155, %v3156
    %v3158 = vrot.slane %v3157, 2
    %v3159 = vadd.f32 %v3157, %v3158
    %v3160 = vrot.slane %v3159, 1
    %v3161 = vadd.f32 %v3159, %v3160
    %v3162 = vadd.f32 %v3110, %v3112
    %v3163 = vadd.f32 %v3162, %v3114
    %v3164 = vadd.f32 %v3163, %v3116
    %v3165 = vadd.f32 %v3164, %v3118
    %v3166 = vadd.f32 %v3165, %v3120
    %v3167 = vadd.f32 %v3166, %v3122
    %v3168 = vadd.f32 %v3167, %v3124
    %v3169 = vadd.f32 %v3168, %v3126
    %v3170 = vadd.f32 %v3169, %v3128
    %v3171 = vadd.f32 %v3170, %v3130
    %v3172 = vadd.f32 %v3171, %v3132
    %v3173 = vadd.f32 %v3172, %v3134
    %v3174 = vadd.f32 %v3173, %v3136
    %v3175 = vadd.f32 %v3174, %v3138
    %v3176 = vadd.f32 %v3175, %v3140
    %v3177 = vrot.slane %v3176, 4
    %v3178 = vadd.f32 %v3176, %v3177
    %v3179 = vrot.slane %v3178, 2
    %v3180 = vadd.f32 %v3178, %v3179
    %v3181 = vrot.slane %v3180, 1
    %v3182 = vadd.f32 %v3180, %v3181
    %v3183 = vmul.f32 %v3161, %v1332
    %v3184 = vmul.f32 %v3182, %v1332
    %v3185 = vmul.f32 %v3107, %v3107
    %v3186 = vmul.f32 %v3108, %v3108
    %v3187 = vsub.f32 %v3183, %v3185
    %v3188 = vsub.f32 %v3184, %v3186
    %v3189 = vmax.f32 %v3187, 0.0
    %v3190 = vmax.f32 %v3188, 0.0
    %v3191 = vld [vmem:[%s51] sm:$0x3]
    %v3192 = vadd.f32 %v3189, 1e-05
    %v3193 = vadd.f32 %v3190, 1e-05
    %v3194 = vrsqrt.pop %v3192
    %v3195 = vmul.f32 %v3194, %v3192
    %v3196 = vmul.f32 %v3195, %v3194
    %v3197 = vmul.f32 0.5, %v3196
    %v3198 = vsub.f32 1.5, %v3197
    %v3199 = vmul.f32 %v3194, %v3198
    %vm3200 = vweird.f32 %v3192
    %vm3201 = vweird.f32 %v3194
    %vm3202 = vmor %vm3200, %vm3201
    %v3203 = vsel %vm3202, %v3194, %v3199
    %v3204 = vrsqrt.pop %v3193
    %v3205 = vmul.f32 %v3204, %v3193
    %v3206 = vmul.f32 %v3205, %v3204
    %v3207 = vmul.f32 0.5, %v3206
    %v3208 = vsub.f32 1.5, %v3207
    %v3209 = vmul.f32 %v3204, %v3208
    %vm3210 = vweird.f32 %v3193
    %vm3211 = vweird.f32 %v3204
    %vm3212 = vmor %vm3210, %vm3211
    %v3213 = vsel %vm3212, %v3204, %v3209
    %v3216 = vrot.slane %v3213, 7
    %v3217 = vsel %vm1443, %v3203, %v3216
    %v3219 = vmul.f32 %v3191, %v3217
    %v3220 = vld [vmem:[%s53] sm:$0x3]
    %v3222 = vperm.slane %v3219, 0
    %v3223 = vperm.slane %v3219, 1
    %v3226 = vmul.f32 %v3107, %v3222
    %v3227 = vmul.f32 %v3108, %v3223
    %v3230 = vrot.slane %v3227, 7
    %v3231 = vsel %vm1443, %v3226, %v3230
    %v3233 = vsub.f32 %v3220, %v3231
    %v3234 = vmul.f32 %v3033, %v3222
    %v3235 = vmul.f32 %v3034, %v3223
    %v3236 = vmul.f32 %v3035, %v3222
    %v3237 = vmul.f32 %v3036, %v3223
    %v3238 = vmul.f32 %v3037, %v3222
    %v3239 = vmul.f32 %v3038, %v3223
    %v3240 = vmul.f32 %v3039, %v3222
    %v3241 = vmul.f32 %v3040, %v3223
    %v3242 = vmul.f32 %v3041, %v3222
    %v3243 = vmul.f32 %v3042, %v3223
    %v3244 = vmul.f32 %v3043, %v3222
    %v3245 = vmul.f32 %v3044, %v3223
    %v3246 = vmul.f32 %v3045, %v3222
    %v3247 = vmul.f32 %v3046, %v3223
    %v3248 = vmul.f32 %v3047, %v3222
    %v3249 = vmul.f32 %v3048, %v3223
    %v3250 = vmul.f32 %v3049, %v3222
    %v3251 = vmul.f32 %v3050, %v3223
    %v3252 = vmul.f32 %v3051, %v3222
    %v3253 = vmul.f32 %v3052, %v3223
    %v3254 = vmul.f32 %v3053, %v3222
    %v3255 = vmul.f32 %v3054, %v3223
    %v3256 = vmul.f32 %v3055, %v3222
    %v3257 = vmul.f32 %v3056, %v3223
    %v3258 = vmul.f32 %v3057, %v3222
    %v3259 = vmul.f32 %v3058, %v3223
    %v3260 = vmul.f32 %v3059, %v3222
    %v3261 = vmul.f32 %v3060, %v3223
    %v3262 = vmul.f32 %v3061, %v3222
    %v3263 = vmul.f32 %v3062, %v3223
    %v3264 = vmul.f32 %v3063, %v3222
    %v3265 = vmul.f32 %v3064, %v3223
    %v3267 = vperm.slane %v3233, 0
    %v3268 = vperm.slane %v3233, 1
    %v3271 = vadd.f32 %v3234, %v3267
    %v3272 = vadd.f32 %v3235, %v3268
    %v3273 = vadd.f32 %v3236, %v3267
    %v3274 = vadd.f32 %v3237, %v3268
    %v3275 = vadd.f32 %v3238, %v3267
    %v3276 = vadd.f32 %v3239, %v3268
    %v3277 = vadd.f32 %v3240, %v3267
    %v3278 = vadd.f32 %v3241, %v3268
    %v3279 = vadd.f32 %v3242, %v3267
    %v3280 = vadd.f32 %v3243, %v3268
    %v3281 = vadd.f32 %v3244, %v3267
    %v3282 = vadd.f32 %v3245, %v3268
    %v3283 = vadd.f32 %v3246, %v3267
    %v3284 = vadd.f32 %v3247, %v3268
    %v3285 = vadd.f32 %v3248, %v3267
    %v3286 = vadd.f32 %v3249, %v3268
    %v3287 = vadd.f32 %v3250, %v3267
    %v3288 = vadd.f32 %v3251, %v3268
    %v3289 = vadd.f32 %v3252, %v3267
    %v3290 = vadd.f32 %v3253, %v3268
    %v3291 = vadd.f32 %v3254, %v3267
    %v3292 = vadd.f32 %v3255, %v3268
    %v3293 = vadd.f32 %v3256, %v3267
    %v3294 = vadd.f32 %v3257, %v3268
    %v3295 = vadd.f32 %v3258, %v3267
    %v3296 = vadd.f32 %v3259, %v3268
    %v3297 = vadd.f32 %v3260, %v3267
    %v3298 = vadd.f32 %v3261, %v3268
    %v3299 = vadd.f32 %v3262, %v3267
    %v3300 = vadd.f32 %v3263, %v3268
    %v3301 = vadd.f32 %v3264, %v3267
    %v3302 = vadd.f32 %v3265, %v3268
    %v3303 = vpack.c.bf16 %v3273, %v3271
    %v3304 = vpack.c.bf16 %v3274, %v3272
    %v3305 = vpack.c.bf16 %v3277, %v3275
    %v3306 = vpack.c.bf16 %v3278, %v3276
    %v3307 = vpack.c.bf16 %v3281, %v3279
    %v3308 = vpack.c.bf16 %v3282, %v3280
    %v3309 = vpack.c.bf16 %v3285, %v3283
    %v3310 = vpack.c.bf16 %v3286, %v3284
    %v3311 = vpack.c.bf16 %v3289, %v3287
    %v3312 = vpack.c.bf16 %v3290, %v3288
    %v3313 = vpack.c.bf16 %v3293, %v3291
    %v3314 = vpack.c.bf16 %v3294, %v3292
    %v3315 = vpack.c.bf16 %v3297, %v3295
    %v3316 = vpack.c.bf16 %v3298, %v3296
    %v3317 = vpack.c.bf16 %v3301, %v3299
    %v3318 = vpack.c.bf16 %v3302, %v3300
    %v3319 = vld [vmem:[#allocation28] sm:$0xff]
    %v3320 = vld [vmem:[#allocation28 + $0x8] sm:$0xff]
    %v3321 = vld [vmem:[#allocation28 + $0x10] sm:$0xff]
    %v3322 = vld [vmem:[#allocation28 + $0x18] sm:$0xff]
    %v3323 = vld [vmem:[#allocation28 + $0x20] sm:$0xff]
    %v3324 = vld [vmem:[#allocation28 + $0x28] sm:$0xff]
    %v3325 = vld [vmem:[#allocation28 + $0x30] sm:$0xff]
    %v3326 = vld [vmem:[#allocation28 + $0x38] sm:$0xff]
    %v3327 = vld [vmem:[#allocation28 + $0x40] sm:$0xff]
    %v3328 = vld [vmem:[#allocation28 + $0x48] sm:$0xff]
    %v3329 = vld [vmem:[#allocation28 + $0x50] sm:$0xff]
    %v3330 = vld [vmem:[#allocation28 + $0x58] sm:$0xff]
    %v3331 = vld [vmem:[#allocation28 + $0x60] sm:$0xff]
    %v3332 = vld [vmem:[#allocation28 + $0x68] sm:$0xff]
    %v3333 = vld [vmem:[#allocation28 + $0x70] sm:$0xff]
    %v3334 = vld [vmem:[#allocation28 + $0x78] sm:$0xff]
    %v3335 = vld [vmem:[#allocation28 + $0x80] sm:$0xff]
    %v3336 = vld [vmem:[#allocation28 + $0x88] sm:$0xff]
    %v3337 = vld [vmem:[#allocation28 + $0x90] sm:$0xff]
    %v3338 = vld [vmem:[#allocation28 + $0x98] sm:$0xff]
    %v3339 = vld [vmem:[#allocation28 + $0xa0] sm:$0xff]
    %v3340 = vld [vmem:[#allocation28 + $0xa8] sm:$0xff]
    %v3341 = vld [vmem:[#allocation28 + $0xb0] sm:$0xff]
    %v3342 = vld [vmem:[#allocation28 + $0xb8] sm:$0xff]
    %v3343 = vld [vmem:[#allocation28 + $0xc0] sm:$0xff]
    %v3344 = vld [vmem:[#allocation28 + $0xc8] sm:$0xff]
    %v3345 = vld [vmem:[#allocation28 + $0xd0] sm:$0xff]
    %v3346 = vld [vmem:[#allocation28 + $0xd8] sm:$0xff]
    %v3347 = vld [vmem:[#allocation28 + $0xe0] sm:$0xff]
    %v3348 = vld [vmem:[#allocation28 + $0xe8] sm:$0xff]
    %v3349 = vld [vmem:[#allocation28 + $0xf0] sm:$0xff]
    %v3350 = vld [vmem:[#allocation28 + $0xf8] sm:$0xff]
    %v3351 = vld [vmem:[#allocation28 + $0x100] sm:$0xff]
    %v3352 = vld [vmem:[#allocation28 + $0x108] sm:$0xff]
    %v3353 = vld [vmem:[#allocation28 + $0x110] sm:$0xff]
    %v3354 = vld [vmem:[#allocation28 + $0x118] sm:$0xff]
    %v3355 = vld [vmem:[#allocation28 + $0x120] sm:$0xff]
    %v3356 = vld [vmem:[#allocation28 + $0x128] sm:$0xff]
    %v3357 = vld [vmem:[#allocation28 + $0x130] sm:$0xff]
    %v3358 = vld [vmem:[#allocation28 + $0x138] sm:$0xff]
    %v3359 = vld [vmem:[#allocation28 + $0x140] sm:$0xff]
    %v3360 = vld [vmem:[#allocation28 + $0x148] sm:$0xff]
    %v3361 = vld [vmem:[#allocation28 + $0x150] sm:$0xff]
    %v3362 = vld [vmem:[#allocation28 + $0x158] sm:$0xff]
    %v3363 = vld [vmem:[#allocation28 + $0x160] sm:$0xff]
    %v3364 = vld [vmem:[#allocation28 + $0x168] sm:$0xff]
    %v3365 = vld [vmem:[#allocation28 + $0x170] sm:$0xff]
    %v3366 = vld [vmem:[#allocation28 + $0x178] sm:$0xff]
    %v3367 = vld [vmem:[#allocation28 + $0x180] sm:$0xff]
    %v3368 = vld [vmem:[#allocation28 + $0x188] sm:$0xff]
    %v3369 = vld [vmem:[#allocation28 + $0x190] sm:$0xff]
    %v3370 = vld [vmem:[#allocation28 + $0x198] sm:$0xff]
    %v3371 = vld [vmem:[#allocation28 + $0x1a0] sm:$0xff]
    %v3372 = vld [vmem:[#allocation28 + $0x1a8] sm:$0xff]
    %v3373 = vld [vmem:[#allocation28 + $0x1b0] sm:$0xff]
    %v3374 = vld [vmem:[#allocation28 + $0x1b8] sm:$0xff]
    %v3375 = vld [vmem:[#allocation28 + $0x1c0] sm:$0xff]
    %v3376 = vld [vmem:[#allocation28 + $0x1c8] sm:$0xff]
    %v3377 = vld [vmem:[#allocation28 + $0x1d0] sm:$0xff]
    %v3378 = vld [vmem:[#allocation28 + $0x1d8] sm:$0xff]
    %v3379 = vld [vmem:[#allocation28 + $0x1e0] sm:$0xff]
    %v3380 = vld [vmem:[#allocation28 + $0x1e8] sm:$0xff]
    %v3381 = vld [vmem:[#allocation28 + $0x1f0] sm:$0xff]
    %v3382 = vld [vmem:[#allocation28 + $0x1f8] sm:$0xff]
    %v3383 = vld [vmem:[%s57] sm:$0xf]
    %v3385 = vperm.slane %v3383, 0
    %v3386 = vperm.slane %v3383, 1
    %v3387 = vperm.slane %v3383, 2
    %v3388 = vperm.slane %v3383, 3
    %v3457 = vunpack.c.l.b16 %v3319
    %v3458 = vunpack.c.h.b16 %v3319
    %v3459 = vunpack.c.l.b16 %v3320
    %v3460 = vunpack.c.h.b16 %v3320
    %v3461 = vunpack.c.l.b16 %v3321
    %v3462 = vunpack.c.h.b16 %v3321
    %v3463 = vunpack.c.l.b16 %v3322
    %v3464 = vunpack.c.h.b16 %v3322
    %v3465 = vunpack.c.l.b16 %v3323
    %v3466 = vunpack.c.h.b16 %v3323
    %v3467 = vunpack.c.l.b16 %v3324
    %v3468 = vunpack.c.h.b16 %v3324
    %v3469 = vunpack.c.l.b16 %v3325
    %v3470 = vunpack.c.h.b16 %v3325
    %v3471 = vunpack.c.l.b16 %v3326
    %v3472 = vunpack.c.h.b16 %v3326
    %v3473 = vunpack.c.l.b16 %v3327
    %v3474 = vunpack.c.h.b16 %v3327
    %v3475 = vunpack.c.l.b16 %v3328
    %v3476 = vunpack.c.h.b16 %v3328
    %v3477 = vunpack.c.l.b16 %v3329
    %v3478 = vunpack.c.h.b16 %v3329
    %v3479 = vunpack.c.l.b16 %v3330
    %v3480 = vunpack.c.h.b16 %v3330
    %v3481 = vunpack.c.l.b16 %v3331
    %v3482 = vunpack.c.h.b16 %v3331
    %v3483 = vunpack.c.l.b16 %v3332
    %v3484 = vunpack.c.h.b16 %v3332
    %v3485 = vunpack.c.l.b16 %v3333
    %v3486 = vunpack.c.h.b16 %v3333
    %v3487 = vunpack.c.l.b16 %v3334
    %v3488 = vunpack.c.h.b16 %v3334
    %v3489 = vunpack.c.l.b16 %v3335
    %v3490 = vunpack.c.h.b16 %v3335
    %v3491 = vunpack.c.l.b16 %v3336
    %v3492 = vunpack.c.h.b16 %v3336
    %v3493 = vunpack.c.l.b16 %v3337
    %v3494 = vunpack.c.h.b16 %v3337
    %v3495 = vunpack.c.l.b16 %v3338
    %v3496 = vunpack.c.h.b16 %v3338
    %v3497 = vunpack.c.l.b16 %v3339
    %v3498 = vunpack.c.h.b16 %v3339
    %v3499 = vunpack.c.l.b16 %v3340
    %v3500 = vunpack.c.h.b16 %v3340
    %v3501 = vunpack.c.l.b16 %v3341
    %v3502 = vunpack.c.h.b16 %v3341
    %v3503 = vunpack.c.l.b16 %v3342
    %v3504 = vunpack.c.h.b16 %v3342
    %v3505 = vunpack.c.l.b16 %v3343
    %v3506 = vunpack.c.h.b16 %v3343
    %v3507 = vunpack.c.l.b16 %v3344
    %v3508 = vunpack.c.h.b16 %v3344
    %v3509 = vunpack.c.l.b16 %v3345
    %v3510 = vunpack.c.h.b16 %v3345
    %v3511 = vunpack.c.l.b16 %v3346
    %v3512 = vunpack.c.h.b16 %v3346
    %v3513 = vunpack.c.l.b16 %v3347
    %v3514 = vunpack.c.h.b16 %v3347
    %v3515 = vunpack.c.l.b16 %v3348
    %v3516 = vunpack.c.h.b16 %v3348
    %v3517 = vunpack.c.l.b16 %v3349
    %v3518 = vunpack.c.h.b16 %v3349
    %v3519 = vunpack.c.l.b16 %v3350
    %v3520 = vunpack.c.h.b16 %v3350
    %v3521 = vunpack.c.l.b16 %v3351
    %v3522 = vunpack.c.h.b16 %v3351
    %v3523 = vunpack.c.l.b16 %v3352
    %v3524 = vunpack.c.h.b16 %v3352
    %v3525 = vunpack.c.l.b16 %v3353
    %v3526 = vunpack.c.h.b16 %v3353
    %v3527 = vunpack.c.l.b16 %v3354
    %v3528 = vunpack.c.h.b16 %v3354
    %v3529 = vunpack.c.l.b16 %v3355
    %v3530 = vunpack.c.h.b16 %v3355
    %v3531 = vunpack.c.l.b16 %v3356
    %v3532 = vunpack.c.h.b16 %v3356
    %v3533 = vunpack.c.l.b16 %v3357
    %v3534 = vunpack.c.h.b16 %v3357
    %v3535 = vunpack.c.l.b16 %v3358
    %v3536 = vunpack.c.h.b16 %v3358
    %v3537 = vunpack.c.l.b16 %v3359
    %v3538 = vunpack.c.h.b16 %v3359
    %v3539 = vunpack.c.l.b16 %v3360
    %v3540 = vunpack.c.h.b16 %v3360
    %v3541 = vunpack.c.l.b16 %v3361
    %v3542 = vunpack.c.h.b16 %v3361
    %v3543 = vunpack.c.l.b16 %v3362
    %v3544 = vunpack.c.h.b16 %v3362
    %v3545 = vunpack.c.l.b16 %v3363
    %v3546 = vunpack.c.h.b16 %v3363
    %v3547 = vunpack.c.l.b16 %v3364
    %v3548 = vunpack.c.h.b16 %v3364
    %v3549 = vunpack.c.l.b16 %v3365
    %v3550 = vunpack.c.h.b16 %v3365
    %v3551 = vunpack.c.l.b16 %v3366
    %v3552 = vunpack.c.h.b16 %v3366
    %v3553 = vunpack.c.l.b16 %v3367
    %v3554 = vunpack.c.h.b16 %v3367
    %v3555 = vunpack.c.l.b16 %v3368
    %v3556 = vunpack.c.h.b16 %v3368
    %v3557 = vunpack.c.l.b16 %v3369
    %v3558 = vunpack.c.h.b16 %v3369
    %v3559 = vunpack.c.l.b16 %v3370
    %v3560 = vunpack.c.h.b16 %v3370
    %v3561 = vunpack.c.l.b16 %v3371
    %v3562 = vunpack.c.h.b16 %v3371
    %v3563 = vunpack.c.l.b16 %v3372
    %v3564 = vunpack.c.h.b16 %v3372
    %v3565 = vunpack.c.l.b16 %v3373
    %v3566 = vunpack.c.h.b16 %v3373
    %v3567 = vunpack.c.l.b16 %v3374
    %v3568 = vunpack.c.h.b16 %v3374
    %v3569 = vunpack.c.l.b16 %v3375
    %v3570 = vunpack.c.h.b16 %v3375
    %v3571 = vunpack.c.l.b16 %v3376
    %v3572 = vunpack.c.h.b16 %v3376
    %v3573 = vunpack.c.l.b16 %v3377
    %v3574 = vunpack.c.h.b16 %v3377
    %v3575 = vunpack.c.l.b16 %v3378
    %v3576 = vunpack.c.h.b16 %v3378
    %v3577 = vunpack.c.l.b16 %v3379
    %v3578 = vunpack.c.h.b16 %v3379
    %v3579 = vunpack.c.l.b16 %v3380
    %v3580 = vunpack.c.h.b16 %v3380
    %v3581 = vunpack.c.l.b16 %v3381
    %v3582 = vunpack.c.h.b16 %v3381
    %v3583 = vunpack.c.l.b16 %v3382
    %v3584 = vunpack.c.h.b16 %v3382
    %v3585 = vpack.c.b16 %v3461, %v3457
    %v3586 = vpack.c.b16 %v3462, %v3458
    %v3587 = vpack.c.b16 %v3463, %v3459
    %v3588 = vpack.c.b16 %v3464, %v3460
    %v3589 = vpack.c.b16 %v3469, %v3465
    %v3590 = vpack.c.b16 %v3470, %v3466
    %v3591 = vpack.c.b16 %v3471, %v3467
    %v3592 = vpack.c.b16 %v3472, %v3468
    %v3593 = vpack.c.b16 %v3477, %v3473
    %v3594 = vpack.c.b16 %v3478, %v3474
    %v3595 = vpack.c.b16 %v3479, %v3475
    %v3596 = vpack.c.b16 %v3480, %v3476
    %v3597 = vpack.c.b16 %v3485, %v3481
    %v3598 = vpack.c.b16 %v3486, %v3482
    %v3599 = vpack.c.b16 %v3487, %v3483
    %v3600 = vpack.c.b16 %v3488, %v3484
    %v3601 = vpack.c.b16 %v3493, %v3489
    %v3602 = vpack.c.b16 %v3494, %v3490
    %v3603 = vpack.c.b16 %v3495, %v3491
    %v3604 = vpack.c.b16 %v3496, %v3492
    %v3605 = vpack.c.b16 %v3501, %v3497
    %v3606 = vpack.c.b16 %v3502, %v3498
    %v3607 = vpack.c.b16 %v3503, %v3499
    %v3608 = vpack.c.b16 %v3504, %v3500
    %v3609 = vpack.c.b16 %v3509, %v3505
    %v3610 = vpack.c.b16 %v3510, %v3506
    %v3611 = vpack.c.b16 %v3511, %v3507
    %v3612 = vpack.c.b16 %v3512, %v3508
    %v3613 = vpack.c.b16 %v3517, %v3513
    %v3614 = vpack.c.b16 %v3518, %v3514
    %v3615 = vpack.c.b16 %v3519, %v3515
    %v3616 = vpack.c.b16 %v3520, %v3516
    %v3617 = vpack.c.b16 %v3525, %v3521
    %v3618 = vpack.c.b16 %v3526, %v3522
    %v3619 = vpack.c.b16 %v3527, %v3523
    %v3620 = vpack.c.b16 %v3528, %v3524
    %v3621 = vpack.c.b16 %v3533, %v3529
    %v3622 = vpack.c.b16 %v3534, %v3530
    %v3623 = vpack.c.b16 %v3535, %v3531
    %v3624 = vpack.c.b16 %v3536, %v3532
    %v3625 = vpack.c.b16 %v3541, %v3537
    %v3626 = vpack.c.b16 %v3542, %v3538
    %v3627 = vpack.c.b16 %v3543, %v3539
    %v3628 = vpack.c.b16 %v3544, %v3540
    %v3629 = vpack.c.b16 %v3549, %v3545
    %v3630 = vpack.c.b16 %v3550, %v3546
    %v3631 = vpack.c.b16 %v3551, %v3547
    %v3632 = vpack.c.b16 %v3552, %v3548
    %v3633 = vpack.c.b16 %v3557, %v3553
    %v3634 = vpack.c.b16 %v3558, %v3554
    %v3635 = vpack.c.b16 %v3559, %v3555
    %v3636 = vpack.c.b16 %v3560, %v3556
    %v3637 = vpack.c.b16 %v3565, %v3561
    %v3638 = vpack.c.b16 %v3566, %v3562
    %v3639 = vpack.c.b16 %v3567, %v3563
    %v3640 = vpack.c.b16 %v3568, %v3564
    %v3641 = vpack.c.b16 %v3573, %v3569
    %v3642 = vpack.c.b16 %v3574, %v3570
    %v3643 = vpack.c.b16 %v3575, %v3571
    %v3644 = vpack.c.b16 %v3576, %v3572
    %v3645 = vpack.c.b16 %v3581, %v3577
    %v3646 = vpack.c.b16 %v3582, %v3578
    %v3647 = vpack.c.b16 %v3583, %v3579
    %v3648 = vpack.c.b16 %v3584, %v3580
    %3713 = vmatpush.bf16.msra.mxu0 %v3613
    %3714 = vmatpush.bf16.msra.mxu0 %v3609
    %3715 = vmatpush.bf16.msra.mxu0 %v3605
    %3716 = vmatpush.bf16.msra.mxu0 %v3601
    %3717 = vmatpush.bf16.msra.mxu0 %v3597
    %3718 = vmatpush.bf16.msra.mxu0 %v3593
    %3719 = vmatpush.bf16.msra.mxu0 %v3589
    %3720 = vmatpush.bf16.msra.mxu0 %v3585
    %3721 = vmatmul.bf16.gmra.mxu0 %v3303
    %v3722 = vpop.f32.mrf.mxu0
    %v3723 = vadd.f32 %v3385, %v3722
    %v3724 = vpop.f32.mrf.mxu0
    %v3725 = vadd.f32 %v3385, %v3724
    %3726 = vmatmul.bf16.gmra.mxu0 %v3305
    %v3727 = vpop.f32.mrf.mxu0
    %v3728 = vadd.f32 %v3385, %v3727
    %v3729 = vpop.f32.mrf.mxu0
    %v3730 = vadd.f32 %v3385, %v3729
    %3731 = vmatmul.bf16.gmra.mxu0 %v3307
    %v3732 = vpop.f32.mrf.mxu0
    %v3733 = vadd.f32 %v3385, %v3732
    %v3734 = vpop.f32.mrf.mxu0
    %v3735 = vadd.f32 %v3385, %v3734
    %3736 = vmatmul.bf16.gmra.mxu0 %v3309
    %v3737 = vpop.f32.mrf.mxu0
    %v3738 = vadd.f32 %v3385, %v3737
    %v3739 = vpop.f32.mrf.mxu0
    %v3740 = vadd.f32 %v3385, %v3739
    %3741 = vmatmul.bf16.gmra.mxu0 %v3311
    %v3742 = vpop.f32.mrf.mxu0
    %v3743 = vadd.f32 %v3385, %v3742
    %v3744 = vpop.f32.mrf.mxu0
    %v3745 = vadd.f32 %v3385, %v3744
    %3746 = vmatmul.bf16.gmra.mxu0 %v3313
    %v3747 = vpop.f32.mrf.mxu0
    %v3748 = vadd.f32 %v3385, %v3747
    %v3749 = vpop.f32.mrf.mxu0
    %v3750 = vadd.f32 %v3385, %v3749
    %3751 = vmatmul.bf16.gmra.mxu0 %v3315
    %v3752 = vpop.f32.mrf.mxu0
    %v3753 = vadd.f32 %v3385, %v3752
    %v3754 = vpop.f32.mrf.mxu0
    %v3755 = vadd.f32 %v3385, %v3754
    %3756 = vmatmul.bf16.gmra.mxu0 %v3317
    %v3757 = vpop.f32.mrf.mxu0
    %v3758 = vadd.f32 %v3385, %v3757
    %v3759 = vpop.f32.mrf.mxu0
    %v3760 = vadd.f32 %v3385, %v3759
    %3761 = vdwg.mxu0
    %3762 = vmatpush.bf16.msra.mxu0 %v3645
    %3763 = vmatpush.bf16.msra.mxu0 %v3641
    %3764 = vmatpush.bf16.msra.mxu0 %v3637
    %3765 = vmatpush.bf16.msra.mxu0 %v3633
    %3766 = vmatpush.bf16.msra.mxu0 %v3629
    %3767 = vmatpush.bf16.msra.mxu0 %v3625
    %3768 = vmatpush.bf16.msra.mxu0 %v3621
    %3769 = vmatpush.bf16.msra.mxu0 %v3617
    %3770 = vmatmul.bf16.gmra.mxu0 %v3304
    %v3771 = vpop.f32.mrf.mxu0
    %v3772 = vadd.f32 %v3723, %v3771
    %v3773 = vpop.f32.mrf.mxu0
    %v3774 = vadd.f32 %v3725, %v3773
    %3775 = vmatmul.bf16.gmra.mxu0 %v3306
    %v3776 = vpop.f32.mrf.mxu0
    %v3777 = vadd.f32 %v3728, %v3776
    %v3778 = vpop.f32.mrf.mxu0
    %v3779 = vadd.f32 %v3730, %v3778
    %3780 = vmatmul.bf16.gmra.mxu0 %v3308
    %v3781 = vpop.f32.mrf.mxu0
    %v3782 = vadd.f32 %v3733, %v3781
    %v3783 = vpop.f32.mrf.mxu0
    %v3784 = vadd.f32 %v3735, %v3783
    %3785 = vmatmul.bf16.gmra.mxu0 %v3310
    %v3786 = vpop.f32.mrf.mxu0
    %v3787 = vadd.f32 %v3738, %v3786
    %v3788 = vpop.f32.mrf.mxu0
    %v3789 = vadd.f32 %v3740, %v3788
    %3790 = vmatmul.bf16.gmra.mxu0 %v3312
    %v3791 = vpop.f32.mrf.mxu0
    %v3792 = vadd.f32 %v3743, %v3791
    %v3793 = vpop.f32.mrf.mxu0
    %v3794 = vadd.f32 %v3745, %v3793
    %3795 = vmatmul.bf16.gmra.mxu0 %v3314
    %v3796 = vpop.f32.mrf.mxu0
    %v3797 = vadd.f32 %v3748, %v3796
    %v3798 = vpop.f32.mrf.mxu0
    %v3799 = vadd.f32 %v3750, %v3798
    %3800 = vmatmul.bf16.gmra.mxu0 %v3316
    %v3801 = vpop.f32.mrf.mxu0
    %v3802 = vadd.f32 %v3753, %v3801
    %v3803 = vpop.f32.mrf.mxu0
    %v3804 = vadd.f32 %v3755, %v3803
    %3805 = vmatmul.bf16.gmra.mxu0 %v3318
    %v3806 = vpop.f32.mrf.mxu0
    %v3807 = vadd.f32 %v3758, %v3806
    %v3808 = vpop.f32.mrf.mxu0
    %v3809 = vadd.f32 %v3760, %v3808
    %3810 = vdwg.mxu0
    %3811 = vmatpush.bf16.msra.mxu0 %v3614
    %3812 = vmatpush.bf16.msra.mxu0 %v3610
    %3813 = vmatpush.bf16.msra.mxu0 %v3606
    %3814 = vmatpush.bf16.msra.mxu0 %v3602
    %3815 = vmatpush.bf16.msra.mxu0 %v3598
    %3816 = vmatpush.bf16.msra.mxu0 %v3594
    %3817 = vmatpush.bf16.msra.mxu0 %v3590
    %3818 = vmatpush.bf16.msra.mxu0 %v3586
    %3819 = vmatmul.bf16.gmra.mxu0 %v3303
    %v3820 = vpop.f32.mrf.mxu0
    %v3821 = vadd.f32 %v3386, %v3820
    %v3822 = vpop.f32.mrf.mxu0
    %v3823 = vadd.f32 %v3386, %v3822
    %3824 = vmatmul.bf16.gmra.mxu0 %v3305
    %v3825 = vpop.f32.mrf.mxu0
    %v3826 = vadd.f32 %v3386, %v3825
    %v3827 = vpop.f32.mrf.mxu0
    %v3828 = vadd.f32 %v3386, %v3827
    %3829 = vmatmul.bf16.gmra.mxu0 %v3307
    %v3830 = vpop.f32.mrf.mxu0
    %v3831 = vadd.f32 %v3386, %v3830
    %v3832 = vpop.f32.mrf.mxu0
    %v3833 = vadd.f32 %v3386, %v3832
    %3834 = vmatmul.bf16.gmra.mxu0 %v3309
    %v3835 = vpop.f32.mrf.mxu0
    %v3836 = vadd.f32 %v3386, %v3835
    %v3837 = vpop.f32.mrf.mxu0
    %v3838 = vadd.f32 %v3386, %v3837
    %3839 = vmatmul.bf16.gmra.mxu0 %v3311
    %v3840 = vpop.f32.mrf.mxu0
    %v3841 = vadd.f32 %v3386, %v3840
    %v3842 = vpop.f32.mrf.mxu0
    %v3843 = vadd.f32 %v3386, %v3842
    %3844 = vmatmul.bf16.gmra.mxu0 %v3313
    %v3845 = vpop.f32.mrf.mxu0
    %v3846 = vadd.f32 %v3386, %v3845
    %v3847 = vpop.f32.mrf.mxu0
    %v3848 = vadd.f32 %v3386, %v3847
    %3849 = vmatmul.bf16.gmra.mxu0 %v3315
    %v3850 = vpop.f32.mrf.mxu0
    %v3851 = vadd.f32 %v3386, %v3850
    %v3852 = vpop.f32.mrf.mxu0
    %v3853 = vadd.f32 %v3386, %v3852
    %3854 = vmatmul.bf16.gmra.mxu0 %v3317
    %v3855 = vpop.f32.mrf.mxu0
    %v3856 = vadd.f32 %v3386, %v3855
    %v3857 = vpop.f32.mrf.mxu0
    %v3858 = vadd.f32 %v3386, %v3857
    %3859 = vdwg.mxu0
    %3860 = vmatpush.bf16.msra.mxu0 %v3646
    %3861 = vmatpush.bf16.msra.mxu0 %v3642
    %3862 = vmatpush.bf16.msra.mxu0 %v3638
    %3863 = vmatpush.bf16.msra.mxu0 %v3634
    %3864 = vmatpush.bf16.msra.mxu0 %v3630
    %3865 = vmatpush.bf16.msra.mxu0 %v3626
    %3866 = vmatpush.bf16.msra.mxu0 %v3622
    %3867 = vmatpush.bf16.msra.mxu0 %v3618
    %3868 = vmatmul.bf16.gmra.mxu0 %v3304
    %v3869 = vpop.f32.mrf.mxu0
    %v3870 = vadd.f32 %v3821, %v3869
    %v3871 = vpop.f32.mrf.mxu0
    %v3872 = vadd.f32 %v3823, %v3871
    %3873 = vmatmul.bf16.gmra.mxu0 %v3306
    %v3874 = vpop.f32.mrf.mxu0
    %v3875 = vadd.f32 %v3826, %v3874
    %v3876 = vpop.f32.mrf.mxu0
    %v3877 = vadd.f32 %v3828, %v3876
    %3878 = vmatmul.bf16.gmra.mxu0 %v3308
    %v3879 = vpop.f32.mrf.mxu0
    %v3880 = vadd.f32 %v3831, %v3879
    %v3881 = vpop.f32.mrf.mxu0
    %v3882 = vadd.f32 %v3833, %v3881
    %3883 = vmatmul.bf16.gmra.mxu0 %v3310
    %v3884 = vpop.f32.mrf.mxu0
    %v3885 = vadd.f32 %v3836, %v3884
    %v3886 = vpop.f32.mrf.mxu0
    %v3887 = vadd.f32 %v3838, %v3886
    %3888 = vmatmul.bf16.gmra.mxu0 %v3312
    %v3889 = vpop.f32.mrf.mxu0
    %v3890 = vadd.f32 %v3841, %v3889
    %v3891 = vpop.f32.mrf.mxu0
    %v3892 = vadd.f32 %v3843, %v3891
    %3893 = vmatmul.bf16.gmra.mxu0 %v3314
    %v3894 = vpop.f32.mrf.mxu0
    %v3895 = vadd.f32 %v3846, %v3894
    %v3896 = vpop.f32.mrf.mxu0
    %v3897 = vadd.f32 %v3848, %v3896
    %3898 = vmatmul.bf16.gmra.mxu0 %v3316
    %v3899 = vpop.f32.mrf.mxu0
    %v3900 = vadd.f32 %v3851, %v3899
    %v3901 = vpop.f32.mrf.mxu0
    %v3902 = vadd.f32 %v3853, %v3901
    %3903 = vmatmul.bf16.gmra.mxu0 %v3318
    %v3904 = vpop.f32.mrf.mxu0
    %v3905 = vadd.f32 %v3856, %v3904
    %v3906 = vpop.f32.mrf.mxu0
    %v3907 = vadd.f32 %v3858, %v3906
    %3908 = vdwg.mxu0
    %3909 = vmatpush.bf16.msra.mxu0 %v3615
    %3910 = vmatpush.bf16.msra.mxu0 %v3611
    %3911 = vmatpush.bf16.msra.mxu0 %v3607
    %3912 = vmatpush.bf16.msra.mxu0 %v3603
    %3913 = vmatpush.bf16.msra.mxu0 %v3599
    %3914 = vmatpush.bf16.msra.mxu0 %v3595
    %3915 = vmatpush.bf16.msra.mxu0 %v3591
    %3916 = vmatpush.bf16.msra.mxu0 %v3587
    %3917 = vmatmul.bf16.gmra.mxu0 %v3303
    %v3918 = vpop.f32.mrf.mxu0
    %v3919 = vadd.f32 %v3387, %v3918
    %v3920 = vpop.f32.mrf.mxu0
    %v3921 = vadd.f32 %v3387, %v3920
    %3922 = vmatmul.bf16.gmra.mxu0 %v3305
    %v3923 = vpop.f32.mrf.mxu0
    %v3924 = vadd.f32 %v3387, %v3923
    %v3925 = vpop.f32.mrf.mxu0
    %v3926 = vadd.f32 %v3387, %v3925
    %3927 = vmatmul.bf16.gmra.mxu0 %v3307
    %v3928 = vpop.f32.mrf.mxu0
    %v3929 = vadd.f32 %v3387, %v3928
    %v3930 = vpop.f32.mrf.mxu0
    %v3931 = vadd.f32 %v3387, %v3930
    %3932 = vmatmul.bf16.gmra.mxu0 %v3309
    %v3933 = vpop.f32.mrf.mxu0
    %v3934 = vadd.f32 %v3387, %v3933
    %v3935 = vpop.f32.mrf.mxu0
    %v3936 = vadd.f32 %v3387, %v3935
    %3937 = vmatmul.bf16.gmra.mxu0 %v3311
    %v3938 = vpop.f32.mrf.mxu0
    %v3939 = vadd.f32 %v3387, %v3938
    %v3940 = vpop.f32.mrf.mxu0
    %v3941 = vadd.f32 %v3387, %v3940
    %3942 = vmatmul.bf16.gmra.mxu0 %v3313
    %v3943 = vpop.f32.mrf.mxu0
    %v3944 = vadd.f32 %v3387, %v3943
    %v3945 = vpop.f32.mrf.mxu0
    %v3946 = vadd.f32 %v3387, %v3945
    %3947 = vmatmul.bf16.gmra.mxu0 %v3315
    %v3948 = vpop.f32.mrf.mxu0
    %v3949 = vadd.f32 %v3387, %v3948
    %v3950 = vpop.f32.mrf.mxu0
    %v3951 = vadd.f32 %v3387, %v3950
    %3952 = vmatmul.bf16.gmra.mxu0 %v3317
    %v3953 = vpop.f32.mrf.mxu0
    %v3954 = vadd.f32 %v3387, %v3953
    %v3955 = vpop.f32.mrf.mxu0
    %v3956 = vadd.f32 %v3387, %v3955
    %3957 = vdwg.mxu0
    %3958 = vmatpush.bf16.msra.mxu0 %v3647
    %3959 = vmatpush.bf16.msra.mxu0 %v3643
    %3960 = vmatpush.bf16.msra.mxu0 %v3639
    %3961 = vmatpush.bf16.msra.mxu0 %v3635
    %3962 = vmatpush.bf16.msra.mxu0 %v3631
    %3963 = vmatpush.bf16.msra.mxu0 %v3627
    %3964 = vmatpush.bf16.msra.mxu0 %v3623
    %3965 = vmatpush.bf16.msra.mxu0 %v3619
    %3966 = vmatmul.bf16.gmra.mxu0 %v3304
    %v3967 = vpop.f32.mrf.mxu0
    %v3968 = vadd.f32 %v3919, %v3967
    %v3969 = vpop.f32.mrf.mxu0
    %v3970 = vadd.f32 %v3921, %v3969
    %3971 = vmatmul.bf16.gmra.mxu0 %v3306
    %v3972 = vpop.f32.mrf.mxu0
    %v3973 = vadd.f32 %v3924, %v3972
    %v3974 = vpop.f32.mrf.mxu0
    %v3975 = vadd.f32 %v3926, %v3974
    %3976 = vmatmul.bf16.gmra.mxu0 %v3308
    %v3977 = vpop.f32.mrf.mxu0
    %v3978 = vadd.f32 %v3929, %v3977
    %v3979 = vpop.f32.mrf.mxu0
    %v3980 = vadd.f32 %v3931, %v3979
    %3981 = vmatmul.bf16.gmra.mxu0 %v3310
    %v3982 = vpop.f32.mrf.mxu0
    %v3983 = vadd.f32 %v3934, %v3982
    %v3984 = vpop.f32.mrf.mxu0
    %v3985 = vadd.f32 %v3936, %v3984
    %3986 = vmatmul.bf16.gmra.mxu0 %v3312
    %v3987 = vpop.f32.mrf.mxu0
    %v3988 = vadd.f32 %v3939, %v3987
    %v3989 = vpop.f32.mrf.mxu0
    %v3990 = vadd.f32 %v3941, %v3989
    %3991 = vmatmul.bf16.gmra.mxu0 %v3314
    %v3992 = vpop.f32.mrf.mxu0
    %v3993 = vadd.f32 %v3944, %v3992
    %v3994 = vpop.f32.mrf.mxu0
    %v3995 = vadd.f32 %v3946, %v3994
    %3996 = vmatmul.bf16.gmra.mxu0 %v3316
    %v3997 = vpop.f32.mrf.mxu0
    %v3998 = vadd.f32 %v3949, %v3997
    %v3999 = vpop.f32.mrf.mxu0
    %v4000 = vadd.f32 %v3951, %v3999
    %4001 = vmatmul.bf16.gmra.mxu0 %v3318
    %v4002 = vpop.f32.mrf.mxu0
    %v4003 = vadd.f32 %v3954, %v4002
    %v4004 = vpop.f32.mrf.mxu0
    %v4005 = vadd.f32 %v3956, %v4004
    %4006 = vdwg.mxu0
    %4007 = vmatpush.bf16.msra.mxu0 %v3616
    %4008 = vmatpush.bf16.msra.mxu0 %v3612
    %4009 = vmatpush.bf16.msra.mxu0 %v3608
    %4010 = vmatpush.bf16.msra.mxu0 %v3604
    %4011 = vmatpush.bf16.msra.mxu0 %v3600
    %4012 = vmatpush.bf16.msra.mxu0 %v3596
    %4013 = vmatpush.bf16.msra.mxu0 %v3592
    %4014 = vmatpush.bf16.msra.mxu0 %v3588
    %4015 = vmatmul.bf16.gmra.mxu0 %v3303
    %v4016 = vpop.f32.mrf.mxu0
    %v4017 = vadd.f32 %v3388, %v4016
    %v4018 = vpop.f32.mrf.mxu0
    %v4019 = vadd.f32 %v3388, %v4018
    %4020 = vmatmul.bf16.gmra.mxu0 %v3305
    %v4021 = vpop.f32.mrf.mxu0
    %v4022 = vadd.f32 %v3388, %v4021
    %v4023 = vpop.f32.mrf.mxu0
    %v4024 = vadd.f32 %v3388, %v4023
    %4025 = vmatmul.bf16.gmra.mxu0 %v3307
    %v4026 = vpop.f32.mrf.mxu0
    %v4027 = vadd.f32 %v3388, %v4026
    %v4028 = vpop.f32.mrf.mxu0
    %v4029 = vadd.f32 %v3388, %v4028
    %4030 = vmatmul.bf16.gmra.mxu0 %v3309
    %v4031 = vpop.f32.mrf.mxu0
    %v4032 = vadd.f32 %v3388, %v4031
    %v4033 = vpop.f32.mrf.mxu0
    %v4034 = vadd.f32 %v3388, %v4033
    %4035 = vmatmul.bf16.gmra.mxu0 %v3311
    %v4036 = vpop.f32.mrf.mxu0
    %v4037 = vadd.f32 %v3388, %v4036
    %v4038 = vpop.f32.mrf.mxu0
    %v4039 = vadd.f32 %v3388, %v4038
    %4040 = vmatmul.bf16.gmra.mxu0 %v3313
    %v4041 = vpop.f32.mrf.mxu0
    %v4042 = vadd.f32 %v3388, %v4041
    %v4043 = vpop.f32.mrf.mxu0
    %v4044 = vadd.f32 %v3388, %v4043
    %4045 = vmatmul.bf16.gmra.mxu0 %v3315
    %v4046 = vpop.f32.mrf.mxu0
    %v4047 = vadd.f32 %v3388, %v4046
    %v4048 = vpop.f32.mrf.mxu0
    %v4049 = vadd.f32 %v3388, %v4048
    %4050 = vmatmul.bf16.gmra.mxu0 %v3317
    %v4051 = vpop.f32.mrf.mxu0
    %v4052 = vadd.f32 %v3388, %v4051
    %v4053 = vpop.f32.mrf.mxu0
    %v4054 = vadd.f32 %v3388, %v4053
    %4055 = vdwg.mxu0
    %4056 = vmatpush.bf16.msra.mxu0 %v3648
    %4057 = vmatpush.bf16.msra.mxu0 %v3644
    %4058 = vmatpush.bf16.msra.mxu0 %v3640
    %4059 = vmatpush.bf16.msra.mxu0 %v3636
    %4060 = vmatpush.bf16.msra.mxu0 %v3632
    %4061 = vmatpush.bf16.msra.mxu0 %v3628
    %4062 = vmatpush.bf16.msra.mxu0 %v3624
    %4063 = vmatpush.bf16.msra.mxu0 %v3620
    %4064 = vmatmul.bf16.gmra.mxu0 %v3304
    %v4065 = vpop.f32.mrf.mxu0
    %v4066 = vadd.f32 %v4017, %v4065
    %v4067 = vpop.f32.mrf.mxu0
    %v4068 = vadd.f32 %v4019, %v4067
    %4069 = vmatmul.bf16.gmra.mxu0 %v3306
    %v4070 = vpop.f32.mrf.mxu0
    %v4071 = vadd.f32 %v4022, %v4070
    %v4072 = vpop.f32.mrf.mxu0
    %v4073 = vadd.f32 %v4024, %v4072
    %4074 = vmatmul.bf16.gmra.mxu0 %v3308
    %v4075 = vpop.f32.mrf.mxu0
    %v4076 = vadd.f32 %v4027, %v4075
    %v4077 = vpop.f32.mrf.mxu0
    %v4078 = vadd.f32 %v4029, %v4077
    %4079 = vmatmul.bf16.gmra.mxu0 %v3310
    %v4080 = vpop.f32.mrf.mxu0
    %v4081 = vadd.f32 %v4032, %v4080
    %v4082 = vpop.f32.mrf.mxu0
    %v4083 = vadd.f32 %v4034, %v4082
    %4084 = vmatmul.bf16.gmra.mxu0 %v3312
    %v4085 = vpop.f32.mrf.mxu0
    %v4086 = vadd.f32 %v4037, %v4085
    %v4087 = vpop.f32.mrf.mxu0
    %v4088 = vadd.f32 %v4039, %v4087
    %4089 = vmatmul.bf16.gmra.mxu0 %v3314
    %v4090 = vpop.f32.mrf.mxu0
    %v4091 = vadd.f32 %v4042, %v4090
    %v4092 = vpop.f32.mrf.mxu0
    %v4093 = vadd.f32 %v4044, %v4092
    %4094 = vmatmul.bf16.gmra.mxu0 %v3316
    %v4095 = vpop.f32.mrf.mxu0
    %v4096 = vadd.f32 %v4047, %v4095
    %v4097 = vpop.f32.mrf.mxu0
    %v4098 = vadd.f32 %v4049, %v4097
    %4099 = vmatmul.bf16.gmra.mxu0 %v3318
    %v4100 = vpop.f32.mrf.mxu0
    %v4101 = vadd.f32 %v4052, %v4100
    %v4102 = vpop.f32.mrf.mxu0
    %v4103 = vadd.f32 %v4054, %v4102
    %4104 = vdwg.mxu0
    %v4105 = vtanh.pop %v3772
    %v4106 = vtanh.pop %v3870
    %v4107 = vtanh.pop %v3968
    %v4108 = vtanh.pop %v4066
    %v4109 = vtanh.pop %v3774
    %v4110 = vtanh.pop %v3872
    %v4111 = vtanh.pop %v3970
    %v4112 = vtanh.pop %v4068
    %v4113 = vtanh.pop %v3777
    %v4114 = vtanh.pop %v3875
    %v4115 = vtanh.pop %v3973
    %v4116 = vtanh.pop %v4071
    %v4117 = vtanh.pop %v3779
    %v4118 = vtanh.pop %v3877
    %v4119 = vtanh.pop %v3975
    %v4120 = vtanh.pop %v4073
    %v4121 = vtanh.pop %v3782
    %v4122 = vtanh.pop %v3880
    %v4123 = vtanh.pop %v3978
    %v4124 = vtanh.pop %v4076
    %v4125 = vtanh.pop %v3784
    %v4126 = vtanh.pop %v3882
    %v4127 = vtanh.pop %v3980
    %v4128 = vtanh.pop %v4078
    %v4129 = vtanh.pop %v3787
    %v4130 = vtanh.pop %v3885
    %v4131 = vtanh.pop %v3983
    %v4132 = vtanh.pop %v4081
    %v4133 = vtanh.pop %v3789
    %v4134 = vtanh.pop %v3887
    %v4135 = vtanh.pop %v3985
    %v4136 = vtanh.pop %v4083
    %v4137 = vtanh.pop %v3792
    %v4138 = vtanh.pop %v3890
    %v4139 = vtanh.pop %v3988
    %v4140 = vtanh.pop %v4086
    %v4141 = vtanh.pop %v3794
    %v4142 = vtanh.pop %v3892
    %v4143 = vtanh.pop %v3990
    %v4144 = vtanh.pop %v4088
    %v4145 = vtanh.pop %v3797
    %v4146 = vtanh.pop %v3895
    %v4147 = vtanh.pop %v3993
    %v4148 = vtanh.pop %v4091
    %v4149 = vtanh.pop %v3799
    %v4150 = vtanh.pop %v3897
    %v4151 = vtanh.pop %v3995
    %v4152 = vtanh.pop %v4093
    %v4153 = vtanh.pop %v3802
    %v4154 = vtanh.pop %v3900
    %v4155 = vtanh.pop %v3998
    %v4156 = vtanh.pop %v4096
    %v4157 = vtanh.pop %v3804
    %v4158 = vtanh.pop %v3902
    %v4159 = vtanh.pop %v4000
    %v4160 = vtanh.pop %v4098
    %v4161 = vtanh.pop %v3807
    %v4162 = vtanh.pop %v3905
    %v4163 = vtanh.pop %v4003
    %v4164 = vtanh.pop %v4101
    %v4165 = vtanh.pop %v3809
    %v4166 = vtanh.pop %v3907
    %v4167 = vtanh.pop %v4005
    %v4168 = vtanh.pop %v4103
    %4169 = vst [vmem:[#allocation29] sm:$0xff] %v4105
    %4170 = vst [vmem:[#allocation29 + $0x8] sm:$0xff] %v4106
    %4171 = vst [vmem:[#allocation29 + $0x10] sm:$0xff] %v4107
    %4172 = vst [vmem:[#allocation29 + $0x18] sm:$0xff] %v4108
    %4173 = vst [vmem:[#allocation29 + $0x20] sm:$0xff] %v4109
    %4174 = vst [vmem:[#allocation29 + $0x28] sm:$0xff] %v4110
    %4175 = vst [vmem:[#allocation29 + $0x30] sm:$0xff] %v4111
    %4176 = vst [vmem:[#allocation29 + $0x38] sm:$0xff] %v4112
    %4177 = vst [vmem:[#allocation29 + $0x40] sm:$0xff] %v4113
    %4178 = vst [vmem:[#allocation29 + $0x48] sm:$0xff] %v4114
    %4179 = vst [vmem:[#allocation29 + $0x50] sm:$0xff] %v4115
    %4180 = vst [vmem:[#allocation29 + $0x58] sm:$0xff] %v4116
    %4181 = vst [vmem:[#allocation29 + $0x60] sm:$0xff] %v4117
    %4182 = vst [vmem:[#allocation29 + $0x68] sm:$0xff] %v4118
    %4183 = vst [vmem:[#allocation29 + $0x70] sm:$0xff] %v4119
    %4184 = vst [vmem:[#allocation29 + $0x78] sm:$0xff] %v4120
    %4185 = vst [vmem:[#allocation29 + $0x80] sm:$0xff] %v4121
    %4186 = vst [vmem:[#allocation29 + $0x88] sm:$0xff] %v4122
    %4187 = vst [vmem:[#allocation29 + $0x90] sm:$0xff] %v4123
    %4188 = vst [vmem:[#allocation29 + $0x98] sm:$0xff] %v4124
    %4189 = vst [vmem:[#allocation29 + $0xa0] sm:$0xff] %v4125
    %4190 = vst [vmem:[#allocation29 + $0xa8] sm:$0xff] %v4126
    %4191 = vst [vmem:[#allocation29 + $0xb0] sm:$0xff] %v4127
    %4192 = vst [vmem:[#allocation29 + $0xb8] sm:$0xff] %v4128
    %4193 = vst [vmem:[#allocation29 + $0xc0] sm:$0xff] %v4129
    %4194 = vst [vmem:[#allocation29 + $0xc8] sm:$0xff] %v4130
    %4195 = vst [vmem:[#allocation29 + $0xd0] sm:$0xff] %v4131
    %4196 = vst [vmem:[#allocation29 + $0xd8] sm:$0xff] %v4132
    %4197 = vst [vmem:[#allocation29 + $0xe0] sm:$0xff] %v4133
    %4198 = vst [vmem:[#allocation29 + $0xe8] sm:$0xff] %v4134
    %4199 = vst [vmem:[#allocation29 + $0xf0] sm:$0xff] %v4135
    %4200 = vst [vmem:[#allocation29 + $0xf8] sm:$0xff] %v4136
    %4201 = vst [vmem:[#allocation29 + $0x100] sm:$0xff] %v4137
    %4202 = vst [vmem:[#allocation29 + $0x108] sm:$0xff] %v4138
    %4203 = vst [vmem:[#allocation29 + $0x110] sm:$0xff] %v4139
    %4204 = vst [vmem:[#allocation29 + $0x118] sm:$0xff] %v4140
    %4205 = vst [vmem:[#allocation29 + $0x120] sm:$0xff] %v4141
    %4206 = vst [vmem:[#allocation29 + $0x128] sm:$0xff] %v4142
    %4207 = vst [vmem:[#allocation29 + $0x130] sm:$0xff] %v4143
    %4208 = vst [vmem:[#allocation29 + $0x138] sm:$0xff] %v4144
    %4209 = vst [vmem:[#allocation29 + $0x140] sm:$0xff] %v4145
    %4210 = vst [vmem:[#allocation29 + $0x148] sm:$0xff] %v4146
    %4211 = vst [vmem:[#allocation29 + $0x150] sm:$0xff] %v4147
    %4212 = vst [vmem:[#allocation29 + $0x158] sm:$0xff] %v4148
    %4213 = vst [vmem:[#allocation29 + $0x160] sm:$0xff] %v4149
    %4214 = vst [vmem:[#allocation29 + $0x168] sm:$0xff] %v4150
    %4215 = vst [vmem:[#allocation29 + $0x170] sm:$0xff] %v4151
    %4216 = vst [vmem:[#allocation29 + $0x178] sm:$0xff] %v4152
    %4217 = vst [vmem:[#allocation29 + $0x180] sm:$0xff] %v4153
    %4218 = vst [vmem:[#allocation29 + $0x188] sm:$0xff] %v4154
    %4219 = vst [vmem:[#allocation29 + $0x190] sm:$0xff] %v4155
    %4220 = vst [vmem:[#allocation29 + $0x198] sm:$0xff] %v4156
    %4221 = vst [vmem:[#allocation29 + $0x1a0] sm:$0xff] %v4157
    %4222 = vst [vmem:[#allocation29 + $0x1a8] sm:$0xff] %v4158
    %4223 = vst [vmem:[#allocation29 + $0x1b0] sm:$0xff] %v4159
    %4224 = vst [vmem:[#allocation29 + $0x1b8] sm:$0xff] %v4160
    %4225 = vst [vmem:[#allocation29 + $0x1c0] sm:$0xff] %v4161
    %4226 = vst [vmem:[#allocation29 + $0x1c8] sm:$0xff] %v4162
    %4227 = vst [vmem:[#allocation29 + $0x1d0] sm:$0xff] %v4163
    %4228 = vst [vmem:[#allocation29 + $0x1d8] sm:$0xff] %v4164
    %4229 = vst [vmem:[#allocation29 + $0x1e0] sm:$0xff] %v4165
    %4230 = vst [vmem:[#allocation29 + $0x1e8] sm:$0xff] %v4166
    %4231 = vst [vmem:[#allocation29 + $0x1f0] sm:$0xff] %v4167
    %4232 = vst [vmem:[#allocation29 + $0x1f8] sm:$0xff] %v4168
    // Predicated region
    $region186: #{ecg_autoencoder_forward.1} parent=1 // pred_check
      _
    $region187: #{ecg_autoencoder_forward.1} parent=1 // pred_check_branch
      %4234 = sbr.rel (0) target = $region189
    $region188: #{ecg_autoencoder_forward.1} parent=1 // pred_region
      %4236 = vsyncadd [#allocation4], 0
      %s4237 = sshll.u32 [#allocation29], 4
      %s4238 = int_to_ptr.vmem [resolvable:$true] %s4237
      %s4239 = sshll.u32 %s59, 4
      %s4240 = int_to_ptr.hbm [resolvable:$true] %s4239
      %4245 = dma.vmem_to_hbm [thread:$0]  %s4238, 8192, %s4240, [#allocation4], 512, 512, 32
    $region189: #{ecg_autoencoder_forward.1} parent=1 // pred_fallthru
      _
    // Predicated region
    $region190: #{ecg_autoencoder_forward.1} parent=1 // pred_check
      _
    $region191: #{ecg_autoencoder_forward.1} parent=1 // pred_check_branch
      %4247 = sbr.rel (0) target = $region193
    $region192: #{ecg_autoencoder_forward.1} parent=1 // pred_region
      _
    $region193: #{ecg_autoencoder_forward.1} parent=1 // pred_fallthru
      _
    // Predicated region
    $region194: #{ecg_autoencoder_forward.1} parent=1 // pred_check
      _
    $region195: #{ecg_autoencoder_forward.1} parent=1 // pred_check_branch
      %4249 = sbr.rel (0) target = $region197
    $region196: #{ecg_autoencoder_forward.1} parent=1 // pred_region
      %4251 = dma.done [#allocation4], 8192
    $region197: #{ecg_autoencoder_forward.1} parent=1 // pred_fallthru
      _
    // Predicated region
    $region198: #{ecg_autoencoder_forward.1} parent=1 // pred_check
      _
    $region199: #{ecg_autoencoder_forward.1} parent=1 // pred_check_branch
      %4253 = sbr.rel (0) target = $region201
    $region200: #{ecg_autoencoder_forward.1} parent=1 // pred_region
      _
    $region201: #{ecg_autoencoder_forward.1} parent=1 // pred_fallthru
      _
    %4254 = vsyncpa [#allocation3], 1
    %4255 = vsyncpa [#allocation6], 1
    %4256 = vsyncpa [#allocation9], 1
    %4257 = vsyncpa [#allocation12], 1
    %4258 = vsyncpa [#allocation15], 1
    %4259 = vsyncpa [#allocation18], 1
    %4260 = vsyncpa [#allocation21], 1
    %4261 = vsyncpa [#allocation24], 1
    %4262 = vsyncpa [#allocation27], 1
    %4263 = vsyncpa [#allocation4], 1

</llo_original>
